<compile_context>
chip_gen: v6e
topology: v6e:2x2x1
jax: 0.10.0
libtpu: 0.0.40
codegen_flags: <defaults>
</compile_context>

<pallas_src>
import math
from functools import partial

import jax
import jax.numpy as jnp
from jax.experimental import pallas as pl
from jax.experimental.pallas import tpu as pltpu

_MXU_DTYPE = jnp.float32   # set to jnp.bfloat16 on v6e/v7x for higher MXU throughput


# ------------------------------ in-kernel helpers ----------------------------

def _ln_rows(x, ln, eps=1e-5):
    """LayerNorm over the last dim.  `ln` is a (2, dim) array: row0 = gamma, row1 = beta."""
    mu = jnp.mean(x, axis=-1, keepdims=True)
    var = jnp.mean(jnp.square(x - mu), axis=-1, keepdims=True)
    return (x - mu) * jax.lax.rsqrt(var + eps) * ln[0:1, :] + ln[1:2, :]


def _mm(a, b):
    return jnp.dot(a.astype(_MXU_DTYPE), b.astype(_MXU_DTYPE),
                   preferred_element_type=jnp.float32)


def _pick_tile(total, candidates):
    for t in candidates:
        if t <= total and total % t == 0:
            return t
    return total


def _rep(a):
    """BlockSpec for a weight replicated across a 1-D grid."""
    if a.ndim == 2:
        return pl.BlockSpec(a.shape, lambda b: (0, 0))
    return pl.BlockSpec(a.shape, lambda b: (0, 0, 0))


# ------------------------- 1) feat_transform (1x1 conv) ----------------------

def _feat_transform_kernel(x_ref, w_ref, b_ref, o_ref):
    o_ref[...] = _mm(x_ref[...], w_ref[...]) + b_ref[...]


def feat_transform_pallas(x_pix, w, b, row_tile=256):
    R, Cin = x_pix.shape
    Cout = w.shape[1]
    row_tile = min(row_tile, R)
    return pl.pallas_call(
        _feat_transform_kernel,
        grid=(pl.cdiv(R, row_tile),),
        in_specs=[pl.BlockSpec((row_tile, Cin), lambda i: (i, 0)),
                  pl.BlockSpec((Cin, Cout), lambda i: (0, 0)),
                  pl.BlockSpec((1, Cout), lambda i: (0, 0))],
        out_specs=pl.BlockSpec((row_tile, Cout), lambda i: (i, 0)),
        out_shape=jax.ShapeDtypeStruct((R, Cout), jnp.float32),
        compiler_params=pltpu.CompilerParams(dimension_semantics=("parallel",)),
    )(x_pix.astype(jnp.float32), w.astype(jnp.float32),
      b.reshape(1, Cout).astype(jnp.float32))


# ------------------------- 2) hard-mask gather --------------------------------

def _mask_gather_kernel(m_ref, x_ref, o_ref, *, logit_thr):
    @pl.when(pl.program_id(1) == 0)
    def _():
        o_ref[...] = jnp.zeros_like(o_ref)
    # sigmoid(m) > thr  <=>  m > logit(thr)   (no EUP sigmoid over P*HW)
    hard = (m_ref[0] > logit_thr).astype(jnp.float32)            # (P, hw_tile)
    o_ref[0] = o_ref[0] + _mm(hard, x_ref[0])                    # accumulate (P, C)


def mask_gather_pallas(mask_logits, x_hwc, hard_mask_thr):
    """einsum 'bnhw,bchw->bnc' with hard sigmoid mask, as (P,HW)@(HW,C) per image."""
    N, P, HW = mask_logits.shape
    C = x_hwc.shape[-1]
    logit_thr = math.log(hard_mask_thr) - math.log1p(-hard_mask_thr)
    # TODO(synk): if HW has no tile divisor the whole (HW, C) slab lands in VMEM; add an
    #             explicitly masked last block for exotic production resolutions.
    hw_tile = _pick_tile(HW, (2048, 1024, 512, 256, 128))
    return pl.pallas_call(
        partial(_mask_gather_kernel, logit_thr=logit_thr),
        grid=(N, HW // hw_tile),
        in_specs=[pl.BlockSpec((1, P, hw_tile), lambda b, j: (b, 0, j)),
                  pl.BlockSpec((1, hw_tile, C), lambda b, j: (b, j, 0))],
        out_specs=pl.BlockSpec((1, P, C), lambda b, j: (b, 0, 0)),
        out_shape=jax.ShapeDtypeStruct((N, P, C), jnp.float32),
        compiler_params=pltpu.CompilerParams(
            dimension_semantics=("parallel", "arbitrary")),
    )(mask_logits.astype(jnp.float32), x_hwc.astype(jnp.float32))


# ------------------------- 3) fused KernelUpdator -----------------------------

def _updator_kernel(xf_ref, pf_ref, wd_ref, bd_ref, wi_ref, bi_ref, wg_ref, bg_ref,
                    ln_iin_ref, ln_in_ref, ln_out_ref, ln_iout_ref,
                    wfc_ref, bfc_ref, ln_fc_ref, o_ref, *, cf):
    uf = xf_ref[0]                                               # (P, C)  gathered features
    pf = pf_ref[0]                                               # (P, C)  proposal feats (K*K==1)

    params = _mm(uf, wd_ref[...]) + bd_ref[...]                  # dynamic_layer -> (P, 2Cf)
    in_feats = _mm(pf, wi_ref[...]) + bi_ref[...]                # input_layer   -> (P, 2Cf)
    param_in, param_out = params[:, :cf], params[:, cf:]
    input_in, input_out = in_feats[:, :cf], in_feats[:, cf:]

    gate_feats = input_in * param_in                             # (P, Cf)
    # both gate linears fused into one lane-dense (Cf, 2Cf) matmul: [input_gate | update_gate]
    gates = _mm(gate_feats, wg_ref[...]) + bg_ref[...]           # (P, 2Cf)
    input_gate = jax.nn.sigmoid(_ln_rows(gates[:, :cf], ln_iin_ref[...]))
    update_gate = jax.nn.sigmoid(_ln_rows(gates[:, cf:], ln_in_ref[...]))

    param_out = _ln_rows(param_out, ln_out_ref[...])
    input_out = _ln_rows(input_out, ln_iout_ref[...])

    feats = update_gate * param_out + input_gate * input_out     # (P, Cf)
    feats = _mm(feats, wfc_ref[...]) + bfc_ref[...]              # fc_layer -> (P, C)
    o_ref[0] = jax.nn.relu(_ln_rows(feats, ln_fc_ref[...]))


def kernel_updator_pallas(p, x_feat, prop):
    N, P, C = x_feat.shape
    Cf = p['norm_in'][0].shape[0]
    Cout = p['fc']['w'].shape[1]
    ln2 = lambda t: jnp.stack(t, axis=0)
    wg = jnp.concatenate([p['input_gate']['w'], p['update_gate']['w']], axis=1)
    bg = jnp.concatenate([p['input_gate']['b'], p['update_gate']['b']], axis=0)
    weights = [p['dynamic']['w'], p['dynamic']['b'].reshape(1, -1),
               p['input']['w'], p['input']['b'].reshape(1, -1),
               wg, bg.reshape(1, -1),
               ln2(p['input_norm_in']), ln2(p['norm_in']),
               ln2(p['norm_out']), ln2(p['input_norm_out']),
               p['fc']['w'], p['fc']['b'].reshape(1, -1), ln2(p['fc_norm'])]
    weights = [w.astype(jnp.float32) for w in weights]
    return pl.pallas_call(
        partial(_updator_kernel, cf=Cf),
        grid=(N,),
        in_specs=[pl.BlockSpec((1, P, C), lambda b: (b, 0, 0)),
                  pl.BlockSpec((1, P, C), lambda b: (b, 0, 0))] + [_rep(w) for w in weights],
        out_specs=pl.BlockSpec((1, P, Cout), lambda b: (b, 0, 0)),
        out_shape=jax.ShapeDtypeStruct((N, P, Cout), jnp.float32),
        compiler_params=pltpu.CompilerParams(dimension_semantics=("parallel",)),
    )(x_feat.astype(jnp.float32), prop.astype(jnp.float32), *weights)


# ------------------------- 4) fused self-attention block ----------------------

def _attention_kernel(obj_ref, wqkv_ref, bqkv_ref, wo_ref, bo_ref, ln_ref, o_ref,
                      *, num_heads, scale):
    obj = obj_ref[0]                                             # (P, E)
    E = obj.shape[-1]
    hd = E // num_heads
    qkv = _mm(obj, wqkv_ref[...]) + bqkv_ref[...]                # (P, 3E)

    # out_proj folded per head: attn @ Wout == sum_h o_h @ Wout[h*hd:(h+1)*hd, :]
    # identity residual added here (mmcv MultiheadAttention: identity + out_proj(attn)).
    out = obj + bo_ref[...]
    for h in range(num_heads):
        q = qkv[:, h * hd:(h + 1) * hd]
        k = qkv[:, E + h * hd:E + (h + 1) * hd]
        v = qkv[:, 2 * E + h * hd:2 * E + (h + 1) * hd]
        s = jax.lax.dot_general(q.astype(_MXU_DTYPE), k.astype(_MXU_DTYPE),
                                (((1,), (1,)), ((), ())),
                                preferred_element_type=jnp.float32) * scale
        s = s - jnp.max(s, axis=-1, keepdims=True)
        pr = jnp.exp(s)
        pr = pr / jnp.sum(pr, axis=-1, keepdims=True)
        o_h = _mm(pr, v)                                         # (P, hd)
        out = out + _mm(o_h, wo_ref[h * hd:(h + 1) * hd, :])
    o_ref[0] = _ln_rows(out, ln_ref[...])                        # attention_norm


def attention_block_pallas(p_attn, ln_attn, obj_feat, num_heads):
    N, P, E = obj_feat.shape
    scale = 1.0 / math.sqrt(E // num_heads)
    weights = [p_attn['in_proj']['w'], p_attn['in_proj']['b'].reshape(1, -1),
               p_attn['out_proj']['w'], p_attn['out_proj']['b'].reshape(1, -1),
               jnp.stack(ln_attn, axis=0)]
    weights = [w.astype(jnp.float32) for w in weights]
    return pl.pallas_call(
        partial(_attention_kernel, num_heads=num_heads, scale=scale),
        grid=(N,),
        in_specs=[pl.BlockSpec((1, P, E), lambda b: (b, 0, 0))] + [_rep(w) for w in weights],
        out_specs=pl.BlockSpec((1, P, E), lambda b: (b, 0, 0)),
        out_shape=jax.ShapeDtypeStruct((N, P, E), jnp.float32),
        compiler_params=pltpu.CompilerParams(dimension_semantics=("parallel",)),
    )(obj_feat.astype(jnp.float32), *weights)


# --------------- 5) fused FFN + norms + cls/mask FC stacks + heads ------------

def _post_kernel(obj_ref, w1_ref, b1_ref, w2_ref, b2_ref, ln_ffn_ref,
                 cls_w_ref, cls_ln_ref, wcls_ref, bcls_ref,
                 mask_w_ref, mask_ln_ref, wm_ref, bm_ref,
                 obj_o_ref, cls_o_ref, kern_o_ref):
    obj = obj_ref[0]                                             # (P, C)  (K*K == 1)

    # FFN (mmcv FFN, add_identity=True) + ffn_norm
    h = jax.nn.relu(_mm(obj, w1_ref[...]) + b1_ref[...])
    obj = _ln_rows(obj + _mm(h, w2_ref[...]) + b2_ref[...], ln_ffn_ref[...])
    obj_o_ref[0] = obj

    # cls branch: sum over K*K (==1, identity) -> [Linear(no bias) -> LN -> ReLU]* -> fc_cls
    cls_feat = obj
    for l in range(cls_w_ref.shape[0]):
        cls_feat = jax.nn.relu(_ln_rows(_mm(cls_feat, cls_w_ref[l]), cls_ln_ref[l]))
    cls_o_ref[0] = _mm(cls_feat, wcls_ref[...]) + bcls_ref[...]

    # mask branch: [Linear(no bias) -> LN -> ReLU]* -> fc_mask (dynamic conv kernels)
    mask_feat = obj
    for l in range(mask_w_ref.shape[0]):
        mask_feat = jax.nn.relu(_ln_rows(_mm(mask_feat, mask_w_ref[l]), mask_ln_ref[l]))
    kern_o_ref[0] = _mm(mask_feat, wm_ref[...]) + bm_ref[...]


def post_block_pallas(params, obj_feat):
    N, P, C = obj_feat.shape
    ncls = params['fc_cls']['w'].shape[1]
    ln2 = lambda t: jnp.stack(t, axis=0)
    cls_w = jnp.stack([w for (w, g, b) in params['cls_fcs']], axis=0)
    cls_ln = jnp.stack([jnp.stack([g, b], axis=0) for (w, g, b) in params['cls_fcs']], axis=0)
    mask_w = jnp.stack([w for (w, g, b) in params['mask_fcs']], axis=0)
    mask_ln = jnp.stack([jnp.stack([g, b], axis=0) for (w, g, b) in params['mask_fcs']], axis=0)
    weights = [params['ffn']['fc1']['w'], params['ffn']['fc1']['b'].reshape(1, -1),
               params['ffn']['fc2']['w'], params['ffn']['fc2']['b'].reshape(1, -1),
               ln2(params['ffn_norm']),
               cls_w, cls_ln,
               params['fc_cls']['w'], params['fc_cls']['b'].reshape(1, -1),
               mask_w, mask_ln,
               params['fc_mask']['w'], params['fc_mask']['b'].reshape(1, -1)]
    weights = [w.astype(jnp.float32) for w in weights]

    def blk(d):
        return pl.BlockSpec((1, P, d), lambda b: (b, 0, 0))

    return pl.pallas_call(
        _post_kernel,
        grid=(N,),
        in_specs=[blk(C)] + [_rep(w) for w in weights],
        out_specs=(blk(C), blk(ncls), blk(C)),
        out_shape=(jax.ShapeDtypeStruct((N, P, C), jnp.float32),
                   jax.ShapeDtypeStruct((N, P, ncls), jnp.float32),
                   jax.ShapeDtypeStruct((N, P, C), jnp.float32)),
        compiler_params=pltpu.CompilerParams(dimension_semantics=("parallel",)),
    )(obj_feat.astype(jnp.float32), *weights)


# ------------------------- 6) dynamic per-image mask conv --------------------

def _mask_conv_kernel(k_ref, x_ref, o_ref):
    o_ref[0] = _mm(k_ref[0], x_ref[0])


def mask_conv_pallas(kernels, x_chw):
    N, P, C = kernels.shape
    HW = x_chw.shape[-1]
    hw_tile = _pick_tile(HW, (4096, 2048, 1024, 512, 256, 128))
    return pl.pallas_call(
        _mask_conv_kernel,
        grid=(N, HW // hw_tile),
        in_specs=[pl.BlockSpec((1, P, C), lambda b, j: (b, 0, 0)),
                  pl.BlockSpec((1, C, hw_tile), lambda b, j: (b, 0, j))],
        out_specs=pl.BlockSpec((1, P, hw_tile), lambda b, j: (b, 0, j)),
        out_shape=jax.ShapeDtypeStruct((N, P, HW), jnp.float32),
        compiler_params=pltpu.CompilerParams(
            dimension_semantics=("parallel", "parallel")),
    )(kernels.astype(jnp.float32), x_chw.astype(jnp.float32))


# ------------------------------ head forward ---------------------------------

def knet_head_forward(params, cfg, x, proposal_feat, mask_preds):
    N, P = proposal_feat.shape[:2]
    C_in = cfg['in_channels']
    K = cfg['conv_kernel_size']
    # TODO(synk): conv_kernel_size > 1 needs the (P, K*K, C) grouped updator path and an
    #             im2col+matmul dynamic conv; K-Net default K == 1 is what is implemented.
    assert K == 1
    # TODO(synk): mask_transform_stride == 2 path (extra down/upsample) not implemented.
    assert cfg['mask_transform_stride'] == 1 and cfg['feat_gather_stride'] == 1

    Nb, Cx, H, W = x.shape
    HW = H * W

    # 1) feat_transform (1x1 ConvModule, no norm/act) as a row-tiled per-pixel linear.
    #    The feature map stays in (N, HW, C) layout from here on.
    x_pix = jnp.transpose(x, (0, 2, 3, 1)).reshape(N * HW, Cx)
    x_hwc = feat_transform_pallas(x_pix, params['feat_transform']['w'],
                                  params['feat_transform']['b'])
    C = x_hwc.shape[-1]
    x_hwc = x_hwc.reshape(N, HW, C)

    # 2) bilinear resize (align_corners=False, no antialias -> matches F.interpolate for
    #    both up- and down-scaling) + hard-mask gather.
    gather_mask = jax.image.resize(mask_preds, (N, P, H, W), method='bilinear',
                                   antialias=False)
    x_feat = mask_gather_pallas(gather_mask.reshape(N, P, HW), x_hwc,
                                cfg['hard_mask_thr'])                      # (N, P, C)

    # 3) fused KernelUpdator.
    prop = proposal_feat.reshape(N, P, C_in)                               # K*K == 1
    obj_feat = kernel_updator_pallas(params['updator'], x_feat, prop)      # (N, P, C)

    # 4) fused self-attention block over proposals
    #    (in_proj + MHA + out_proj + identity residual + attention_norm).
    obj_feat = attention_block_pallas(params['attention'], params['attention_norm'],
                                      obj_feat, cfg['num_heads'])          # (N, P, E)

    # 5) fused FFN + ffn_norm + cls/mask FC stacks + fc_cls + fc_mask.
    obj_feat, cls_score, mask_kernels = post_block_pallas(params, obj_feat)

    # 6) per-image dynamic 1x1 mask conv: (P, C) @ (C, HW).
    #    The (N, C, HW) view of the feature map is produced exactly once, here.
    x_chw = jnp.swapaxes(x_hwc, 1, 2)
    new_mask_preds = mask_conv_pallas(mask_kernels, x_chw).reshape(N, P, H, W)

    obj_out = obj_feat.reshape(N, P, C_in, K, K)
    return cls_score, new_mask_preds, obj_out


# ------------------------------ parameter init -------------------------------

def init_params(key, cfg):
    C = cfg['in_channels']
    Cf = cfg['feat_channels']
    E = C * cfg['conv_kernel_size'] ** 2
    ffn_dim = cfg['feedforward_channels']
    keys = iter(jax.random.split(key, 64))

    def lin(i, o, bias=True, scale=0.1):
        w = scale * jax.random.normal(next(keys), (i, o), jnp.float32)
        b = (scale * jax.random.normal(next(keys), (o,), jnp.float32)) if bias else None
        return {'w': w, 'b': b}

    def ln(d):
        return (jnp.ones((d,), jnp.float32), jnp.zeros((d,), jnp.float32))

    return {
        'feat_transform': lin(C, C),                       # 1x1 ConvModule weights
        'updator': {
            'dynamic': lin(C, 2 * Cf),
            'input': lin(C, 2 * Cf),
            'input_gate': lin(Cf, Cf),
            'update_gate': lin(Cf, Cf),
            'norm_in': ln(Cf), 'norm_out': ln(Cf),
            'input_norm_in': ln(Cf), 'input_norm_out': ln(Cf),
            'fc': lin(Cf, C), 'fc_norm': ln(C),
        },
        'attention': {'in_proj': lin(E, 3 * E), 'out_proj': lin(E, E)},
        'attention_norm': ln(E),
        'ffn': {'fc1': lin(C, ffn_dim), 'fc2': lin(ffn_dim, C)},
        'ffn_norm': ln(C),
        'cls_fcs': [(lin(C, C, bias=False)['w'],) + ln(C)
                    for _ in range(cfg['num_cls_fcs'])],
        'mask_fcs': [(lin(C, C, bias=False)['w'],) + ln(C)
                     for _ in range(cfg['num_mask_fcs'])],
        'fc_cls': lin(C, cfg['num_classes']),
        'fc_mask': lin(C, C),
    }


# ----------------------------------- main ------------------------------------

if __name__ == "__main__":
    cfg = dict(
        in_channels=32, feat_channels=32, conv_kernel_size=1,
        num_heads=4, feedforward_channels=64,
        num_cls_fcs=1, num_mask_fcs=1, num_classes=5,
        hard_mask_thr=0.5, mask_transform_stride=1, feat_gather_stride=1,
    )
    N, P = 2, 8
    H = W = 16
    Hm = Wm = 8
    C = cfg['in_channels']
    K = cfg['conv_kernel_size']

    key = jax.random.PRNGKey(0)
    k_p, k_x, k_pf, k_m = jax.random.split(key, 4)
    params = init_params(k_p, cfg)

    x = jax.random.normal(k_x, (N, C, H, W), jnp.float32)              # NCHW feature map
    proposal_feat = jax.random.normal(k_pf, (N, P, C, K, K), jnp.float32)
    mask_preds = jax.random.normal(k_m, (N, P, Hm, Wm), jnp.float32)

    fwd = jax.jit(lambda a, b, c: knet_head_forward(params, cfg, a, b, c))
    cls_score, new_mask_preds, obj_feat = fwd(x, proposal_feat, mask_preds)
    jax.block_until_ready((cls_score, new_mask_preds, obj_feat))

    assert cls_score.shape == (N, P, cfg['num_classes'])
    assert new_mask_preds.shape == (N, P, H, W)
    assert obj_feat.shape == (N, P, C, K, K)
    print("KERNEL_OK")
</pallas_src>

<mosaic_0001>
module attributes {stable_mosaic.version = 11 : i64} {
  func.func @_feat_transform_kernel(%arg0: i32, %arg1: memref<256x32xf32, #tpu.memory_space<vmem>>, %arg2: memref<32x32xf32, #tpu.memory_space<vmem>>, %arg3: memref<1x32xf32, #tpu.memory_space<vmem>>, %arg4: memref<256x32xf32, #tpu.memory_space<vmem>>) attributes {dimension_semantics = [#tpu.dimension_semantics<parallel>], iteration_bounds = array<i64: 2>, scalar_prefetch = 0 : i64, scratch_operands = 0 : i64, tpu.core_type = #tpu.core_type<tc>, window_params = [{transform_indices = @transform_0, window_bounds = array<i64: 256, 32>}, {pipeline_mode = #tpu.pipeline_mode<synchronous>, transform_indices = @transform_1, window_bounds = array<i64: 32, 32>}, {pipeline_mode = #tpu.pipeline_mode<synchronous>, transform_indices = @transform_2, window_bounds = array<i64: 1, 32>}, {transform_indices = @transform_3, window_bounds = array<i64: 256, 32>}]} {
    %c0 = arith.constant 0 : index
    %c0_0 = arith.constant 0 : index
    %0 = vector.load %arg1[%c0, %c0_0] : memref<256x32xf32, #tpu.memory_space<vmem>>, vector<256x32xf32>
    %c0_1 = arith.constant 0 : index
    %c0_2 = arith.constant 0 : index
    %1 = vector.load %arg2[%c0_1, %c0_2] : memref<32x32xf32, #tpu.memory_space<vmem>>, vector<32x32xf32>
    %cst = arith.constant dense<0.000000e+00> : vector<256x32xf32>
    %2 = tpu.matmul %0, %1, %cst {dimension_numbers = #tpu.dot_dimension_numbers<[1], [0], [0], [1], [0, 0, 1, 1], [], []>} : vector<256x32xf32>, vector<32x32xf32>, vector<256x32xf32> -> vector<256x32xf32>
    %c0_3 = arith.constant 0 : index
    %c0_4 = arith.constant 0 : index
    %3 = vector.load %arg3[%c0_3, %c0_4] : memref<1x32xf32, #tpu.memory_space<vmem>>, vector<1x32xf32>
    %4 = vector.broadcast %3 : vector<1x32xf32> to vector<256x32xf32>
    %5 = arith.addf %2, %4 : vector<256x32xf32>
    %c0_5 = arith.constant 0 : index
    %c0_6 = arith.constant 0 : index
    %6 = vector.load %arg4[%c0_5, %c0_6] : memref<256x32xf32, #tpu.memory_space<vmem>>, vector<256x32xf32>
    tpu.vector_store %arg4[%c0_5, %c0_6], %5 {strides = array<i32>} : memref<256x32xf32, #tpu.memory_space<vmem>>, vector<256x32xf32>,
    return
  }
  func.func @transform_0(%arg0: i32) -> (i32, i32) {
    %c0_i32 = arith.constant 0 : i32
    %c0_i32_0 = arith.constant 0 : i32
    return %arg0, %c0_i32 : i32, i32
  }
  func.func @transform_1(%arg0: i32) -> (i32, i32) {
    %c0_i32 = arith.constant 0 : i32
    %c0_i32_0 = arith.constant 0 : i32
    %c0_i32_1 = arith.constant 0 : i32
    return %c0_i32, %c0_i32_0 : i32, i32
  }
  func.func @transform_2(%arg0: i32) -> (i32, i32) {
    %c0_i32 = arith.constant 0 : i32
    %c0_i32_0 = arith.constant 0 : i32
    %c0_i32_1 = arith.constant 0 : i32
    return %c0_i32, %c0_i32_0 : i32, i32
  }
  func.func @transform_3(%arg0: i32) -> (i32, i32) {
    %c0_i32 = arith.constant 0 : i32
    %c0_i32_0 = arith.constant 0 : i32
    return %arg0, %c0_i32 : i32, i32
  }
}

module attributes {stable_mosaic.version = 11 : i64} {
  func.func @_mask_gather_kernel(%arg0: i32, %arg1: i32, %arg2: memref<1x8x256xf32, #tpu.memory_space<vmem>>, %arg3: memref<1x256x32xf32, #tpu.memory_space<vmem>>, %arg4: memref<1x8x32xf32, #tpu.memory_space<vmem>>) attributes {dimension_semantics = [#tpu.dimension_semantics<parallel>, #tpu.dimension_semantics<arbitrary>], iteration_bounds = array<i64: 2, 1>, scalar_prefetch = 0 : i64, scratch_operands = 0 : i64, tpu.core_type = #tpu.core_type<tc>, window_params = [{transform_indices = @transform_0, window_bounds = array<i64: 1, 8, 256>}, {transform_indices = @transform_1, window_bounds = array<i64: 1, 256, 32>}, {transform_indices = @transform_2, window_bounds = array<i64: 1, 8, 32>}]} {
    %c0_i32 = arith.constant 0 : i32
    %0 = arith.cmpi eq, %arg1, %c0_i32 : i32
    %1 = arith.extui %0 : i1 to i32
    %c0_i32_0 = arith.constant 0 : i32
    %2 = arith.cmpi ne, %1, %c0_i32_0 : i32
    scf.if %2 {
      %cst_13 = arith.constant 0.000000e+00 : f32
      %18 = vector.broadcast %cst_13 : f32 to vector<1x8x32xf32>
      %c0_14 = arith.constant 0 : index
      %c0_15 = arith.constant 0 : index
      %c0_16 = arith.constant 0 : index
      %19 = vector.load %arg4[%c0_14, %c0_15, %c0_16] : memref<1x8x32xf32, #tpu.memory_space<vmem>>, vector<1x8x32xf32>
      tpu.vector_store %arg4[%c0_14, %c0_15, %c0_16], %18 {strides = array<i32>} : memref<1x8x32xf32, #tpu.memory_space<vmem>>, vector<1x8x32xf32>,
    } else {
    }
    %c0 = arith.constant 0 : index
    %c0_1 = arith.constant 0 : index
    %c0_2 = arith.constant 0 : index
    %3 = vector.load %arg2[%c0, %c0_1, %c0_2] : memref<1x8x256xf32, #tpu.memory_space<vmem>>, vector<1x8x256xf32>
    %4 = vector.shape_cast %3 : vector<1x8x256xf32> to vector<8x256xf32>
    %cst = arith.constant 0.000000e+00 : f32
    %5 = vector.broadcast %cst : f32 to vector<8x256xf32>
    %6 = arith.cmpf ogt, %4, %5 : vector<8x256xf32>
    %7 = arith.extui %6 : vector<8x256xi1> to vector<8x256xi32>
    %8 = arith.sitofp %7 : vector<8x256xi32> to vector<8x256xf32>
    %c0_3 = arith.constant 0 : index
    %c0_4 = arith.constant 0 : index
    %c0_5 = arith.constant 0 : index
    %9 = vector.load %arg4[%c0_3, %c0_4, %c0_5] : memref<1x8x32xf32, #tpu.memory_space<vmem>>, vector<1x8x32xf32>
    %10 = vector.shape_cast %9 : vector<1x8x32xf32> to vector<8x32xf32>
    %c0_6 = arith.constant 0 : index
    %c0_7 = arith.constant 0 : index
    %c0_8 = arith.constant 0 : index
    %11 = vector.load %arg3[%c0_6, %c0_7, %c0_8] : memref<1x256x32xf32, #tpu.memory_space<vmem>>, vector<1x256x32xf32>
    %12 = vector.shape_cast %11 : vector<1x256x32xf32> to vector<256x32xf32>
    %cst_9 = arith.constant dense<0.000000e+00> : vector<8x32xf32>
    %13 = tpu.matmul %8, %12, %cst_9 {dimension_numbers = #tpu.dot_dimension_numbers<[1], [0], [0], [1], [0, 0, 1, 1], [], []>} : vector<8x256xf32>, vector<256x32xf32>, vector<8x32xf32> -> vector<8x32xf32>
    %14 = arith.addf %10, %13 : vector<8x32xf32>
    %c0_10 = arith.constant 0 : index
    %c0_11 = arith.constant 0 : index
    %c0_12 = arith.constant 0 : index
    %15 = vector.load %arg4[%c0_10, %c0_11, %c0_12] : memref<1x8x32xf32, #tpu.memory_space<vmem>>, vector<1x8x32xf32>
    %16 = vector.shape_cast %15 : vector<1x8x32xf32> to vector<8x32xf32>
    %17 = vector.shape_cast %14 : vector<8x32xf32> to vector<1x8x32xf32>
    tpu.vector_store %arg4[%c0_10, %c0_11, %c0_12], %17 {strides = array<i32>} : memref<1x8x32xf32, #tpu.memory_space<vmem>>, vector<1x8x32xf32>,
    return
  }
  func.func @transform_0(%arg0: i32, %arg1: i32) -> (i32, i32, i32) {
    %c0_i32 = arith.constant 0 : i32
    %c0_i32_0 = arith.constant 0 : i32
    return %arg0, %c0_i32, %arg1 : i32, i32, i32
  }
  func.func @transform_1(%arg0: i32, %arg1: i32) -> (i32, i32, i32) {
    %c0_i32 = arith.constant 0 : i32
    %c0_i32_0 = arith.constant 0 : i32
    return %arg0, %arg1, %c0_i32 : i32, i32, i32
  }
  func.func @transform_2(%arg0: i32, %arg1: i32) -> (i32, i32, i32) {
    %c0_i32 = arith.constant 0 : i32
    %c0_i32_0 = arith.constant 0 : i32
    %c0_i32_1 = arith.constant 0 : i32
    return %arg0, %c0_i32, %c0_i32_0 : i32, i32, i32
  }
}

module attributes {stable_mosaic.version = 11 : i64} {
  func.func @_attention_kernel(%arg0: i32, %arg1: memref<1x8x32xf32, #tpu.memory_space<vmem>>, %arg2: memref<32x96xf32, #tpu.memory_space<vmem>>, %arg3: memref<1x96xf32, #tpu.memory_space<vmem>>, %arg4: memref<32x32xf32, #tpu.memory_space<vmem>>, %arg5: memref<1x32xf32, #tpu.memory_space<vmem>>, %arg6: memref<2x32xf32, #tpu.memory_space<vmem>>, %arg7: memref<1x8x32xf32, #tpu.memory_space<vmem>>) attributes {dimension_semantics = [#tpu.dimension_semantics<parallel>], iteration_bounds = array<i64: 2>, scalar_prefetch = 0 : i64, scratch_operands = 0 : i64, tpu.core_type = #tpu.core_type<tc>, window_params = [{transform_indices = @transform_0, window_bounds = array<i64: 1, 8, 32>}, {pipeline_mode = #tpu.pipeline_mode<synchronous>, transform_indices = @transform_1, window_bounds = array<i64: 32, 96>}, {pipeline_mode = #tpu.pipeline_mode<synchronous>, transform_indices = @transform_2, window_bounds = array<i64: 1, 96>}, {pipeline_mode = #tpu.pipeline_mode<synchronous>, transform_indices = @transform_3, window_bounds = array<i64: 32, 32>}, {pipeline_mode = #tpu.pipeline_mode<synchronous>, transform_indices = @transform_4, window_bounds = array<i64: 1, 32>}, {pipeline_mode = #tpu.pipeline_mode<synchronous>, transform_indices = @transform_5, window_bounds = array<i64: 2, 32>}, {transform_indices = @transform_6, window_bounds = array<i64: 1, 8, 32>}]} {
    %c0 = arith.constant 0 : index
    %c0_0 = arith.constant 0 : index
    %c0_1 = arith.constant 0 : index
    %0 = vector.load %arg1[%c0, %c0_0, %c0_1] : memref<1x8x32xf32, #tpu.memory_space<vmem>>, vector<1x8x32xf32>
    %1 = vector.shape_cast %0 : vector<1x8x32xf32> to vector<8x32xf32>
    %c0_2 = arith.constant 0 : index
    %c0_3 = arith.constant 0 : index
    %2 = vector.load %arg2[%c0_2, %c0_3] : memref<32x96xf32, #tpu.memory_space<vmem>>, vector<32x96xf32>
    %cst = arith.constant dense<0.000000e+00> : vector<8x96xf32>
    %3 = tpu.matmul %1, %2, %cst {dimension_numbers = #tpu.dot_dimension_numbers<[1], [0], [0], [1], [0, 0, 1, 1], [], []>} : vector<8x32xf32>, vector<32x96xf32>, vector<8x96xf32> -> vector<8x96xf32>
    %c0_4 = arith.constant 0 : index
    %c0_5 = arith.constant 0 : index
    %4 = vector.load %arg3[%c0_4, %c0_5] : memref<1x96xf32, #tpu.memory_space<vmem>>, vector<1x96xf32>
    %5 = vector.broadcast %4 : vector<1x96xf32> to vector<8x96xf32>
    %6 = arith.addf %3, %5 : vector<8x96xf32>
    %c0_6 = arith.constant 0 : index
    %c0_7 = arith.constant 0 : index
    %7 = vector.load %arg5[%c0_6, %c0_7] : memref<1x32xf32, #tpu.memory_space<vmem>>, vector<1x32xf32>
    %8 = vector.broadcast %7 : vector<1x32xf32> to vector<8x32xf32>
    %9 = arith.addf %1, %8 : vector<8x32xf32>
    %10 = vector.extract_strided_slice %6 {offsets = [0, 0], sizes = [8, 8], strides = [1, 1]} : vector<8x96xf32> to vector<8x8xf32>
    %11 = vector.extract_strided_slice %6 {offsets = [0, 32], sizes = [8, 8], strides = [1, 1]} : vector<8x96xf32> to vector<8x8xf32>
    %12 = vector.extract_strided_slice %6 {offsets = [0, 64], sizes = [8, 8], strides = [1, 1]} : vector<8x96xf32> to vector<8x8xf32>
    %cst_8 = arith.constant dense<0.000000e+00> : vector<8x8xf32>
    %13 = tpu.matmul %10, %11, %cst_8 {dimension_numbers = #tpu.dot_dimension_numbers<[1], [1], [0], [0], [0, 0, 1, 0], [], []>} : vector<8x8xf32>, vector<8x8xf32>, vector<8x8xf32> -> vector<8x8xf32>
    %cst_9 = arith.constant 0.353553385 : f32
    %14 = vector.broadcast %cst_9 : f32 to vector<8x8xf32>
    %15 = arith.mulf %13, %14 : vector<8x8xf32>
    %cst_10 = arith.constant dense<0xFF800000> : vector<8xf32>
    %16 = vector.multi_reduction <maximumf>, %15, %cst_10 [1] : vector<8x8xf32> to vector<8xf32>
    %17 = vector.shape_cast %16 : vector<8xf32> to vector<8x1xf32>
    %18 = vector.broadcast %17 : vector<8x1xf32> to vector<8x8xf32>
    %19 = arith.subf %15, %18 : vector<8x8xf32>
    %20 = math.exp %19 : vector<8x8xf32>
    %cst_11 = arith.constant dense<0.000000e+00> : vector<8xf32>
    %21 = vector.multi_reduction <add>, %20, %cst_11 [1] : vector<8x8xf32> to vector<8xf32>
    %22 = vector.shape_cast %21 : vector<8xf32> to vector<8x1xf32>
    %23 = vector.broadcast %22 : vector<8x1xf32> to vector<8x8xf32>
    %24 = arith.divf %20, %23 : vector<8x8xf32>
    %cst_12 = arith.constant dense<0.000000e+00> : vector<8x8xf32>
    %25 = tpu.matmul %24, %12, %cst_12 {dimension_numbers = #tpu.dot_dimension_numbers<[1], [0], [0], [1], [0, 0, 1, 1], [], []>} : vector<8x8xf32>, vector<8x8xf32>, vector<8x8xf32> -> vector<8x8xf32>
    %c0_13 = arith.constant 0 : index
    %c0_14 = arith.constant 0 : index
    %26 = vector.load %arg4[%c0_13, %c0_14] : memref<32x32xf32, #tpu.memory_space<vmem>>, vector<8x32xf32>
    %cst_15 = arith.constant dense<0.000000e+00> : vector<8x32xf32>
    %27 = tpu.matmul %25, %26, %cst_15 {dimension_numbers = #tpu.dot_dimension_numbers<[1], [0], [0], [1], [0, 0, 1, 1], [], []>} : vector<8x8xf32>, vector<8x32xf32>, vector<8x32xf32> -> vector<8x32xf32>
    %28 = arith.addf %9, %27 : vector<8x32xf32>
    %29 = vector.extract_strided_slice %6 {offsets = [0, 8], sizes = [8, 8], strides = [1, 1]} : vector<8x96xf32> to vector<8x8xf32>
    %30 = vector.extract_strided_slice %6 {offsets = [0, 40], sizes = [8, 8], strides = [1, 1]} : vector<8x96xf32> to vector<8x8xf32>
    %31 = vector.extract_strided_slice %6 {offsets = [0, 72], sizes = [8, 8], strides = [1, 1]} : vector<8x96xf32> to vector<8x8xf32>
    %cst_16 = arith.constant dense<0.000000e+00> : vector<8x8xf32>
    %32 = tpu.matmul %29, %30, %cst_16 {dimension_numbers = #tpu.dot_dimension_numbers<[1], [1], [0], [0], [0, 0, 1, 0], [], []>} : vector<8x8xf32>, vector<8x8xf32>, vector<8x8xf32> -> vector<8x8xf32>
    %cst_17 = arith.constant 0.353553385 : f32
    %33 = vector.broadcast %cst_17 : f32 to vector<8x8xf32>
    %34 = arith.mulf %32, %33 : vector<8x8xf32>
    %cst_18 = arith.constant dense<0xFF800000> : vector<8xf32>
    %35 = vector.multi_reduction <maximumf>, %34, %cst_18 [1] : vector<8x8xf32> to vector<8xf32>
    %36 = vector.shape_cast %35 : vector<8xf32> to vector<8x1xf32>
    %37 = vector.broadcast %36 : vector<8x1xf32> to vector<8x8xf32>
    %38 = arith.subf %34, %37 : vector<8x8xf32>
    %39 = math.exp %38 : vector<8x8xf32>
    %cst_19 = arith.constant dense<0.000000e+00> : vector<8xf32>
    %40 = vector.multi_reduction <add>, %39, %cst_19 [1] : vector<8x8xf32> to vector<8xf32>
    %41 = vector.shape_cast %40 : vector<8xf32> to vector<8x1xf32>
    %42 = vector.broadcast %41 : vector<8x1xf32> to vector<8x8xf32>
    %43 = arith.divf %39, %42 : vector<8x8xf32>
    %cst_20 = arith.constant dense<0.000000e+00> : vector<8x8xf32>
    %44 = tpu.matmul %43, %31, %cst_20 {dimension_numbers = #tpu.dot_dimension_numbers<[1], [0], [0], [1], [0, 0, 1, 1], [], []>} : vector<8x8xf32>, vector<8x8xf32>, vector<8x8xf32> -> vector<8x8xf32>
    %c8 = arith.constant 8 : index
    %c0_21 = arith.constant 0 : index
    %45 = vector.load %arg4[%c8, %c0_21] : memref<32x32xf32, #tpu.memory_space<vmem>>, vector<8x32xf32>
    %cst_22 = arith.constant dense<0.000000e+00> : vector<8x32xf32>
    %46 = tpu.matmul %44, %45, %cst_22 {dimension_numbers = #tpu.dot_dimension_numbers<[1], [0], [0], [1], [0, 0, 1, 1], [], []>} : vector<8x8xf32>, vector<8x32xf32>, vector<8x32xf32> -> vector<8x32xf32>
    %47 = arith.addf %28, %46 : vector<8x32xf32>
    %48 = vector.extract_strided_slice %6 {offsets = [0, 16], sizes = [8, 8], strides = [1, 1]} : vector<8x96xf32> to vector<8x8xf32>
    %49 = vector.extract_strided_slice %6 {offsets = [0, 48], sizes = [8, 8], strides = [1, 1]} : vector<8x96xf32> to vector<8x8xf32>
    %50 = vector.extract_strided_slice %6 {offsets = [0, 80], sizes = [8, 8], strides = [1, 1]} : vector<8x96xf32> to vector<8x8xf32>
    %cst_23 = arith.constant dense<0.000000e+00> : vector<8x8xf32>
    %51 = tpu.matmul %48, %49, %cst_23 {dimension_numbers = #tpu.dot_dimension_numbers<[1], [1], [0], [0], [0, 0, 1, 0], [], []>} : vector<8x8xf32>, vector<8x8xf32>, vector<8x8xf32> -> vector<8x8xf32>
    %cst_24 = arith.constant 0.353553385 : f32
    %52 = vector.broadcast %cst_24 : f32 to vector<8x8xf32>
    %53 = arith.mulf %51, %52 : vector<8x8xf32>
    %cst_25 = arith.constant dense<0xFF800000> : vector<8xf32>
    %54 = vector.multi_reduction <maximumf>, %53, %cst_25 [1] : vector<8x8xf32> to vector<8xf32>
    %55 = vector.shape_cast %54 : vector<8xf32> to vector<8x1xf32>
    %56 = vector.broadcast %55 : vector<8x1xf32> to vector<8x8xf32>
    %57 = arith.subf %53, %56 : vector<8x8xf32>
    %58 = math.exp %57 : vector<8x8xf32>
    %cst_26 = arith.constant dense<0.000000e+00> : vector<8xf32>
    %59 = vector.multi_reduction <add>, %58, %cst_26 [1] : vector<8x8xf32> to vector<8xf32>
    %60 = vector.shape_cast %59 : vector<8xf32> to vector<8x1xf32>
    %61 = vector.broadcast %60 : vector<8x1xf32> to vector<8x8xf32>
    %62 = arith.divf %58, %61 : vector<8x8xf32>
    %cst_27 = arith.constant dense<0.000000e+00> : vector<8x8xf32>
    %63 = tpu.matmul %62, %50, %cst_27 {dimension_numbers = #tpu.dot_dimension_numbers<[1], [0], [0], [1], [0, 0, 1, 1], [], []>} : vector<8x8xf32>, vector<8x8xf32>, vector<8x8xf32> -> vector<8x8xf32>
    %c16 = arith.constant 16 : index
    %c0_28 = arith.constant 0 : index
    %64 = vector.load %arg4[%c16, %c0_28] : memref<32x32xf32, #tpu.memory_space<vmem>>, vector<8x32xf32>
    %cst_29 = arith.constant dense<0.000000e+00> : vector<8x32xf32>
    %65 = tpu.matmul %63, %64, %cst_29 {dimension_numbers = #tpu.dot_dimension_numbers<[1], [0], [0], [1], [0, 0, 1, 1], [], []>} : vector<8x8xf32>, vector<8x32xf32>, vector<8x32xf32> -> vector<8x32xf32>
    %66 = arith.addf %47, %65 : vector<8x32xf32>
    %67 = vector.extract_strided_slice %6 {offsets = [0, 24], sizes = [8, 8], strides = [1, 1]} : vector<8x96xf32> to vector<8x8xf32>
    %68 = vector.extract_strided_slice %6 {offsets = [0, 56], sizes = [8, 8], strides = [1, 1]} : vector<8x96xf32> to vector<8x8xf32>
    %69 = vector.extract_strided_slice %6 {offsets = [0, 88], sizes = [8, 8], strides = [1, 1]} : vector<8x96xf32> to vector<8x8xf32>
    %cst_30 = arith.constant dense<0.000000e+00> : vector<8x8xf32>
    %70 = tpu.matmul %67, %68, %cst_30 {dimension_numbers = #tpu.dot_dimension_numbers<[1], [1], [0], [0], [0, 0, 1, 0], [], []>} : vector<8x8xf32>, vector<8x8xf32>, vector<8x8xf32> -> vector<8x8xf32>
    %cst_31 = arith.constant 0.353553385 : f32
    %71 = vector.broadcast %cst_31 : f32 to vector<8x8xf32>
    %72 = arith.mulf %70, %71 : vector<8x8xf32>
    %cst_32 = arith.constant dense<0xFF800000> : vector<8xf32>
    %73 = vector.multi_reduction <maximumf>, %72, %cst_32 [1] : vector<8x8xf32> to vector<8xf32>
    %74 = vector.shape_cast %73 : vector<8xf32> to vector<8x1xf32>
    %75 = vector.broadcast %74 : vector<8x1xf32> to vector<8x8xf32>
    %76 = arith.subf %72, %75 : vector<8x8xf32>
    %77 = math.exp %76 : vector<8x8xf32>
    %cst_33 = arith.constant dense<0.000000e+00> : vector<8xf32>
    %78 = vector.multi_reduction <add>, %77, %cst_33 [1] : vector<8x8xf32> to vector<8xf32>
    %79 = vector.shape_cast %78 : vector<8xf32> to vector<8x1xf32>
    %80 = vector.broadcast %79 : vector<8x1xf32> to vector<8x8xf32>
    %81 = arith.divf %77, %80 : vector<8x8xf32>
    %cst_34 = arith.constant dense<0.000000e+00> : vector<8x8xf32>
    %82 = tpu.matmul %81, %69, %cst_34 {dimension_numbers = #tpu.dot_dimension_numbers<[1], [0], [0], [1], [0, 0, 1, 1], [], []>} : vector<8x8xf32>, vector<8x8xf32>, vector<8x8xf32> -> vector<8x8xf32>
    %c24 = arith.constant 24 : index
    %c0_35 = arith.constant 0 : index
    %83 = vector.load %arg4[%c24, %c0_35] : memref<32x32xf32, #tpu.memory_space<vmem>>, vector<8x32xf32>
    %cst_36 = arith.constant dense<0.000000e+00> : vector<8x32xf32>
    %84 = tpu.matmul %82, %83, %cst_36 {dimension_numbers = #tpu.dot_dimension_numbers<[1], [0], [0], [1], [0, 0, 1, 1], [], []>} : vector<8x8xf32>, vector<8x32xf32>, vector<8x32xf32> -> vector<8x32xf32>
    %85 = arith.addf %66, %84 : vector<8x32xf32>
    %c0_37 = arith.constant 0 : index
    %c0_38 = arith.constant 0 : index
    %86 = vector.load %arg6[%c0_37, %c0_38] : memref<2x32xf32, #tpu.memory_space<vmem>>, vector<2x32xf32>
    %cst_39 = arith.constant dense<0.000000e+00> : vector<8xf32>
    %87 = vector.multi_reduction <add>, %85, %cst_39 [1] : vector<8x32xf32> to vector<8xf32>
    %88 = vector.shape_cast %87 : vector<8xf32> to vector<8x1xf32>
    %cst_40 = arith.constant 3.200000e+01 : f32
    %89 = vector.broadcast %cst_40 : f32 to vector<8x1xf32>
    %90 = arith.divf %88, %89 : vector<8x1xf32>
    %91 = vector.broadcast %90 : vector<8x1xf32> to vector<8x32xf32>
    %92 = arith.subf %85, %91 : vector<8x32xf32>
    %93 = arith.mulf %92, %92 : vector<8x32xf32>
    %cst_41 = arith.constant dense<0.000000e+00> : vector<8xf32>
    %94 = vector.multi_reduction <add>, %93, %cst_41 [1] : vector<8x32xf32> to vector<8xf32>
    %95 = vector.shape_cast %94 : vector<8xf32> to vector<8x1xf32>
    %cst_42 = arith.constant 3.200000e+01 : f32
    %96 = vector.broadcast %cst_42 : f32 to vector<8x1xf32>
    %97 = arith.divf %95, %96 : vector<8x1xf32>
    %98 = vector.broadcast %90 : vector<8x1xf32> to vector<8x32xf32>
    %99 = arith.subf %85, %98 : vector<8x32xf32>
    %cst_43 = arith.constant 9.99999974E-6 : f32
    %100 = vector.broadcast %cst_43 : f32 to vector<8x1xf32>
    %101 = arith.addf %97, %100 : vector<8x1xf32>
    %102 = math.rsqrt %101 : vector<8x1xf32>
    %103 = vector.broadcast %102 : vector<8x1xf32> to vector<8x32xf32>
    %104 = arith.mulf %99, %103 : vector<8x32xf32>
    %105 = vector.extract_strided_slice %86 {offsets = [0, 0], sizes = [1, 32], strides = [1, 1]} : vector<2x32xf32> to vector<1x32xf32>
    %106 = vector.broadcast %105 : vector<1x32xf32> to vector<8x32xf32>
    %107 = arith.mulf %104, %106 : vector<8x32xf32>
    %108 = vector.extract_strided_slice %86 {offsets = [1, 0], sizes = [1, 32], strides = [1, 1]} : vector<2x32xf32> to vector<1x32xf32>
    %109 = vector.broadcast %108 : vector<1x32xf32> to vector<8x32xf32>
    %110 = arith.addf %107, %109 : vector<8x32xf32>
    %c0_44 = arith.constant 0 : index
    %c0_45 = arith.constant 0 : index
    %c0_46 = arith.constant 0 : index
    %111 = vector.load %arg7[%c0_44, %c0_45, %c0_46] : memref<1x8x32xf32, #tpu.memory_space<vmem>>, vector<1x8x32xf32>
    %112 = vector.shape_cast %111 : vector<1x8x32xf32> to vector<8x32xf32>
    %113 = vector.shape_cast %110 : vector<8x32xf32> to vector<1x8x32xf32>
    tpu.vector_store %arg7[%c0_44, %c0_45, %c0_46], %113 {strides = array<i32>} : memref<1x8x32xf32, #tpu.memory_space<vmem>>, vector<1x8x32xf32>,
    return
  }
  func.func @transform_0(%arg0: i32) -> (i32, i32, i32) {
    %c0_i32 = arith.constant 0 : i32
    %c0_i32_0 = arith.constant 0 : i32
    %c0_i32_1 = arith.constant 0 : i32
    return %arg0, %c0_i32, %c0_i32_0 : i32, i32, i32
  }
  func.func @transform_1(%arg0: i32) -> (i32, i32) {
    %c0_i32 = arith.constant 0 : i32
    %c0_i32_0 = arith.constant 0 : i32
    %c0_i32_1 = arith.constant 0 : i32
    return %c0_i32, %c0_i32_0 : i32, i32
  }
  func.func @transform_2(%arg0: i32) -> (i32, i32) {
    %c0_i32 = arith.constant 0 : i32
    %c0_i32_0 = arith.constant 0 : i32
    %c0_i32_1 = arith.constant 0 : i32
    return %c0_i32, %c0_i32_0 : i32, i32
  }
  func.func @transform_3(%arg0: i32) -> (i32, i32) {
    %c0_i32 = arith.constant 0 : i32
    %c0_i32_0 = arith.constant 0 : i32
    %c0_i32_1 = arith.constant 0 : i32
    return %c0_i32, %c0_i32_0 : i32, i32
  }
  func.func @transform_4(%arg0: i32) -> (i32, i32) {
    %c0_i32 = arith.constant 0 : i32
    %c0_i32_0 = arith.constant 0 : i32
    %c0_i32_1 = arith.constant 0 : i32
    return %c0_i32, %c0_i32_0 : i32, i32
  }
  func.func @transform_5(%arg0: i32) -> (i32, i32) {
    %c0_i32 = arith.constant 0 : i32
    %c0_i32_0 = arith.constant 0 : i32
    %c0_i32_1 = arith.constant 0 : i32
    return %c0_i32, %c0_i32_0 : i32, i32
  }
  func.func @transform_6(%arg0: i32) -> (i32, i32, i32) {
    %c0_i32 = arith.constant 0 : i32
    %c0_i32_0 = arith.constant 0 : i32
    %c0_i32_1 = arith.constant 0 : i32
    return %arg0, %c0_i32, %c0_i32_0 : i32, i32, i32
  }
}

module attributes {stable_mosaic.version = 11 : i64} {
  func.func @_updator_kernel(%arg0: i32, %arg1: memref<1x8x32xf32, #tpu.memory_space<vmem>>, %arg2: memref<1x8x32xf32, #tpu.memory_space<vmem>>, %arg3: memref<32x64xf32, #tpu.memory_space<vmem>>, %arg4: memref<1x64xf32, #tpu.memory_space<vmem>>, %arg5: memref<32x64xf32, #tpu.memory_space<vmem>>, %arg6: memref<1x64xf32, #tpu.memory_space<vmem>>, %arg7: memref<32x64xf32, #tpu.memory_space<vmem>>, %arg8: memref<1x64xf32, #tpu.memory_space<vmem>>, %arg9: memref<2x32xf32, #tpu.memory_space<vmem>>, %arg10: memref<2x32xf32, #tpu.memory_space<vmem>>, %arg11: memref<2x32xf32, #tpu.memory_space<vmem>>, %arg12: memref<2x32xf32, #tpu.memory_space<vmem>>, %arg13: memref<32x32xf32, #tpu.memory_space<vmem>>, %arg14: memref<1x32xf32, #tpu.memory_space<vmem>>, %arg15: memref<2x32xf32, #tpu.memory_space<vmem>>, %arg16: memref<1x8x32xf32, #tpu.memory_space<vmem>>) attributes {dimension_semantics = [#tpu.dimension_semantics<parallel>], iteration_bounds = array<i64: 2>, scalar_prefetch = 0 : i64, scratch_operands = 0 : i64, tpu.core_type = #tpu.core_type<tc>, window_params = [{transform_indices = @transform_0, window_bounds = array<i64: 1, 8, 32>}, {transform_indices = @transform_1, window_bounds = array<i64: 1, 8, 32>}, {pipeline_mode = #tpu.pipeline_mode<synchronous>, transform_indices = @transform_2, window_bounds = array<i64: 32, 64>}, {pipeline_mode = #tpu.pipeline_mode<synchronous>, transform_indices = @transform_3, window_bounds = array<i64: 1, 64>}, {pipeline_mode = #tpu.pipeline_mode<synchronous>, transform_indices = @transform_4, window_bounds = array<i64: 32, 64>}, {pipeline_mode = #tpu.pipeline_mode<synchronous>, transform_indices = @transform_5, window_bounds = array<i64: 1, 64>}, {pipeline_mode = #tpu.pipeline_mode<synchronous>, transform_indices = @transform_6, window_bounds = array<i64: 32, 64>}, {pipeline_mode = #tpu.pipeline_mode<synchronous>, transform_indices = @transform_7, window_bounds = array<i64: 1, 64>}, {pipeline_mode = #tpu.pipeline_mode<synchronous>, transform_indices = @transform_8, window_bounds = array<i64: 2, 32>}, {pipeline_mode = #tpu.pipeline_mode<synchronous>, transform_indices = @transform_9, window_bounds = array<i64: 2, 32>}, {pipeline_mode = #tpu.pipeline_mode<synchronous>, transform_indices = @transform_10, window_bounds = array<i64: 2, 32>}, {pipeline_mode = #tpu.pipeline_mode<synchronous>, transform_indices = @transform_11, window_bounds = array<i64: 2, 32>}, {pipeline_mode = #tpu.pipeline_mode<synchronous>, transform_indices = @transform_12, window_bounds = array<i64: 32, 32>}, {pipeline_mode = #tpu.pipeline_mode<synchronous>, transform_indices = @transform_13, window_bounds = array<i64: 1, 32>}, {pipeline_mode = #tpu.pipeline_mode<synchronous>, transform_indices = @transform_14, window_bounds = array<i64: 2, 32>}, {transform_indices = @transform_15, window_bounds = array<i64: 1, 8, 32>}]} {
    %c0 = arith.constant 0 : index
    %c0_0 = arith.constant 0 : index
    %c0_1 = arith.constant 0 : index
    %0 = vector.load %arg1[%c0, %c0_0, %c0_1] : memref<1x8x32xf32, #tpu.memory_space<vmem>>, vector<1x8x32xf32>
    %1 = vector.shape_cast %0 : vector<1x8x32xf32> to vector<8x32xf32>
    %c0_2 = arith.constant 0 : index
    %c0_3 = arith.constant 0 : index
    %c0_4 = arith.constant 0 : index
    %2 = vector.load %arg2[%c0_2, %c0_3, %c0_4] : memref<1x8x32xf32, #tpu.memory_space<vmem>>, vector<1x8x32xf32>
    %3 = vector.shape_cast %2 : vector<1x8x32xf32> to vector<8x32xf32>
    %c0_5 = arith.constant 0 : index
    %c0_6 = arith.constant 0 : index
    %4 = vector.load %arg3[%c0_5, %c0_6] : memref<32x64xf32, #tpu.memory_space<vmem>>, vector<32x64xf32>
    %cst = arith.constant dense<0.000000e+00> : vector<8x64xf32>
    %5 = tpu.matmul %1, %4, %cst {dimension_numbers = #tpu.dot_dimension_numbers<[1], [0], [0], [1], [0, 0, 1, 1], [], []>} : vector<8x32xf32>, vector<32x64xf32>, vector<8x64xf32> -> vector<8x64xf32>
    %c0_7 = arith.constant 0 : index
    %c0_8 = arith.constant 0 : index
    %6 = vector.load %arg4[%c0_7, %c0_8] : memref<1x64xf32, #tpu.memory_space<vmem>>, vector<1x64xf32>
    %7 = vector.broadcast %6 : vector<1x64xf32> to vector<8x64xf32>
    %8 = arith.addf %5, %7 : vector<8x64xf32>
    %c0_9 = arith.constant 0 : index
    %c0_10 = arith.constant 0 : index
    %9 = vector.load %arg5[%c0_9, %c0_10] : memref<32x64xf32, #tpu.memory_space<vmem>>, vector<32x64xf32>
    %cst_11 = arith.constant dense<0.000000e+00> : vector<8x64xf32>
    %10 = tpu.matmul %3, %9, %cst_11 {dimension_numbers = #tpu.dot_dimension_numbers<[1], [0], [0], [1], [0, 0, 1, 1], [], []>} : vector<8x32xf32>, vector<32x64xf32>, vector<8x64xf32> -> vector<8x64xf32>
    %c0_12 = arith.constant 0 : index
    %c0_13 = arith.constant 0 : index
    %11 = vector.load %arg6[%c0_12, %c0_13] : memref<1x64xf32, #tpu.memory_space<vmem>>, vector<1x64xf32>
    %12 = vector.broadcast %11 : vector<1x64xf32> to vector<8x64xf32>
    %13 = arith.addf %10, %12 : vector<8x64xf32>
    %14 = vector.extract_strided_slice %8 {offsets = [0, 0], sizes = [8, 32], strides = [1, 1]} : vector<8x64xf32> to vector<8x32xf32>
    %15 = vector.extract_strided_slice %8 {offsets = [0, 32], sizes = [8, 32], strides = [1, 1]} : vector<8x64xf32> to vector<8x32xf32>
    %16 = vector.extract_strided_slice %13 {offsets = [0, 0], sizes = [8, 32], strides = [1, 1]} : vector<8x64xf32> to vector<8x32xf32>
    %17 = vector.extract_strided_slice %13 {offsets = [0, 32], sizes = [8, 32], strides = [1, 1]} : vector<8x64xf32> to vector<8x32xf32>
    %18 = arith.mulf %16, %14 : vector<8x32xf32>
    %c0_14 = arith.constant 0 : index
    %c0_15 = arith.constant 0 : index
    %19 = vector.load %arg7[%c0_14, %c0_15] : memref<32x64xf32, #tpu.memory_space<vmem>>, vector<32x64xf32>
    %cst_16 = arith.constant dense<0.000000e+00> : vector<8x64xf32>
    %20 = tpu.matmul %18, %19, %cst_16 {dimension_numbers = #tpu.dot_dimension_numbers<[1], [0], [0], [1], [0, 0, 1, 1], [], []>} : vector<8x32xf32>, vector<32x64xf32>, vector<8x64xf32> -> vector<8x64xf32>
    %c0_17 = arith.constant 0 : index
    %c0_18 = arith.constant 0 : index
    %21 = vector.load %arg8[%c0_17, %c0_18] : memref<1x64xf32, #tpu.memory_space<vmem>>, vector<1x64xf32>
    %22 = vector.broadcast %21 : vector<1x64xf32> to vector<8x64xf32>
    %23 = arith.addf %20, %22 : vector<8x64xf32>
    %24 = vector.extract_strided_slice %23 {offsets = [0, 0], sizes = [8, 32], strides = [1, 1]} : vector<8x64xf32> to vector<8x32xf32>
    %c0_19 = arith.constant 0 : index
    %c0_20 = arith.constant 0 : index
    %25 = vector.load %arg9[%c0_19, %c0_20] : memref<2x32xf32, #tpu.memory_space<vmem>>, vector<2x32xf32>
    %cst_21 = arith.constant dense<0.000000e+00> : vector<8xf32>
    %26 = vector.multi_reduction <add>, %24, %cst_21 [1] : vector<8x32xf32> to vector<8xf32>
    %27 = vector.shape_cast %26 : vector<8xf32> to vector<8x1xf32>
    %cst_22 = arith.constant 3.200000e+01 : f32
    %28 = vector.broadcast %cst_22 : f32 to vector<8x1xf32>
    %29 = arith.divf %27, %28 : vector<8x1xf32>
    %30 = vector.broadcast %29 : vector<8x1xf32> to vector<8x32xf32>
    %31 = arith.subf %24, %30 : vector<8x32xf32>
    %32 = arith.mulf %31, %31 : vector<8x32xf32>
    %cst_23 = arith.constant dense<0.000000e+00> : vector<8xf32>
    %33 = vector.multi_reduction <add>, %32, %cst_23 [1] : vector<8x32xf32> to vector<8xf32>
    %34 = vector.shape_cast %33 : vector<8xf32> to vector<8x1xf32>
    %cst_24 = arith.constant 3.200000e+01 : f32
    %35 = vector.broadcast %cst_24 : f32 to vector<8x1xf32>
    %36 = arith.divf %34, %35 : vector<8x1xf32>
    %37 = vector.broadcast %29 : vector<8x1xf32> to vector<8x32xf32>
    %38 = arith.subf %24, %37 : vector<8x32xf32>
    %cst_25 = arith.constant 9.99999974E-6 : f32
    %39 = vector.broadcast %cst_25 : f32 to vector<8x1xf32>
    %40 = arith.addf %36, %39 : vector<8x1xf32>
    %41 = math.rsqrt %40 : vector<8x1xf32>
    %42 = vector.broadcast %41 : vector<8x1xf32> to vector<8x32xf32>
    %43 = arith.mulf %38, %42 : vector<8x32xf32>
    %44 = vector.extract_strided_slice %25 {offsets = [0, 0], sizes = [1, 32], strides = [1, 1]} : vector<2x32xf32> to vector<1x32xf32>
    %45 = vector.broadcast %44 : vector<1x32xf32> to vector<8x32xf32>
    %46 = arith.mulf %43, %45 : vector<8x32xf32>
    %47 = vector.extract_strided_slice %25 {offsets = [1, 0], sizes = [1, 32], strides = [1, 1]} : vector<2x32xf32> to vector<1x32xf32>
    %48 = vector.broadcast %47 : vector<1x32xf32> to vector<8x32xf32>
    %49 = arith.addf %46, %48 : vector<8x32xf32>
    %50 = arith.negf %49 : vector<8x32xf32>
    %51 = math.exp %50 : vector<8x32xf32>
    %cst_26 = arith.constant 1.000000e+00 : f32
    %52 = vector.broadcast %cst_26 : f32 to vector<8x32xf32>
    %53 = arith.addf %52, %51 : vector<8x32xf32>
    %54 = arith.divf %52, %53 : vector<8x32xf32>
    %55 = vector.extract_strided_slice %23 {offsets = [0, 32], sizes = [8, 32], strides = [1, 1]} : vector<8x64xf32> to vector<8x32xf32>
    %c0_27 = arith.constant 0 : index
    %c0_28 = arith.constant 0 : index
    %56 = vector.load %arg10[%c0_27, %c0_28] : memref<2x32xf32, #tpu.memory_space<vmem>>, vector<2x32xf32>
    %cst_29 = arith.constant dense<0.000000e+00> : vector<8xf32>
    %57 = vector.multi_reduction <add>, %55, %cst_29 [1] : vector<8x32xf32> to vector<8xf32>
    %58 = vector.shape_cast %57 : vector<8xf32> to vector<8x1xf32>
    %cst_30 = arith.constant 3.200000e+01 : f32
    %59 = vector.broadcast %cst_30 : f32 to vector<8x1xf32>
    %60 = arith.divf %58, %59 : vector<8x1xf32>
    %61 = vector.broadcast %60 : vector<8x1xf32> to vector<8x32xf32>
    %62 = arith.subf %55, %61 : vector<8x32xf32>
    %63 = arith.mulf %62, %62 : vector<8x32xf32>
    %cst_31 = arith.constant dense<0.000000e+00> : vector<8xf32>
    %64 = vector.multi_reduction <add>, %63, %cst_31 [1] : vector<8x32xf32> to vector<8xf32>
    %65 = vector.shape_cast %64 : vector<8xf32> to vector<8x1xf32>
    %cst_32 = arith.constant 3.200000e+01 : f32
    %66 = vector.broadcast %cst_32 : f32 to vector<8x1xf32>
    %67 = arith.divf %65, %66 : vector<8x1xf32>
    %68 = vector.broadcast %60 : vector<8x1xf32> to vector<8x32xf32>
    %69 = arith.subf %55, %68 : vector<8x32xf32>
    %cst_33 = arith.constant 9.99999974E-6 : f32
    %70 = vector.broadcast %cst_33 : f32 to vector<8x1xf32>
    %71 = arith.addf %67, %70 : vector<8x1xf32>
    %72 = math.rsqrt %71 : vector<8x1xf32>
    %73 = vector.broadcast %72 : vector<8x1xf32> to vector<8x32xf32>
    %74 = arith.mulf %69, %73 : vector<8x32xf32>
    %75 = vector.extract_strided_slice %56 {offsets = [0, 0], sizes = [1, 32], strides = [1, 1]} : vector<2x32xf32> to vector<1x32xf32>
    %76 = vector.broadcast %75 : vector<1x32xf32> to vector<8x32xf32>
    %77 = arith.mulf %74, %76 : vector<8x32xf32>
    %78 = vector.extract_strided_slice %56 {offsets = [1, 0], sizes = [1, 32], strides = [1, 1]} : vector<2x32xf32> to vector<1x32xf32>
    %79 = vector.broadcast %78 : vector<1x32xf32> to vector<8x32xf32>
    %80 = arith.addf %77, %79 : vector<8x32xf32>
    %81 = arith.negf %80 : vector<8x32xf32>
    %82 = math.exp %81 : vector<8x32xf32>
    %cst_34 = arith.constant 1.000000e+00 : f32
    %83 = vector.broadcast %cst_34 : f32 to vector<8x32xf32>
    %84 = arith.addf %83, %82 : vector<8x32xf32>
    %85 = arith.divf %83, %84 : vector<8x32xf32>
    %c0_35 = arith.constant 0 : index
    %c0_36 = arith.constant 0 : index
    %86 = vector.load %arg11[%c0_35, %c0_36] : memref<2x32xf32, #tpu.memory_space<vmem>>, vector<2x32xf32>
    %cst_37 = arith.constant dense<0.000000e+00> : vector<8xf32>
    %87 = vector.multi_reduction <add>, %15, %cst_37 [1] : vector<8x32xf32> to vector<8xf32>
    %88 = vector.shape_cast %87 : vector<8xf32> to vector<8x1xf32>
    %cst_38 = arith.constant 3.200000e+01 : f32
    %89 = vector.broadcast %cst_38 : f32 to vector<8x1xf32>
    %90 = arith.divf %88, %89 : vector<8x1xf32>
    %91 = vector.broadcast %90 : vector<8x1xf32> to vector<8x32xf32>
    %92 = arith.subf %15, %91 : vector<8x32xf32>
    %93 = arith.mulf %92, %92 : vector<8x32xf32>
    %cst_39 = arith.constant dense<0.000000e+00> : vector<8xf32>
    %94 = vector.multi_reduction <add>, %93, %cst_39 [1] : vector<8x32xf32> to vector<8xf32>
    %95 = vector.shape_cast %94 : vector<8xf32> to vector<8x1xf32>
    %cst_40 = arith.constant 3.200000e+01 : f32
    %96 = vector.broadcast %cst_40 : f32 to vector<8x1xf32>
    %97 = arith.divf %95, %96 : vector<8x1xf32>
    %98 = vector.broadcast %90 : vector<8x1xf32> to vector<8x32xf32>
    %99 = arith.subf %15, %98 : vector<8x32xf32>
    %cst_41 = arith.constant 9.99999974E-6 : f32
    %100 = vector.broadcast %cst_41 : f32 to vector<8x1xf32>
    %101 = arith.addf %97, %100 : vector<8x1xf32>
    %102 = math.rsqrt %101 : vector<8x1xf32>
    %103 = vector.broadcast %102 : vector<8x1xf32> to vector<8x32xf32>
    %104 = arith.mulf %99, %103 : vector<8x32xf32>
    %105 = vector.extract_strided_slice %86 {offsets = [0, 0], sizes = [1, 32], strides = [1, 1]} : vector<2x32xf32> to vector<1x32xf32>
    %106 = vector.broadcast %105 : vector<1x32xf32> to vector<8x32xf32>
    %107 = arith.mulf %104, %106 : vector<8x32xf32>
    %108 = vector.extract_strided_slice %86 {offsets = [1, 0], sizes = [1, 32], strides = [1, 1]} : vector<2x32xf32> to vector<1x32xf32>
    %109 = vector.broadcast %108 : vector<1x32xf32> to vector<8x32xf32>
    %110 = arith.addf %107, %109 : vector<8x32xf32>
    %c0_42 = arith.constant 0 : index
    %c0_43 = arith.constant 0 : index
    %111 = vector.load %arg12[%c0_42, %c0_43] : memref<2x32xf32, #tpu.memory_space<vmem>>, vector<2x32xf32>
    %cst_44 = arith.constant dense<0.000000e+00> : vector<8xf32>
    %112 = vector.multi_reduction <add>, %17, %cst_44 [1] : vector<8x32xf32> to vector<8xf32>
    %113 = vector.shape_cast %112 : vector<8xf32> to vector<8x1xf32>
    %cst_45 = arith.constant 3.200000e+01 : f32
    %114 = vector.broadcast %cst_45 : f32 to vector<8x1xf32>
    %115 = arith.divf %113, %114 : vector<8x1xf32>
    %116 = vector.broadcast %115 : vector<8x1xf32> to vector<8x32xf32>
    %117 = arith.subf %17, %116 : vector<8x32xf32>
    %118 = arith.mulf %117, %117 : vector<8x32xf32>
    %cst_46 = arith.constant dense<0.000000e+00> : vector<8xf32>
    %119 = vector.multi_reduction <add>, %118, %cst_46 [1] : vector<8x32xf32> to vector<8xf32>
    %120 = vector.shape_cast %119 : vector<8xf32> to vector<8x1xf32>
    %cst_47 = arith.constant 3.200000e+01 : f32
    %121 = vector.broadcast %cst_47 : f32 to vector<8x1xf32>
    %122 = arith.divf %120, %121 : vector<8x1xf32>
    %123 = vector.broadcast %115 : vector<8x1xf32> to vector<8x32xf32>
    %124 = arith.subf %17, %123 : vector<8x32xf32>
    %cst_48 = arith.constant 9.99999974E-6 : f32
    %125 = vector.broadcast %cst_48 : f32 to vector<8x1xf32>
    %126 = arith.addf %122, %125 : vector<8x1xf32>
    %127 = math.rsqrt %126 : vector<8x1xf32>
    %128 = vector.broadcast %127 : vector<8x1xf32> to vector<8x32xf32>
    %129 = arith.mulf %124, %128 : vector<8x32xf32>
    %130 = vector.extract_strided_slice %111 {offsets = [0, 0], sizes = [1, 32], strides = [1, 1]} : vector<2x32xf32> to vector<1x32xf32>
    %131 = vector.broadcast %130 : vector<1x32xf32> to vector<8x32xf32>
    %132 = arith.mulf %129, %131 : vector<8x32xf32>
    %133 = vector.extract_strided_slice %111 {offsets = [1, 0], sizes = [1, 32], strides = [1, 1]} : vector<2x32xf32> to vector<1x32xf32>
    %134 = vector.broadcast %133 : vector<1x32xf32> to vector<8x32xf32>
    %135 = arith.addf %132, %134 : vector<8x32xf32>
    %136 = arith.mulf %85, %110 : vector<8x32xf32>
    %137 = arith.mulf %54, %135 : vector<8x32xf32>
    %138 = arith.addf %136, %137 : vector<8x32xf32>
    %c0_49 = arith.constant 0 : index
    %c0_50 = arith.constant 0 : index
    %139 = vector.load %arg13[%c0_49, %c0_50] : memref<32x32xf32, #tpu.memory_space<vmem>>, vector<32x32xf32>
    %cst_51 = arith.constant dense<0.000000e+00> : vector<8x32xf32>
    %140 = tpu.matmul %138, %139, %cst_51 {dimension_numbers = #tpu.dot_dimension_numbers<[1], [0], [0], [1], [0, 0, 1, 1], [], []>} : vector<8x32xf32>, vector<32x32xf32>, vector<8x32xf32> -> vector<8x32xf32>
    %c0_52 = arith.constant 0 : index
    %c0_53 = arith.constant 0 : index
    %141 = vector.load %arg14[%c0_52, %c0_53] : memref<1x32xf32, #tpu.memory_space<vmem>>, vector<1x32xf32>
    %142 = vector.broadcast %141 : vector<1x32xf32> to vector<8x32xf32>
    %143 = arith.addf %140, %142 : vector<8x32xf32>
    %c0_54 = arith.constant 0 : index
    %c0_55 = arith.constant 0 : index
    %144 = vector.load %arg15[%c0_54, %c0_55] : memref<2x32xf32, #tpu.memory_space<vmem>>, vector<2x32xf32>
    %cst_56 = arith.constant dense<0.000000e+00> : vector<8xf32>
    %145 = vector.multi_reduction <add>, %143, %cst_56 [1] : vector<8x32xf32> to vector<8xf32>
    %146 = vector.shape_cast %145 : vector<8xf32> to vector<8x1xf32>
    %cst_57 = arith.constant 3.200000e+01 : f32
    %147 = vector.broadcast %cst_57 : f32 to vector<8x1xf32>
    %148 = arith.divf %146, %147 : vector<8x1xf32>
    %149 = vector.broadcast %148 : vector<8x1xf32> to vector<8x32xf32>
    %150 = arith.subf %143, %149 : vector<8x32xf32>
    %151 = arith.mulf %150, %150 : vector<8x32xf32>
    %cst_58 = arith.constant dense<0.000000e+00> : vector<8xf32>
    %152 = vector.multi_reduction <add>, %151, %cst_58 [1] : vector<8x32xf32> to vector<8xf32>
    %153 = vector.shape_cast %152 : vector<8xf32> to vector<8x1xf32>
    %cst_59 = arith.constant 3.200000e+01 : f32
    %154 = vector.broadcast %cst_59 : f32 to vector<8x1xf32>
    %155 = arith.divf %153, %154 : vector<8x1xf32>
    %156 = vector.broadcast %148 : vector<8x1xf32> to vector<8x32xf32>
    %157 = arith.subf %143, %156 : vector<8x32xf32>
    %cst_60 = arith.constant 9.99999974E-6 : f32
    %158 = vector.broadcast %cst_60 : f32 to vector<8x1xf32>
    %159 = arith.addf %155, %158 : vector<8x1xf32>
    %160 = math.rsqrt %159 : vector<8x1xf32>
    %161 = vector.broadcast %160 : vector<8x1xf32> to vector<8x32xf32>
    %162 = arith.mulf %157, %161 : vector<8x32xf32>
    %163 = vector.extract_strided_slice %144 {offsets = [0, 0], sizes = [1, 32], strides = [1, 1]} : vector<2x32xf32> to vector<1x32xf32>
    %164 = vector.broadcast %163 : vector<1x32xf32> to vector<8x32xf32>
    %165 = arith.mulf %162, %164 : vector<8x32xf32>
    %166 = vector.extract_strided_slice %144 {offsets = [1, 0], sizes = [1, 32], strides = [1, 1]} : vector<2x32xf32> to vector<1x32xf32>
    %167 = vector.broadcast %166 : vector<1x32xf32> to vector<8x32xf32>
    %168 = arith.addf %165, %167 : vector<8x32xf32>
    %cst_61 = arith.constant 0.000000e+00 : f32
    %169 = vector.broadcast %cst_61 : f32 to vector<8x32xf32>
    %170 = arith.maximumf %168, %169 : vector<8x32xf32>
    %c0_62 = arith.constant 0 : index
    %c0_63 = arith.constant 0 : index
    %c0_64 = arith.constant 0 : index
    %171 = vector.load %arg16[%c0_62, %c0_63, %c0_64] : memref<1x8x32xf32, #tpu.memory_space<vmem>>, vector<1x8x32xf32>
    %172 = vector.shape_cast %171 : vector<1x8x32xf32> to vector<8x32xf32>
    %173 = vector.shape_cast %170 : vector<8x32xf32> to vector<1x8x32xf32>
    tpu.vector_store %arg16[%c0_62, %c0_63, %c0_64], %173 {strides = array<i32>} : memref<1x8x32xf32, #tpu.memory_space<vmem>>, vector<1x8x32xf32>,
    return
  }
  func.func @transform_0(%arg0: i32) -> (i32, i32, i32) {
    %c0_i32 = arith.constant 0 : i32
    %c0_i32_0 = arith.constant 0 : i32
    %c0_i32_1 = arith.constant 0 : i32
    return %arg0, %c0_i32, %c0_i32_0 : i32, i32, i32
  }
  func.func @transform_1(%arg0: i32) -> (i32, i32, i32) {
    %c0_i32 = arith.constant 0 : i32
    %c0_i32_0 = arith.constant 0 : i32
    %c0_i32_1 = arith.constant 0 : i32
    return %arg0, %c0_i32, %c0_i32_0 : i32, i32, i32
  }
  func.func @transform_2(%arg0: i32) -> (i32, i32) {
    %c0_i32 = arith.constant 0 : i32
    %c0_i32_0 = arith.constant 0 : i32
    %c0_i32_1 = arith.constant 0 : i32
    return %c0_i32, %c0_i32_0 : i32, i32
  }
  func.func @transform_3(%arg0: i32) -> (i32, i32) {
    %c0_i32 = arith.constant 0 : i32
    %c0_i32_0 = arith.constant 0 : i32
    %c0_i32_1 = arith.constant 0 : i32
    return %c0_i32, %c0_i32_0 : i32, i32
  }
  func.func @transform_4(%arg0: i32) -> (i32, i32) {
    %c0_i32 = arith.constant 0 : i32
    %c0_i32_0 = arith.constant 0 : i32
    %c0_i32_1 = arith.constant 0 : i32
    return %c0_i32, %c0_i32_0 : i32, i32
  }
  func.func @transform_5(%arg0: i32) -> (i32, i32) {
    %c0_i32 = arith.constant 0 : i32
    %c0_i32_0 = arith.constant 0 : i32
    %c0_i32_1 = arith.constant 0 : i32
    return %c0_i32, %c0_i32_0 : i32, i32
  }
  func.func @transform_6(%arg0: i32) -> (i32, i32) {
    %c0_i32 = arith.constant 0 : i32
    %c0_i32_0 = arith.constant 0 : i32
    %c0_i32_1 = arith.constant 0 : i32
    return %c0_i32, %c0_i32_0 : i32, i32
  }
  func.func @transform_7(%arg0: i32) -> (i32, i32) {
    %c0_i32 = arith.constant 0 : i32
    %c0_i32_0 = arith.constant 0 : i32
    %c0_i32_1 = arith.constant 0 : i32
    return %c0_i32, %c0_i32_0 : i32, i32
  }
  func.func @transform_8(%arg0: i32) -> (i32, i32) {
    %c0_i32 = arith.constant 0 : i32
    %c0_i32_0 = arith.constant 0 : i32
    %c0_i32_1 = arith.constant 0 : i32
    return %c0_i32, %c0_i32_0 : i32, i32
  }
  func.func @transform_9(%arg0: i32) -> (i32, i32) {
    %c0_i32 = arith.constant 0 : i32
    %c0_i32_0 = arith.constant 0 : i32
    %c0_i32_1 = arith.constant 0 : i32
    return %c0_i32, %c0_i32_0 : i32, i32
  }
  func.func @transform_10(%arg0: i32) -> (i32, i32) {
    %c0_i32 = arith.constant 0 : i32
    %c0_i32_0 = arith.constant 0 : i32
    %c0_i32_1 = arith.constant 0 : i32
    return %c0_i32, %c0_i32_0 : i32, i32
  }
  func.func @transform_11(%arg0: i32) -> (i32, i32) {
    %c0_i32 = arith.constant 0 : i32
    %c0_i32_0 = arith.constant 0 : i32
    %c0_i32_1 = arith.constant 0 : i32
    return %c0_i32, %c0_i32_0 : i32, i32
  }
  func.func @transform_12(%arg0: i32) -> (i32, i32) {
    %c0_i32 = arith.constant 0 : i32
    %c0_i32_0 = arith.constant 0 : i32
    %c0_i32_1 = arith.constant 0 : i32
    return %c0_i32, %c0_i32_0 : i32, i32
  }
  func.func @transform_13(%arg0: i32) -> (i32, i32) {
    %c0_i32 = arith.constant 0 : i32
    %c0_i32_0 = arith.constant 0 : i32
    %c0_i32_1 = arith.constant 0 : i32
    return %c0_i32, %c0_i32_0 : i32, i32
  }
  func.func @transform_14(%arg0: i32) -> (i32, i32) {
    %c0_i32 = arith.constant 0 : i32
    %c0_i32_0 = arith.constant 0 : i32
    %c0_i32_1 = arith.constant 0 : i32
    return %c0_i32, %c0_i32_0 : i32, i32
  }
  func.func @transform_15(%arg0: i32) -> (i32, i32, i32) {
    %c0_i32 = arith.constant 0 : i32
    %c0_i32_0 = arith.constant 0 : i32
    %c0_i32_1 = arith.constant 0 : i32
    return %arg0, %c0_i32, %c0_i32_0 : i32, i32, i32
  }
}

module attributes {stable_mosaic.version = 11 : i64} {
  func.func @_mask_conv_kernel(%arg0: i32, %arg1: i32, %arg2: memref<1x8x32xf32, #tpu.memory_space<vmem>>, %arg3: memref<1x32x256xf32, #tpu.memory_space<vmem>>, %arg4: memref<1x8x256xf32, #tpu.memory_space<vmem>>) attributes {dimension_semantics = [#tpu.dimension_semantics<parallel>, #tpu.dimension_semantics<parallel>], iteration_bounds = array<i64: 2, 1>, scalar_prefetch = 0 : i64, scratch_operands = 0 : i64, tpu.core_type = #tpu.core_type<tc>, window_params = [{transform_indices = @transform_0, window_bounds = array<i64: 1, 8, 32>}, {transform_indices = @transform_1, window_bounds = array<i64: 1, 32, 256>}, {transform_indices = @transform_2, window_bounds = array<i64: 1, 8, 256>}]} {
    %c0 = arith.constant 0 : index
    %c0_0 = arith.constant 0 : index
    %c0_1 = arith.constant 0 : index
    %0 = vector.load %arg2[%c0, %c0_0, %c0_1] : memref<1x8x32xf32, #tpu.memory_space<vmem>>, vector<1x8x32xf32>
    %1 = vector.shape_cast %0 : vector<1x8x32xf32> to vector<8x32xf32>
    %c0_2 = arith.constant 0 : index
    %c0_3 = arith.constant 0 : index
    %c0_4 = arith.constant 0 : index
    %2 = vector.load %arg3[%c0_2, %c0_3, %c0_4] : memref<1x32x256xf32, #tpu.memory_space<vmem>>, vector<1x32x256xf32>
    %3 = vector.shape_cast %2 : vector<1x32x256xf32> to vector<32x256xf32>
    %cst = arith.constant dense<0.000000e+00> : vector<8x256xf32>
    %4 = tpu.matmul %1, %3, %cst {dimension_numbers = #tpu.dot_dimension_numbers<[1], [0], [0], [1], [0, 0, 1, 1], [], []>} : vector<8x32xf32>, vector<32x256xf32>, vector<8x256xf32> -> vector<8x256xf32>
    %c0_5 = arith.constant 0 : index
    %c0_6 = arith.constant 0 : index
    %c0_7 = arith.constant 0 : index
    %5 = vector.load %arg4[%c0_5, %c0_6, %c0_7] : memref<1x8x256xf32, #tpu.memory_space<vmem>>, vector<1x8x256xf32>
    %6 = vector.shape_cast %5 : vector<1x8x256xf32> to vector<8x256xf32>
    %7 = vector.shape_cast %4 : vector<8x256xf32> to vector<1x8x256xf32>
    tpu.vector_store %arg4[%c0_5, %c0_6, %c0_7], %7 {strides = array<i32>} : memref<1x8x256xf32, #tpu.memory_space<vmem>>, vector<1x8x256xf32>,
    return
  }
  func.func @transform_0(%arg0: i32, %arg1: i32) -> (i32, i32, i32) {
    %c0_i32 = arith.constant 0 : i32
    %c0_i32_0 = arith.constant 0 : i32
    %c0_i32_1 = arith.constant 0 : i32
    return %arg0, %c0_i32, %c0_i32_0 : i32, i32, i32
  }
  func.func @transform_1(%arg0: i32, %arg1: i32) -> (i32, i32, i32) {
    %c0_i32 = arith.constant 0 : i32
    %c0_i32_0 = arith.constant 0 : i32
    return %arg0, %c0_i32, %arg1 : i32, i32, i32
  }
  func.func @transform_2(%arg0: i32, %arg1: i32) -> (i32, i32, i32) {
    %c0_i32 = arith.constant 0 : i32
    %c0_i32_0 = arith.constant 0 : i32
    return %arg0, %c0_i32, %arg1 : i32, i32, i32
  }
}

module attributes {stable_mosaic.version = 11 : i64} {
  func.func @_post_kernel(%arg0: i32, %arg1: memref<1x8x32xf32, #tpu.memory_space<vmem>>, %arg2: memref<32x64xf32, #tpu.memory_space<vmem>>, %arg3: memref<1x64xf32, #tpu.memory_space<vmem>>, %arg4: memref<64x32xf32, #tpu.memory_space<vmem>>, %arg5: memref<1x32xf32, #tpu.memory_space<vmem>>, %arg6: memref<2x32xf32, #tpu.memory_space<vmem>>, %arg7: memref<1x32x32xf32, #tpu.memory_space<vmem>>, %arg8: memref<1x2x32xf32, #tpu.memory_space<vmem>>, %arg9: memref<32x5xf32, #tpu.memory_space<vmem>>, %arg10: memref<1x5xf32, #tpu.memory_space<vmem>>, %arg11: memref<1x32x32xf32, #tpu.memory_space<vmem>>, %arg12: memref<1x2x32xf32, #tpu.memory_space<vmem>>, %arg13: memref<32x32xf32, #tpu.memory_space<vmem>>, %arg14: memref<1x32xf32, #tpu.memory_space<vmem>>, %arg15: memref<1x8x32xf32, #tpu.memory_space<vmem>>, %arg16: memref<1x8x5xf32, #tpu.memory_space<vmem>>, %arg17: memref<1x8x32xf32, #tpu.memory_space<vmem>>) attributes {dimension_semantics = [#tpu.dimension_semantics<parallel>], iteration_bounds = array<i64: 2>, scalar_prefetch = 0 : i64, scratch_operands = 0 : i64, tpu.core_type = #tpu.core_type<tc>, window_params = [{transform_indices = @transform_0, window_bounds = array<i64: 1, 8, 32>}, {pipeline_mode = #tpu.pipeline_mode<synchronous>, transform_indices = @transform_1, window_bounds = array<i64: 32, 64>}, {pipeline_mode = #tpu.pipeline_mode<synchronous>, transform_indices = @transform_2, window_bounds = array<i64: 1, 64>}, {pipeline_mode = #tpu.pipeline_mode<synchronous>, transform_indices = @transform_3, window_bounds = array<i64: 64, 32>}, {pipeline_mode = #tpu.pipeline_mode<synchronous>, transform_indices = @transform_4, window_bounds = array<i64: 1, 32>}, {pipeline_mode = #tpu.pipeline_mode<synchronous>, transform_indices = @transform_5, window_bounds = array<i64: 2, 32>}, {pipeline_mode = #tpu.pipeline_mode<synchronous>, transform_indices = @transform_6, window_bounds = array<i64: 1, 32, 32>}, {pipeline_mode = #tpu.pipeline_mode<synchronous>, transform_indices = @transform_7, window_bounds = array<i64: 1, 2, 32>}, {pipeline_mode = #tpu.pipeline_mode<synchronous>, transform_indices = @transform_8, window_bounds = array<i64: 32, 5>}, {pipeline_mode = #tpu.pipeline_mode<synchronous>, transform_indices = @transform_9, window_bounds = array<i64: 1, 5>}, {pipeline_mode = #tpu.pipeline_mode<synchronous>, transform_indices = @transform_10, window_bounds = array<i64: 1, 32, 32>}, {pipeline_mode = #tpu.pipeline_mode<synchronous>, transform_indices = @transform_11, window_bounds = array<i64: 1, 2, 32>}, {pipeline_mode = #tpu.pipeline_mode<synchronous>, transform_indices = @transform_12, window_bounds = array<i64: 32, 32>}, {pipeline_mode = #tpu.pipeline_mode<synchronous>, transform_indices = @transform_13, window_bounds = array<i64: 1, 32>}, {transform_indices = @transform_14, window_bounds = array<i64: 1, 8, 32>}, {transform_indices = @transform_15, window_bounds = array<i64: 1, 8, 5>}, {transform_indices = @transform_16, window_bounds = array<i64: 1, 8, 32>}]} {
    %c0 = arith.constant 0 : index
    %c0_0 = arith.constant 0 : index
    %c0_1 = arith.constant 0 : index
    %0 = vector.load %arg1[%c0, %c0_0, %c0_1] : memref<1x8x32xf32, #tpu.memory_space<vmem>>, vector<1x8x32xf32>
    %1 = vector.shape_cast %0 : vector<1x8x32xf32> to vector<8x32xf32>
    %c0_2 = arith.constant 0 : index
    %c0_3 = arith.constant 0 : index
    %2 = vector.load %arg2[%c0_2, %c0_3] : memref<32x64xf32, #tpu.memory_space<vmem>>, vector<32x64xf32>
    %cst = arith.constant dense<0.000000e+00> : vector<8x64xf32>
    %3 = tpu.matmul %1, %2, %cst {dimension_numbers = #tpu.dot_dimension_numbers<[1], [0], [0], [1], [0, 0, 1, 1], [], []>} : vector<8x32xf32>, vector<32x64xf32>, vector<8x64xf32> -> vector<8x64xf32>
    %c0_4 = arith.constant 0 : index
    %c0_5 = arith.constant 0 : index
    %4 = vector.load %arg3[%c0_4, %c0_5] : memref<1x64xf32, #tpu.memory_space<vmem>>, vector<1x64xf32>
    %5 = vector.broadcast %4 : vector<1x64xf32> to vector<8x64xf32>
    %6 = arith.addf %3, %5 : vector<8x64xf32>
    %cst_6 = arith.constant 0.000000e+00 : f32
    %7 = vector.broadcast %cst_6 : f32 to vector<8x64xf32>
    %8 = arith.maximumf %6, %7 : vector<8x64xf32>
    %c0_7 = arith.constant 0 : index
    %c0_8 = arith.constant 0 : index
    %9 = vector.load %arg4[%c0_7, %c0_8] : memref<64x32xf32, #tpu.memory_space<vmem>>, vector<64x32xf32>
    %cst_9 = arith.constant dense<0.000000e+00> : vector<8x32xf32>
    %10 = tpu.matmul %8, %9, %cst_9 {dimension_numbers = #tpu.dot_dimension_numbers<[1], [0], [0], [1], [0, 0, 1, 1], [], []>} : vector<8x64xf32>, vector<64x32xf32>, vector<8x32xf32> -> vector<8x32xf32>
    %11 = arith.addf %1, %10 : vector<8x32xf32>
    %c0_10 = arith.constant 0 : index
    %c0_11 = arith.constant 0 : index
    %12 = vector.load %arg5[%c0_10, %c0_11] : memref<1x32xf32, #tpu.memory_space<vmem>>, vector<1x32xf32>
    %13 = vector.broadcast %12 : vector<1x32xf32> to vector<8x32xf32>
    %14 = arith.addf %11, %13 : vector<8x32xf32>
    %c0_12 = arith.constant 0 : index
    %c0_13 = arith.constant 0 : index
    %15 = vector.load %arg6[%c0_12, %c0_13] : memref<2x32xf32, #tpu.memory_space<vmem>>, vector<2x32xf32>
    %cst_14 = arith.constant dense<0.000000e+00> : vector<8xf32>
    %16 = vector.multi_reduction <add>, %14, %cst_14 [1] : vector<8x32xf32> to vector<8xf32>
    %17 = vector.shape_cast %16 : vector<8xf32> to vector<8x1xf32>
    %cst_15 = arith.constant 3.200000e+01 : f32
    %18 = vector.broadcast %cst_15 : f32 to vector<8x1xf32>
    %19 = arith.divf %17, %18 : vector<8x1xf32>
    %20 = vector.broadcast %19 : vector<8x1xf32> to vector<8x32xf32>
    %21 = arith.subf %14, %20 : vector<8x32xf32>
    %22 = arith.mulf %21, %21 : vector<8x32xf32>
    %cst_16 = arith.constant dense<0.000000e+00> : vector<8xf32>
    %23 = vector.multi_reduction <add>, %22, %cst_16 [1] : vector<8x32xf32> to vector<8xf32>
    %24 = vector.shape_cast %23 : vector<8xf32> to vector<8x1xf32>
    %cst_17 = arith.constant 3.200000e+01 : f32
    %25 = vector.broadcast %cst_17 : f32 to vector<8x1xf32>
    %26 = arith.divf %24, %25 : vector<8x1xf32>
    %27 = vector.broadcast %19 : vector<8x1xf32> to vector<8x32xf32>
    %28 = arith.subf %14, %27 : vector<8x32xf32>
    %cst_18 = arith.constant 9.99999974E-6 : f32
    %29 = vector.broadcast %cst_18 : f32 to vector<8x1xf32>
    %30 = arith.addf %26, %29 : vector<8x1xf32>
    %31 = math.rsqrt %30 : vector<8x1xf32>
    %32 = vector.broadcast %31 : vector<8x1xf32> to vector<8x32xf32>
    %33 = arith.mulf %28, %32 : vector<8x32xf32>
    %34 = vector.extract_strided_slice %15 {offsets = [0, 0], sizes = [1, 32], strides = [1, 1]} : vector<2x32xf32> to vector<1x32xf32>
    %35 = vector.broadcast %34 : vector<1x32xf32> to vector<8x32xf32>
    %36 = arith.mulf %33, %35 : vector<8x32xf32>
    %37 = vector.extract_strided_slice %15 {offsets = [1, 0], sizes = [1, 32], strides = [1, 1]} : vector<2x32xf32> to vector<1x32xf32>
    %38 = vector.broadcast %37 : vector<1x32xf32> to vector<8x32xf32>
    %39 = arith.addf %36, %38 : vector<8x32xf32>
    %c0_19 = arith.constant 0 : index
    %c0_20 = arith.constant 0 : index
    %c0_21 = arith.constant 0 : index
    %40 = vector.load %arg15[%c0_19, %c0_20, %c0_21] : memref<1x8x32xf32, #tpu.memory_space<vmem>>, vector<1x8x32xf32>
    %41 = vector.shape_cast %40 : vector<1x8x32xf32> to vector<8x32xf32>
    %42 = vector.shape_cast %39 : vector<8x32xf32> to vector<1x8x32xf32>
    tpu.vector_store %arg15[%c0_19, %c0_20, %c0_21], %42 {strides = array<i32>} : memref<1x8x32xf32, #tpu.memory_space<vmem>>, vector<1x8x32xf32>,
    %c0_22 = arith.constant 0 : index
    %c0_23 = arith.constant 0 : index
    %c0_24 = arith.constant 0 : index
    %43 = vector.load %arg7[%c0_22, %c0_23, %c0_24] : memref<1x32x32xf32, #tpu.memory_space<vmem>>, vector<1x32x32xf32>
    %44 = vector.shape_cast %43 : vector<1x32x32xf32> to vector<32x32xf32>
    %cst_25 = arith.constant dense<0.000000e+00> : vector<8x32xf32>
    %45 = tpu.matmul %39, %44, %cst_25 {dimension_numbers = #tpu.dot_dimension_numbers<[1], [0], [0], [1], [0, 0, 1, 1], [], []>} : vector<8x32xf32>, vector<32x32xf32>, vector<8x32xf32> -> vector<8x32xf32>
    %c0_26 = arith.constant 0 : index
    %c0_27 = arith.constant 0 : index
    %c0_28 = arith.constant 0 : index
    %46 = vector.load %arg8[%c0_26, %c0_27, %c0_28] : memref<1x2x32xf32, #tpu.memory_space<vmem>>, vector<1x2x32xf32>
    %47 = vector.shape_cast %46 : vector<1x2x32xf32> to vector<2x32xf32>
    %cst_29 = arith.constant dense<0.000000e+00> : vector<8xf32>
    %48 = vector.multi_reduction <add>, %45, %cst_29 [1] : vector<8x32xf32> to vector<8xf32>
    %49 = vector.shape_cast %48 : vector<8xf32> to vector<8x1xf32>
    %cst_30 = arith.constant 3.200000e+01 : f32
    %50 = vector.broadcast %cst_30 : f32 to vector<8x1xf32>
    %51 = arith.divf %49, %50 : vector<8x1xf32>
    %52 = vector.broadcast %51 : vector<8x1xf32> to vector<8x32xf32>
    %53 = arith.subf %45, %52 : vector<8x32xf32>
    %54 = arith.mulf %53, %53 : vector<8x32xf32>
    %cst_31 = arith.constant dense<0.000000e+00> : vector<8xf32>
    %55 = vector.multi_reduction <add>, %54, %cst_31 [1] : vector<8x32xf32> to vector<8xf32>
    %56 = vector.shape_cast %55 : vector<8xf32> to vector<8x1xf32>
    %cst_32 = arith.constant 3.200000e+01 : f32
    %57 = vector.broadcast %cst_32 : f32 to vector<8x1xf32>
    %58 = arith.divf %56, %57 : vector<8x1xf32>
    %59 = vector.broadcast %51 : vector<8x1xf32> to vector<8x32xf32>
    %60 = arith.subf %45, %59 : vector<8x32xf32>
    %cst_33 = arith.constant 9.99999974E-6 : f32
    %61 = vector.broadcast %cst_33 : f32 to vector<8x1xf32>
    %62 = arith.addf %58, %61 : vector<8x1xf32>
    %63 = math.rsqrt %62 : vector<8x1xf32>
    %64 = vector.broadcast %63 : vector<8x1xf32> to vector<8x32xf32>
    %65 = arith.mulf %60, %64 : vector<8x32xf32>
    %66 = vector.extract_strided_slice %47 {offsets = [0, 0], sizes = [1, 32], strides = [1, 1]} : vector<2x32xf32> to vector<1x32xf32>
    %67 = vector.broadcast %66 : vector<1x32xf32> to vector<8x32xf32>
    %68 = arith.mulf %65, %67 : vector<8x32xf32>
    %69 = vector.extract_strided_slice %47 {offsets = [1, 0], sizes = [1, 32], strides = [1, 1]} : vector<2x32xf32> to vector<1x32xf32>
    %70 = vector.broadcast %69 : vector<1x32xf32> to vector<8x32xf32>
    %71 = arith.addf %68, %70 : vector<8x32xf32>
    %cst_34 = arith.constant 0.000000e+00 : f32
    %72 = vector.broadcast %cst_34 : f32 to vector<8x32xf32>
    %73 = arith.maximumf %71, %72 : vector<8x32xf32>
    %c0_35 = arith.constant 0 : index
    %c0_36 = arith.constant 0 : index
    %74 = vector.load %arg9[%c0_35, %c0_36] : memref<32x5xf32, #tpu.memory_space<vmem>>, vector<32x5xf32>
    %cst_37 = arith.constant dense<0.000000e+00> : vector<8x5xf32>
    %75 = tpu.matmul %73, %74, %cst_37 {dimension_numbers = #tpu.dot_dimension_numbers<[1], [0], [0], [1], [0, 0, 1, 1], [], []>} : vector<8x32xf32>, vector<32x5xf32>, vector<8x5xf32> -> vector<8x5xf32>
    %c0_38 = arith.constant 0 : index
    %c0_39 = arith.constant 0 : index
    %76 = vector.load %arg10[%c0_38, %c0_39] : memref<1x5xf32, #tpu.memory_space<vmem>>, vector<1x5xf32>
    %77 = vector.broadcast %76 : vector<1x5xf32> to vector<8x5xf32>
    %78 = arith.addf %75, %77 : vector<8x5xf32>
    %c0_40 = arith.constant 0 : index
    %c0_41 = arith.constant 0 : index
    %c0_42 = arith.constant 0 : index
    %79 = vector.load %arg16[%c0_40, %c0_41, %c0_42] : memref<1x8x5xf32, #tpu.memory_space<vmem>>, vector<1x8x5xf32>
    %80 = vector.shape_cast %79 : vector<1x8x5xf32> to vector<8x5xf32>
    %81 = vector.shape_cast %78 : vector<8x5xf32> to vector<1x8x5xf32>
    tpu.vector_store %arg16[%c0_40, %c0_41, %c0_42], %81 {strides = array<i32>} : memref<1x8x5xf32, #tpu.memory_space<vmem>>, vector<1x8x5xf32>,
    %c0_43 = arith.constant 0 : index
    %c0_44 = arith.constant 0 : index
    %c0_45 = arith.constant 0 : index
    %82 = vector.load %arg11[%c0_43, %c0_44, %c0_45] : memref<1x32x32xf32, #tpu.memory_space<vmem>>, vector<1x32x32xf32>
    %83 = vector.shape_cast %82 : vector<1x32x32xf32> to vector<32x32xf32>
    %cst_46 = arith.constant dense<0.000000e+00> : vector<8x32xf32>
    %84 = tpu.matmul %39, %83, %cst_46 {dimension_numbers = #tpu.dot_dimension_numbers<[1], [0], [0], [1], [0, 0, 1, 1], [], []>} : vector<8x32xf32>, vector<32x32xf32>, vector<8x32xf32> -> vector<8x32xf32>
    %c0_47 = arith.constant 0 : index
    %c0_48 = arith.constant 0 : index
    %c0_49 = arith.constant 0 : index
    %85 = vector.load %arg12[%c0_47, %c0_48, %c0_49] : memref<1x2x32xf32, #tpu.memory_space<vmem>>, vector<1x2x32xf32>
    %86 = vector.shape_cast %85 : vector<1x2x32xf32> to vector<2x32xf32>
    %cst_50 = arith.constant dense<0.000000e+00> : vector<8xf32>
    %87 = vector.multi_reduction <add>, %84, %cst_50 [1] : vector<8x32xf32> to vector<8xf32>
    %88 = vector.shape_cast %87 : vector<8xf32> to vector<8x1xf32>
    %cst_51 = arith.constant 3.200000e+01 : f32
    %89 = vector.broadcast %cst_51 : f32 to vector<8x1xf32>
    %90 = arith.divf %88, %89 : vector<8x1xf32>
    %91 = vector.broadcast %90 : vector<8x1xf32> to vector<8x32xf32>
    %92 = arith.subf %84, %91 : vector<8x32xf32>
    %93 = arith.mulf %92, %92 : vector<8x32xf32>
    %cst_52 = arith.constant dense<0.000000e+00> : vector<8xf32>
    %94 = vector.multi_reduction <add>, %93, %cst_52 [1] : vector<8x32xf32> to vector<8xf32>
    %95 = vector.shape_cast %94 : vector<8xf32> to vector<8x1xf32>
    %cst_53 = arith.constant 3.200000e+01 : f32
    %96 = vector.broadcast %cst_53 : f32 to vector<8x1xf32>
    %97 = arith.divf %95, %96 : vector<8x1xf32>
    %98 = vector.broadcast %90 : vector<8x1xf32> to vector<8x32xf32>
    %99 = arith.subf %84, %98 : vector<8x32xf32>
    %cst_54 = arith.constant 9.99999974E-6 : f32
    %100 = vector.broadcast %cst_54 : f32 to vector<8x1xf32>
    %101 = arith.addf %97, %100 : vector<8x1xf32>
    %102 = math.rsqrt %101 : vector<8x1xf32>
    %103 = vector.broadcast %102 : vector<8x1xf32> to vector<8x32xf32>
    %104 = arith.mulf %99, %103 : vector<8x32xf32>
    %105 = vector.extract_strided_slice %86 {offsets = [0, 0], sizes = [1, 32], strides = [1, 1]} : vector<2x32xf32> to vector<1x32xf32>
    %106 = vector.broadcast %105 : vector<1x32xf32> to vector<8x32xf32>
    %107 = arith.mulf %104, %106 : vector<8x32xf32>
    %108 = vector.extract_strided_slice %86 {offsets = [1, 0], sizes = [1, 32], strides = [1, 1]} : vector<2x32xf32> to vector<1x32xf32>
    %109 = vector.broadcast %108 : vector<1x32xf32> to vector<8x32xf32>
    %110 = arith.addf %107, %109 : vector<8x32xf32>
    %cst_55 = arith.constant 0.000000e+00 : f32
    %111 = vector.broadcast %cst_55 : f32 to vector<8x32xf32>
    %112 = arith.maximumf %110, %111 : vector<8x32xf32>
    %c0_56 = arith.constant 0 : index
    %c0_57 = arith.constant 0 : index
    %113 = vector.load %arg13[%c0_56, %c0_57] : memref<32x32xf32, #tpu.memory_space<vmem>>, vector<32x32xf32>
    %cst_58 = arith.constant dense<0.000000e+00> : vector<8x32xf32>
    %114 = tpu.matmul %112, %113, %cst_58 {dimension_numbers = #tpu.dot_dimension_numbers<[1], [0], [0], [1], [0, 0, 1, 1], [], []>} : vector<8x32xf32>, vector<32x32xf32>, vector<8x32xf32> -> vector<8x32xf32>
    %c0_59 = arith.constant 0 : index
    %c0_60 = arith.constant 0 : index
    %115 = vector.load %arg14[%c0_59, %c0_60] : memref<1x32xf32, #tpu.memory_space<vmem>>, vector<1x32xf32>
    %116 = vector.broadcast %115 : vector<1x32xf32> to vector<8x32xf32>
    %117 = arith.addf %114, %116 : vector<8x32xf32>
    %c0_61 = arith.constant 0 : index
    %c0_62 = arith.constant 0 : index
    %c0_63 = arith.constant 0 : index
    %118 = vector.load %arg17[%c0_61, %c0_62, %c0_63] : memref<1x8x32xf32, #tpu.memory_space<vmem>>, vector<1x8x32xf32>
    %119 = vector.shape_cast %118 : vector<1x8x32xf32> to vector<8x32xf32>
    %120 = vector.shape_cast %117 : vector<8x32xf32> to vector<1x8x32xf32>
    tpu.vector_store %arg17[%c0_61, %c0_62, %c0_63], %120 {strides = array<i32>} : memref<1x8x32xf32, #tpu.memory_space<vmem>>, vector<1x8x32xf32>,
    return
  }
  func.func @transform_0(%arg0: i32) -> (i32, i32, i32) {
    %c0_i32 = arith.constant 0 : i32
    %c0_i32_0 = arith.constant 0 : i32
    %c0_i32_1 = arith.constant 0 : i32
    return %arg0, %c0_i32, %c0_i32_0 : i32, i32, i32
  }
  func.func @transform_1(%arg0: i32) -> (i32, i32) {
    %c0_i32 = arith.constant 0 : i32
    %c0_i32_0 = arith.constant 0 : i32
    %c0_i32_1 = arith.constant 0 : i32
    return %c0_i32, %c0_i32_0 : i32, i32
  }
  func.func @transform_2(%arg0: i32) -> (i32, i32) {
    %c0_i32 = arith.constant 0 : i32
    %c0_i32_0 = arith.constant 0 : i32
    %c0_i32_1 = arith.constant 0 : i32
    return %c0_i32, %c0_i32_0 : i32, i32
  }
  func.func @transform_3(%arg0: i32) -> (i32, i32) {
    %c0_i32 = arith.constant 0 : i32
    %c0_i32_0 = arith.constant 0 : i32
    %c0_i32_1 = arith.constant 0 : i32
    return %c0_i32, %c0_i32_0 : i32, i32
  }
  func.func @transform_4(%arg0: i32) -> (i32, i32) {
    %c0_i32 = arith.constant 0 : i32
    %c0_i32_0 = arith.constant 0 : i32
    %c0_i32_1 = arith.constant 0 : i32
    return %c0_i32, %c0_i32_0 : i32, i32
  }
  func.func @transform_5(%arg0: i32) -> (i32, i32) {
    %c0_i32 = arith.constant 0 : i32
    %c0_i32_0 = arith.constant 0 : i32
    %c0_i32_1 = arith.constant 0 : i32
    return %c0_i32, %c0_i32_0 : i32, i32
  }
  func.func @transform_6(%arg0: i32) -> (i32, i32, i32) {
    %c0_i32 = arith.constant 0 : i32
    %c0_i32_0 = arith.constant 0 : i32
    %c0_i32_1 = arith.constant 0 : i32
    %c0_i32_2 = arith.constant 0 : i32
    return %c0_i32, %c0_i32_0, %c0_i32_1 : i32, i32, i32
  }
  func.func @transform_7(%arg0: i32) -> (i32, i32, i32) {
    %c0_i32 = arith.constant 0 : i32
    %c0_i32_0 = arith.constant 0 : i32
    %c0_i32_1 = arith.constant 0 : i32
    %c0_i32_2 = arith.constant 0 : i32
    return %c0_i32, %c0_i32_0, %c0_i32_1 : i32, i32, i32
  }
  func.func @transform_8(%arg0: i32) -> (i32, i32) {
    %c0_i32 = arith.constant 0 : i32
    %c0_i32_0 = arith.constant 0 : i32
    %c0_i32_1 = arith.constant 0 : i32
    return %c0_i32, %c0_i32_0 : i32, i32
  }
  func.func @transform_9(%arg0: i32) -> (i32, i32) {
    %c0_i32 = arith.constant 0 : i32
    %c0_i32_0 = arith.constant 0 : i32
    %c0_i32_1 = arith.constant 0 : i32
    return %c0_i32, %c0_i32_0 : i32, i32
  }
  func.func @transform_10(%arg0: i32) -> (i32, i32, i32) {
    %c0_i32 = arith.constant 0 : i32
    %c0_i32_0 = arith.constant 0 : i32
    %c0_i32_1 = arith.constant 0 : i32
    %c0_i32_2 = arith.constant 0 : i32
    return %c0_i32, %c0_i32_0, %c0_i32_1 : i32, i32, i32
  }
  func.func @transform_11(%arg0: i32) -> (i32, i32, i32) {
    %c0_i32 = arith.constant 0 : i32
    %c0_i32_0 = arith.constant 0 : i32
    %c0_i32_1 = arith.constant 0 : i32
    %c0_i32_2 = arith.constant 0 : i32
    return %c0_i32, %c0_i32_0, %c0_i32_1 : i32, i32, i32
  }
  func.func @transform_12(%arg0: i32) -> (i32, i32) {
    %c0_i32 = arith.constant 0 : i32
    %c0_i32_0 = arith.constant 0 : i32
    %c0_i32_1 = arith.constant 0 : i32
    return %c0_i32, %c0_i32_0 : i32, i32
  }
  func.func @transform_13(%arg0: i32) -> (i32, i32) {
    %c0_i32 = arith.constant 0 : i32
    %c0_i32_0 = arith.constant 0 : i32
    %c0_i32_1 = arith.constant 0 : i32
    return %c0_i32, %c0_i32_0 : i32, i32
  }
  func.func @transform_14(%arg0: i32) -> (i32, i32, i32) {
    %c0_i32 = arith.constant 0 : i32
    %c0_i32_0 = arith.constant 0 : i32
    %c0_i32_1 = arith.constant 0 : i32
    return %arg0, %c0_i32, %c0_i32_0 : i32, i32, i32
  }
  func.func @transform_15(%arg0: i32) -> (i32, i32, i32) {
    %c0_i32 = arith.constant 0 : i32
    %c0_i32_0 = arith.constant 0 : i32
    %c0_i32_1 = arith.constant 0 : i32
    return %arg0, %c0_i32, %c0_i32_0 : i32, i32, i32
  }
  func.func @transform_16(%arg0: i32) -> (i32, i32, i32) {
    %c0_i32 = arith.constant 0 : i32
    %c0_i32_0 = arith.constant 0 : i32
    %c0_i32_1 = arith.constant 0 : i32
    return %arg0, %c0_i32, %c0_i32_0 : i32, i32, i32
  }
}

</mosaic_0001>

<llo_original>
// kernel: _lambda_.7
$region0: #{_lambda_.7}
  #allocation0 [shape = 'u32[]', space=smem, size = 0x4, offset = 0x4, fixed_abs, tag = 'smem constant byte address 0x4 - core index']
  #allocation1 [shape = 'u32[144,128]{1,0:T(1,128)}', space=vmem, size = 0x12000, scoped, tag = 'internal scratch']
  %s0 = inlined_call_operand.vmem [shape: f32[2,8,256], index: 0, kind: input, shape index: {}]
  %s1 = inlined_call_operand.vmem [shape: f32[2,256,32], index: 1, kind: input, shape index: {}]
  %s2 = inlined_call_operand.vmem [shape: f32[2,8,32], index: 2, kind: output, shape index: {}]
  %s3 = sld [smem:[#allocation0]]
  $region45: #{_lambda_.7} parent=0
    _
  %s5 = ssub.s32 1, %s3
  %s6 = scalar_select 0, %s5, %s3
  loop: start=0, step=1, limit=4
  $region2: #{_lambda_.7} parent=0 // loop_pre_header
    _
  $region3: #{_lambda_.7} parent=0 // loop_header
    %s8 = sphi 0, %s12
    %p9 = scmp.ge.s32.totalorder %s8, 4
    %s15 = sphi 0, %s27
    %s16 = sphi 0, %s23
    %s17 = sphi 0, %s15
    %s18 = sphi 0, %s16
    %s19 = sphi 0, %s17
    %s20 = sphi 0, %s18
    %s32 = sphi 0, %s34
    %s35 = sphi 0, %s32
    %s36 = sphi 0, %s35
    %s52 = sphi 0, %s36
    %s60 = sphi 0, %s62
    %s63 = sphi 0, %s60
    %s64 = sphi 0, %s63
    %s80 = sphi 0, %s64
    %s86 = sphi 0, %s88
    %s89 = sphi 0, %s86
    %s90 = sphi 0, %s89
    %s106 = sphi 0, %s90
  $region4: #{_lambda_.7} parent=0 // loop_header_branch
    %11 = sbr.rel (%p9) target = $region8
  $region5: #{_lambda_.7} parent=0 // loop_body
    %s13 = ssub.s32 %s8, 1
    %s14 = ssub.s32 %s8, 2
    %s21 = sadd.s32 1, %s16
    %p22 = scmp.ge.s32.totalorder %s21, 1
    %s23 = scalar_select %p22, 0, %s21
    %s24 = sadd.s32 1, %s15
    %s25 = scalar_select %p22, %s24, %s15
    %p26 = scmp.ge.s32.totalorder %s25, 2
    %s27 = scalar_select %p26, 0, %s25
    %s28 = ssub.s32 %s15, %s27
    %s29 = ssub.s32 %s16, %s23
    %s30 = sor.u32 %s28, %s29
    %p31 = scmp.eq.s32.totalorder %s30, 0
    %s33 = sadd.s32 %s32, 1
    %s34 = scalar_select %p31, %s32, %s33
    %p37 = pneg %p31
    %p38 = scmp.eq.s32.totalorder %s8, 1
    %p39 = por %p37, %p38
    %p40 = scmp.ne.s32.totalorder %s32, %s35
    %p41 = scmp.eq.s32.totalorder %s8, 0
    %p42 = por %p40, %p41
    %p43 = scmp.ne.s32.totalorder %s32, %s35
    %p44 = scmp.eq.s32.totalorder %s13, 1
    %p45 = por %p43, %p44
    %p46 = scmp.ne.s32.totalorder %s35, %s36
    %p47 = scmp.eq.s32.totalorder %s13, 0
    %p48 = por %p46, %p47
    %p49 = scmp.ne.s32.totalorder %s35, %s36
    %p50 = scmp.eq.s32.totalorder %s14, 1
    %p51 = por %p49, %p50
    %p53 = scmp.ne.s32.totalorder %s36, %s52
    %p54 = scmp.eq.s32.totalorder %s14, 0
    %p55 = por %p53, %p54
    %s56 = ssub.s32 %s15, %s27
    %s57 = ssub.s32 %s16, %s23
    %s58 = sor.u32 %s56, %s57
    %p59 = scmp.eq.s32.totalorder %s58, 0
    %s61 = sadd.s32 %s60, 1
    %s62 = scalar_select %p59, %s60, %s61
    %p65 = pneg %p59
    %p66 = scmp.eq.s32.totalorder %s8, 1
    %p67 = por %p65, %p66
    %p68 = scmp.ne.s32.totalorder %s60, %s63
    %p69 = scmp.eq.s32.totalorder %s8, 0
    %p70 = por %p68, %p69
    %p71 = scmp.ne.s32.totalorder %s60, %s63
    %p72 = scmp.eq.s32.totalorder %s13, 1
    %p73 = por %p71, %p72
    %p74 = scmp.ne.s32.totalorder %s63, %s64
    %p75 = scmp.eq.s32.totalorder %s13, 0
    %p76 = por %p74, %p75
    %p77 = scmp.ne.s32.totalorder %s63, %s64
    %p78 = scmp.eq.s32.totalorder %s14, 1
    %p79 = por %p77, %p78
    %p81 = scmp.ne.s32.totalorder %s64, %s80
    %p82 = scmp.eq.s32.totalorder %s14, 0
    %p83 = por %p81, %p82
    %s84 = ssub.s32 %s15, %s27
    %p85 = scmp.eq.s32.totalorder %s84, 0
    %s87 = sadd.s32 %s86, 1
    %s88 = scalar_select %p85, %s86, %s87
    %p91 = pneg %p85
    %p92 = scmp.eq.s32.totalorder %s8, 1
    %p93 = por %p91, %p92
    %p94 = scmp.ne.s32.totalorder %s86, %s89
    %p95 = scmp.eq.s32.totalorder %s8, 0
    %p96 = por %p94, %p95
    %p97 = scmp.ne.s32.totalorder %s86, %s89
    %p98 = scmp.eq.s32.totalorder %s13, 1
    %p99 = por %p97, %p98
    %p100 = scmp.ne.s32.totalorder %s89, %s90
    %p101 = scmp.eq.s32.totalorder %s13, 0
    %p102 = por %p100, %p101
    %p103 = scmp.ne.s32.totalorder %s89, %s90
    %p104 = scmp.eq.s32.totalorder %s14, 1
    %p105 = por %p103, %p104
    %p107 = scmp.ne.s32.totalorder %s90, %s106
    %p108 = scmp.eq.s32.totalorder %s14, 0
    %p109 = por %p107, %p108
    %p110 = scmp.le.s32.totalorder 1, %s8
    %p111 = scmp.lt.s32.totalorder %s8, 3
    %p112 = pnand %p110, %p111
    %p113 = pneg %p112
    // Predicated region
    $region9: #{_lambda_.7} parent=5 // pred_check
      _
    $region10: #{_lambda_.7} parent=5 // pred_check_branch
      %115 = sbr.rel (%p112) target = $region12
    $region11: #{_lambda_.7} parent=5 // pred_region
      %s116 = ssub.s32 %s8, 1
    $region12: #{_lambda_.7} parent=5 // pred_fallthru
      _
    %p117 = scmp.lt.s32.totalorder %s8, 2
    // Predicated region
    $region13: #{_lambda_.7} parent=5 // pred_check
      %p118 = pneg %p117
    $region14: #{_lambda_.7} parent=5 // pred_check_branch
      %120 = sbr.rel (%p118) target = $region16
    $region15: #{_lambda_.7} parent=5 // pred_region
      // Predicated region
      $region17: #{_lambda_.7} parent=15 // pred_check
        %p121 = pneg %p42
      $region18: #{_lambda_.7} parent=15 // pred_check_branch
        %123 = sbr.rel (%p121) target = $region20
      $region19: #{_lambda_.7} parent=15 // pred_region
        %s124 = smul.u32 2, %s16
        %p125 = scmp.lt.s32.totalorder %s15, 1
        %s126 = scalar_select %p125, %s15, 1
        %p127 = scmp.lt.s32.totalorder %s124, 1
        %s128 = scalar_select %p127, %s124, 1
        %s129 = smul.addr %s126, 2
        %s130 = sadd.s32 %s128, %s129
        %s131 = smul.addr %s130, 8
        %s132 = scalar_lea.vmem %s0, %s131
        %s133 = smul.u32 2, %s16
      $region20: #{_lambda_.7} parent=15 // pred_fallthru
        _
      // Predicated region
      $region21: #{_lambda_.7} parent=15 // pred_check
        %p134 = pneg %p70
      $region22: #{_lambda_.7} parent=15 // pred_check_branch
        %136 = sbr.rel (%p134) target = $region24
      $region23: #{_lambda_.7} parent=15 // pred_region
        %s137 = smul.u32 32, %s16
        %p138 = scmp.lt.s32.totalorder %s15, 1
        %s139 = scalar_select %p138, %s15, 1
        %p140 = scmp.lt.s32.totalorder %s137, 31
        %s141 = scalar_select %p140, %s137, 31
        %s142 = smul.addr %s139, 32
        %s143 = sadd.s32 %s141, %s142
        %s144 = smul.addr %s143, 8
        %s145 = scalar_lea.vmem %s1, %s144
        %s146 = smul.u32 32, %s16
      $region24: #{_lambda_.7} parent=15 // pred_fallthru
        _
    $region16: #{_lambda_.7} parent=5 // pred_fallthru
      _
    %p147 = scmp.le.s32.totalorder 1, %s8
    %p148 = scmp.lt.s32.totalorder %s8, 3
    %p149 = pnand %p147, %p148
    %p150 = pneg %p149
    // Predicated region
    $region25: #{_lambda_.7} parent=5 // pred_check
      _
    $region26: #{_lambda_.7} parent=5 // pred_check_branch
      %152 = sbr.rel (%p149) target = $region28
    $region27: #{_lambda_.7} parent=5 // pred_region
      %s153 = ssub.s32 %s8, 1
      %s154 = smul.u32 2, %s18
      %p155 = scmp.lt.s32.totalorder %s17, 1
      %s156 = scalar_select %p155, %s17, 1
      %p157 = scmp.lt.s32.totalorder %s154, 1
      %s158 = scalar_select %p157, %s154, 1
      %s159 = smul.addr %s156, 2
      %s160 = sadd.s32 %s158, %s159
      %s161 = smul.addr %s160, 8
      %s162 = scalar_lea.vmem %s0, %s161
      %p163 = pneg %p48
      %p164 = pneg %p45
      %s165 = smul.u32 32, %s18
      %p166 = scmp.lt.s32.totalorder %s17, 1
      %s167 = scalar_select %p166, %s17, 1
      %p168 = scmp.lt.s32.totalorder %s165, 31
      %s169 = scalar_select %p168, %s165, 31
      %s170 = smul.addr %s167, 32
      %s171 = sadd.s32 %s169, %s170
      %s172 = smul.addr %s171, 8
      %s173 = scalar_lea.vmem %s1, %s172
      %p174 = pneg %p76
      %p175 = pneg %p73
      %p176 = pneg %p102
      %p177 = pneg %p99
      %p178 = scmp.lt.s32.totalorder %s17, 1
      %s179 = scalar_select %p178, %s17, 1
      %s180 = smul.addr %s179, 8
      %s181 = scalar_lea.vmem %s2, %s180
      %s182 = smul.u32 2, %s18
      %p183 = scmp.lt.s32.totalorder %s17, 1
      %s184 = scalar_select %p183, %s17, 1
      %p185 = scmp.lt.s32.totalorder %s182, 1
      %s186 = scalar_select %p185, %s182, 1
      %s187 = smul.addr %s184, 2
      %s188 = sadd.s32 %s186, %s187
      %s189 = smul.addr %s188, 8
      %s190 = scalar_lea.vmem %s0, %s189
      %s191 = smul.u32 2, %s18
      %s192 = smul.u32 32, %s18
      %p193 = scmp.lt.s32.totalorder %s17, 1
      %s194 = scalar_select %p193, %s17, 1
      %p195 = scmp.lt.s32.totalorder %s192, 31
      %s196 = scalar_select %p195, %s192, 31
      %s197 = smul.addr %s194, 32
      %s198 = sadd.s32 %s196, %s197
      %s199 = smul.addr %s198, 8
      %s200 = scalar_lea.vmem %s1, %s199
      %s201 = smul.u32 32, %s18
      %p202 = scmp.lt.s32.totalorder %s17, 1
      %s203 = scalar_select %p202, %s17, 1
      %s204 = smul.addr %s203, 8
      %s205 = scalar_lea.vmem %s2, %s204
      %p206 = scmp.eq.s32.totalorder %s18, 0
      // Predicated region
      $region29: #{_lambda_.7} parent=27 // pred_check
        %p207 = pneg %p206
      $region30: #{_lambda_.7} parent=27 // pred_check_branch
        %209 = sbr.rel (%p207) target = $region32
      $region31: #{_lambda_.7} parent=27 // pred_region
        %vm210 = vcmask 261120
        %211 = vst.msk [vmem:[%s205] sm:$0xff] %vm210, 0.0
      $region32: #{_lambda_.7} parent=27 // pred_fallthru
        _
      %v212 = vld [vmem:[%s190] sm:$0xff]
      %v213 = vld [vmem:[%s190 + $0x8] sm:$0xff]
      %vm214 = vcmp.gt.f32.partialorder %v212, 0.0
      %vm215 = vcmp.gt.f32.partialorder %v213, 0.0
      %v216 = vsel %vm214, 1, 0
      %v217 = vsel %vm215, 1, 0
      %v218 = vcvt.s32.f32 %v216
      %v219 = vcvt.s32.f32 %v217
      %v220 = vld [vmem:[%s205] sm:$0xff]
      %v221 = vld [vmem:[%s200] sm:$0xff]
      %v222 = vld [vmem:[%s200 + $0x8] sm:$0xff]
      %v223 = vld [vmem:[%s200 + $0x10] sm:$0xff]
      %v224 = vld [vmem:[%s200 + $0x18] sm:$0xff]
      %v225 = vld [vmem:[%s200 + $0x20] sm:$0xff]
      %v226 = vld [vmem:[%s200 + $0x28] sm:$0xff]
      %v227 = vld [vmem:[%s200 + $0x30] sm:$0xff]
      %v228 = vld [vmem:[%s200 + $0x38] sm:$0xff]
      %v229 = vld [vmem:[%s200 + $0x40] sm:$0xff]
      %v230 = vld [vmem:[%s200 + $0x48] sm:$0xff]
      %v231 = vld [vmem:[%s200 + $0x50] sm:$0xff]
      %v232 = vld [vmem:[%s200 + $0x58] sm:$0xff]
      %v233 = vld [vmem:[%s200 + $0x60] sm:$0xff]
      %v234 = vld [vmem:[%s200 + $0x68] sm:$0xff]
      %v235 = vld [vmem:[%s200 + $0x70] sm:$0xff]
      %v236 = vld [vmem:[%s200 + $0x78] sm:$0xff]
      %v237 = vld [vmem:[%s200 + $0x80] sm:$0xff]
      %v238 = vld [vmem:[%s200 + $0x88] sm:$0xff]
      %v239 = vld [vmem:[%s200 + $0x90] sm:$0xff]
      %v240 = vld [vmem:[%s200 + $0x98] sm:$0xff]
      %v241 = vld [vmem:[%s200 + $0xa0] sm:$0xff]
      %v242 = vld [vmem:[%s200 + $0xa8] sm:$0xff]
      %v243 = vld [vmem:[%s200 + $0xb0] sm:$0xff]
      %v244 = vld [vmem:[%s200 + $0xb8] sm:$0xff]
      %v245 = vld [vmem:[%s200 + $0xc0] sm:$0xff]
      %v246 = vld [vmem:[%s200 + $0xc8] sm:$0xff]
      %v247 = vld [vmem:[%s200 + $0xd0] sm:$0xff]
      %v248 = vld [vmem:[%s200 + $0xd8] sm:$0xff]
      %v249 = vld [vmem:[%s200 + $0xe0] sm:$0xff]
      %v250 = vld [vmem:[%s200 + $0xe8] sm:$0xff]
      %v251 = vld [vmem:[%s200 + $0xf0] sm:$0xff]
      %v252 = vld [vmem:[%s200 + $0xf8] sm:$0xff]
      %253 = vmatprep.subr.mxu0 0.0
      %254 = vmatpush1.msra.mxu0 %v236
      %255 = vmatprep.subr.mxu0 0.0
      %256 = vmatpush1.msra.mxu0 %v235
      %257 = vmatprep.subr.mxu0 0.0
      %258 = vmatpush1.msra.mxu0 %v234
      %259 = vmatprep.subr.mxu0 0.0
      %260 = vmatpush1.msra.mxu0 %v233
      %261 = vmatprep.subr.mxu0 0.0
      %262 = vmatpush1.msra.mxu0 %v232
      %263 = vmatprep.subr.mxu0 0.0
      %264 = vmatpush1.msra.mxu0 %v231
      %265 = vmatprep.subr.mxu0 0.0
      %266 = vmatpush1.msra.mxu0 %v230
      %267 = vmatprep.subr.mxu0 0.0
      %268 = vmatpush1.msra.mxu0 %v229
      %269 = vmatprep.subr.mxu0 0.0
      %270 = vmatpush1.msra.mxu0 %v228
      %271 = vmatprep.subr.mxu0 0.0
      %272 = vmatpush1.msra.mxu0 %v227
      %273 = vmatprep.subr.mxu0 0.0
      %274 = vmatpush1.msra.mxu0 %v226
      %275 = vmatprep.subr.mxu0 0.0
      %276 = vmatpush1.msra.mxu0 %v225
      %277 = vmatprep.subr.mxu0 0.0
      %278 = vmatpush1.msra.mxu0 %v224
      %279 = vmatprep.subr.mxu0 0.0
      %280 = vmatpush1.msra.mxu0 %v223
      %281 = vmatprep.subr.mxu0 0.0
      %282 = vmatpush1.msra.mxu0 %v222
      %283 = vmatprep.subr.mxu0 0.0
      %284 = vmatpush1.msra.mxu0 %v221
      %285 = vmatprep.subr.mxu0 0.0
      %286 = vmatpush2.msra.mxu0 %v252
      %287 = vmatprep.subr.mxu0 0.0
      %288 = vmatpush2.msra.mxu0 %v251
      %289 = vmatprep.subr.mxu0 0.0
      %290 = vmatpush2.msra.mxu0 %v250
      %291 = vmatprep.subr.mxu0 0.0
      %292 = vmatpush2.msra.mxu0 %v249
      %293 = vmatprep.subr.mxu0 0.0
      %294 = vmatpush2.msra.mxu0 %v248
      %295 = vmatprep.subr.mxu0 0.0
      %296 = vmatpush2.msra.mxu0 %v247
      %297 = vmatprep.subr.mxu0 0.0
      %298 = vmatpush2.msra.mxu0 %v246
      %299 = vmatprep.subr.mxu0 0.0
      %300 = vmatpush2.msra.mxu0 %v245
      %301 = vmatprep.subr.mxu0 0.0
      %302 = vmatpush2.msra.mxu0 %v244
      %303 = vmatprep.subr.mxu0 0.0
      %304 = vmatpush2.msra.mxu0 %v243
      %305 = vmatprep.subr.mxu0 0.0
      %306 = vmatpush2.msra.mxu0 %v242
      %307 = vmatprep.subr.mxu0 0.0
      %308 = vmatpush2.msra.mxu0 %v241
      %309 = vmatprep.subr.mxu0 0.0
      %310 = vmatpush2.msra.mxu0 %v240
      %311 = vmatprep.subr.mxu0 0.0
      %312 = vmatpush2.msra.mxu0 %v239
      %313 = vmatprep.subr.mxu0 0.0
      %314 = vmatpush2.msra.mxu0 %v238
      %315 = vmatprep.subr.mxu0 0.0
      %316 = vmatpush2.msra.mxu0 %v237
      %317 = vmatprep.mubr.f32.mxu0 %v219
      %318 = vmatmul.mubr.f32.gmra.mxu0 %v218
      %v319 = vpop.f32.mrf.mxu0
      %v320 = vadd.f32 0.0, %v319
      %v321 = vpop.f32.mrf.mxu0
      %322 = vdwg.mxu0
      %v323 = vadd.f32 %v220, %v320
      %vm324 = vcmask 261120
      %325 = vst.msk [vmem:[%s205] sm:$0xff] %vm324, %v323
      %p326 = scmp.lt.s32.totalorder %s17, 1
      %s327 = scalar_select %p326, %s17, 1
      %s328 = smul.addr %s327, 8
      %s329 = scalar_lea.vmem %s2, %s328
      // Predicated region
      $region33: #{_lambda_.7} parent=27 // pred_check
        %p330 = pneg %p99
      $region34: #{_lambda_.7} parent=27 // pred_check_branch
        %332 = sbr.rel (%p330) target = $region36
      $region35: #{_lambda_.7} parent=27 // pred_region
        _
      $region36: #{_lambda_.7} parent=27 // pred_fallthru
        _
    $region28: #{_lambda_.7} parent=5 // pred_fallthru
      _
    %p333 = scmp.le.s32.totalorder 2, %s8
    // Predicated region
    $region37: #{_lambda_.7} parent=5 // pred_check
      %p334 = pneg %p333
    $region38: #{_lambda_.7} parent=5 // pred_check_branch
      %336 = sbr.rel (%p334) target = $region40
    $region39: #{_lambda_.7} parent=5 // pred_region
      %s337 = ssub.s32 %s8, 2
      // Predicated region
      $region41: #{_lambda_.7} parent=39 // pred_check
        %p338 = pneg %p105
      $region42: #{_lambda_.7} parent=39 // pred_check_branch
        %340 = sbr.rel (%p338) target = $region44
      $region43: #{_lambda_.7} parent=39 // pred_region
        %p341 = scmp.lt.s32.totalorder %s19, 1
        %s342 = scalar_select %p341, %s19, 1
        %s343 = smul.addr %s342, 8
        %s344 = scalar_lea.vmem %s2, %s343
      $region44: #{_lambda_.7} parent=39 // pred_fallthru
        _
    $region40: #{_lambda_.7} parent=5 // pred_fallthru
      _
  $region6: #{_lambda_.7} parent=0 // loop_footer
    %s12 = sadd.s32 1, %s8
  $region7: #{_lambda_.7} parent=0 // loop_footer_branch
    %7 = sbr.rel target = $region3
  $region8: #{_lambda_.7} parent=0 // loop_exit
    _

// kernel: _lambda_.6
$region0: #{_lambda_.6}
  #allocation0 [shape = 'u32[]', space=smem, size = 0x4, offset = 0x4, fixed_abs, tag = 'smem constant byte address 0x4 - core index']
  #allocation1 [shape = 'u32[144,128]{1,0:T(1,128)}', space=vmem, size = 0x12000, scoped, tag = 'internal scratch']
  %s0 = inlined_call_operand.vmem [shape: f32[512,32], index: 0, kind: input, shape index: {}]
  %s1 = inlined_call_operand.vmem [shape: f32[32,32], index: 1, kind: input, shape index: {}]
  %s2 = inlined_call_operand.vmem [shape: f32[1,32], index: 2, kind: input, shape index: {}]
  %s3 = inlined_call_operand.vmem [shape: f32[512,32], index: 3, kind: output, shape index: {}]
  %s4 = sld [smem:[#allocation0]]
  $region45: #{_lambda_.6} parent=0
    _
  %s6 = ssub.s32 1, %s4
  %s7 = scalar_select 0, %s6, %s4
  loop: start=0, step=1, limit=4
  $region2: #{_lambda_.6} parent=0 // loop_pre_header
    _
  $region3: #{_lambda_.6} parent=0 // loop_header
    %s9 = sphi 0, %s13
    %p10 = scmp.ge.s32.totalorder %s9, 4
    %s19 = sphi 0, %s21
    %s22 = sphi 0, %s19
    %s23 = sphi 0, %s22
    %s39 = sphi 0, %s23
    %s43 = sphi 0, %s43
    %s45 = sphi 0, %s43
    %s46 = sphi 0, %s45
    %s60 = sphi 0, %s46
    %s64 = sphi 0, %s64
    %s66 = sphi 0, %s64
    %s67 = sphi 0, %s66
    %s81 = sphi 0, %s67
    %s87 = sphi 0, %s89
    %s90 = sphi 0, %s87
    %s91 = sphi 0, %s90
    %s107 = sphi 0, %s91
  $region4: #{_lambda_.6} parent=0 // loop_header_branch
    %12 = sbr.rel (%p10) target = $region8
  $region5: #{_lambda_.6} parent=0 // loop_body
    %s14 = ssub.s32 %s9, 1
    %s15 = ssub.s32 %s9, 2
    %s16 = sadd.s32 %s9, 1
    %s17 = ssub.s32 %s9, %s16
    %p18 = scmp.eq.s32.totalorder %s17, 0
    %s20 = sadd.s32 %s19, 1
    %s21 = scalar_select %p18, %s19, %s20
    %p24 = pneg %p18
    %p25 = scmp.eq.s32.totalorder %s9, 1
    %p26 = por %p24, %p25
    %p27 = scmp.ne.s32.totalorder %s19, %s22
    %p28 = scmp.eq.s32.totalorder %s9, 0
    %p29 = por %p27, %p28
    %p30 = scmp.ne.s32.totalorder %s19, %s22
    %p31 = scmp.eq.s32.totalorder %s14, 1
    %p32 = por %p30, %p31
    %p33 = scmp.ne.s32.totalorder %s22, %s23
    %p34 = scmp.eq.s32.totalorder %s14, 0
    %p35 = por %p33, %p34
    %p36 = scmp.ne.s32.totalorder %s22, %s23
    %p37 = scmp.eq.s32.totalorder %s15, 1
    %p38 = por %p36, %p37
    %p40 = scmp.ne.s32.totalorder %s23, %s39
    %p41 = scmp.eq.s32.totalorder %s15, 0
    %p42 = por %p40, %p41
    %s44 = sadd.s32 %s43, 1
    %p47 = scmp.eq.s32.totalorder %s9, 1
    %p48 = scmp.ne.s32.totalorder %s43, %s45
    %p49 = scmp.eq.s32.totalorder %s9, 0
    %p50 = por %p48, %p49
    %p51 = scmp.ne.s32.totalorder %s43, %s45
    %p52 = scmp.eq.s32.totalorder %s14, 1
    %p53 = por %p51, %p52
    %p54 = scmp.ne.s32.totalorder %s45, %s46
    %p55 = scmp.eq.s32.totalorder %s14, 0
    %p56 = por %p54, %p55
    %p57 = scmp.ne.s32.totalorder %s45, %s46
    %p58 = scmp.eq.s32.totalorder %s15, 1
    %p59 = por %p57, %p58
    %p61 = scmp.ne.s32.totalorder %s46, %s60
    %p62 = scmp.eq.s32.totalorder %s15, 0
    %p63 = por %p61, %p62
    %s65 = sadd.s32 %s64, 1
    %p68 = scmp.eq.s32.totalorder %s9, 1
    %p69 = scmp.ne.s32.totalorder %s64, %s66
    %p70 = scmp.eq.s32.totalorder %s9, 0
    %p71 = por %p69, %p70
    %p72 = scmp.ne.s32.totalorder %s64, %s66
    %p73 = scmp.eq.s32.totalorder %s14, 1
    %p74 = por %p72, %p73
    %p75 = scmp.ne.s32.totalorder %s66, %s67
    %p76 = scmp.eq.s32.totalorder %s14, 0
    %p77 = por %p75, %p76
    %p78 = scmp.ne.s32.totalorder %s66, %s67
    %p79 = scmp.eq.s32.totalorder %s15, 1
    %p80 = por %p78, %p79
    %p82 = scmp.ne.s32.totalorder %s67, %s81
    %p83 = scmp.eq.s32.totalorder %s15, 0
    %p84 = por %p82, %p83
    %s85 = ssub.s32 %s9, %s16
    %p86 = scmp.eq.s32.totalorder %s85, 0
    %s88 = sadd.s32 %s87, 1
    %s89 = scalar_select %p86, %s87, %s88
    %p92 = pneg %p86
    %p93 = scmp.eq.s32.totalorder %s9, 1
    %p94 = por %p92, %p93
    %p95 = scmp.ne.s32.totalorder %s87, %s90
    %p96 = scmp.eq.s32.totalorder %s9, 0
    %p97 = por %p95, %p96
    %p98 = scmp.ne.s32.totalorder %s87, %s90
    %p99 = scmp.eq.s32.totalorder %s14, 1
    %p100 = por %p98, %p99
    %p101 = scmp.ne.s32.totalorder %s90, %s91
    %p102 = scmp.eq.s32.totalorder %s14, 0
    %p103 = por %p101, %p102
    %p104 = scmp.ne.s32.totalorder %s90, %s91
    %p105 = scmp.eq.s32.totalorder %s15, 1
    %p106 = por %p104, %p105
    %p108 = scmp.ne.s32.totalorder %s91, %s107
    %p109 = scmp.eq.s32.totalorder %s15, 0
    %p110 = por %p108, %p109
    %p111 = scmp.le.s32.totalorder 1, %s9
    %p112 = scmp.lt.s32.totalorder %s9, 3
    %p113 = pnand %p111, %p112
    %p114 = pneg %p113
    // Predicated region
    $region9: #{_lambda_.6} parent=5 // pred_check
      _
    $region10: #{_lambda_.6} parent=5 // pred_check_branch
      %116 = sbr.rel (%p113) target = $region12
    $region11: #{_lambda_.6} parent=5 // pred_region
      %s117 = ssub.s32 %s9, 1
      // Predicated region
      $region13: #{_lambda_.6} parent=11 // pred_check
        %p118 = pneg %p56
      $region14: #{_lambda_.6} parent=11 // pred_check_branch
        %120 = sbr.rel (%p118) target = $region16
      $region15: #{_lambda_.6} parent=11 // pred_region
        _
      $region16: #{_lambda_.6} parent=11 // pred_fallthru
        _
      // Predicated region
      $region17: #{_lambda_.6} parent=11 // pred_check
        %p121 = pneg %p77
      $region18: #{_lambda_.6} parent=11 // pred_check_branch
        %123 = sbr.rel (%p121) target = $region20
      $region19: #{_lambda_.6} parent=11 // pred_region
        _
      $region20: #{_lambda_.6} parent=11 // pred_fallthru
        _
    $region12: #{_lambda_.6} parent=5 // pred_fallthru
      _
    %p124 = scmp.lt.s32.totalorder %s9, 2
    // Predicated region
    $region21: #{_lambda_.6} parent=5 // pred_check
      %p125 = pneg %p124
    $region22: #{_lambda_.6} parent=5 // pred_check_branch
      %127 = sbr.rel (%p125) target = $region24
    $region23: #{_lambda_.6} parent=5 // pred_region
      // Predicated region
      $region25: #{_lambda_.6} parent=23 // pred_check
        %p128 = pneg %p29
      $region26: #{_lambda_.6} parent=23 // pred_check_branch
        %130 = sbr.rel (%p128) target = $region28
      $region27: #{_lambda_.6} parent=23 // pred_region
        %s131 = smul.u32 32, %s9
        %p132 = scmp.lt.s32.totalorder %s131, 63
        %s133 = scalar_select %p132, %s131, 63
        %s134 = smul.addr %s133, 8
        %s135 = scalar_lea.vmem %s0, %s134
        %s136 = smul.u32 32, %s9
      $region28: #{_lambda_.6} parent=23 // pred_fallthru
        _
    $region24: #{_lambda_.6} parent=5 // pred_fallthru
      _
    %p137 = scmp.le.s32.totalorder 1, %s9
    %p138 = scmp.lt.s32.totalorder %s9, 3
    %p139 = pnand %p137, %p138
    %p140 = pneg %p139
    // Predicated region
    $region29: #{_lambda_.6} parent=5 // pred_check
      _
    $region30: #{_lambda_.6} parent=5 // pred_check_branch
      %142 = sbr.rel (%p139) target = $region32
    $region31: #{_lambda_.6} parent=5 // pred_region
      %s143 = ssub.s32 %s9, 1
      %s144 = smul.u32 32, %s14
      %p145 = scmp.lt.s32.totalorder %s144, 63
      %s146 = scalar_select %p145, %s144, 63
      %s147 = smul.addr %s146, 8
      %s148 = scalar_lea.vmem %s0, %s147
      %p149 = pneg %p35
      %p150 = pneg %p32
      %p151 = pneg %p56
      %p152 = pneg %p53
      %p153 = pneg %p77
      %p154 = pneg %p74
      %p155 = pneg %p103
      %p156 = pneg %p100
      %s157 = smul.u32 32, %s14
      %p158 = scmp.lt.s32.totalorder %s157, 63
      %s159 = scalar_select %p158, %s157, 63
      %s160 = smul.addr %s159, 8
      %s161 = scalar_lea.vmem %s3, %s160
      %s162 = smul.u32 32, %s14
      %p163 = scmp.lt.s32.totalorder %s162, 63
      %s164 = scalar_select %p163, %s162, 63
      %s165 = smul.addr %s164, 8
      %s166 = scalar_lea.vmem %s0, %s165
      %s167 = smul.u32 32, %s14
      %s168 = smul.u32 32, %s14
      %p169 = scmp.lt.s32.totalorder %s168, 63
      %s170 = scalar_select %p169, %s168, 63
      %s171 = smul.addr %s170, 8
      %s172 = scalar_lea.vmem %s3, %s171
      %s173 = smul.u32 32, %s14
      %v174 = vld [vmem:[%s166] sm:$0xff]
      %v175 = vld [vmem:[%s166 + $0x8] sm:$0xff]
      %v176 = vld [vmem:[%s166 + $0x10] sm:$0xff]
      %v177 = vld [vmem:[%s166 + $0x18] sm:$0xff]
      %v178 = vld [vmem:[%s166 + $0x20] sm:$0xff]
      %v179 = vld [vmem:[%s166 + $0x28] sm:$0xff]
      %v180 = vld [vmem:[%s166 + $0x30] sm:$0xff]
      %v181 = vld [vmem:[%s166 + $0x38] sm:$0xff]
      %v182 = vld [vmem:[%s166 + $0x40] sm:$0xff]
      %v183 = vld [vmem:[%s166 + $0x48] sm:$0xff]
      %v184 = vld [vmem:[%s166 + $0x50] sm:$0xff]
      %v185 = vld [vmem:[%s166 + $0x58] sm:$0xff]
      %v186 = vld [vmem:[%s166 + $0x60] sm:$0xff]
      %v187 = vld [vmem:[%s166 + $0x68] sm:$0xff]
      %v188 = vld [vmem:[%s166 + $0x70] sm:$0xff]
      %v189 = vld [vmem:[%s166 + $0x78] sm:$0xff]
      %v190 = vld [vmem:[%s166 + $0x80] sm:$0xff]
      %v191 = vld [vmem:[%s166 + $0x88] sm:$0xff]
      %v192 = vld [vmem:[%s166 + $0x90] sm:$0xff]
      %v193 = vld [vmem:[%s166 + $0x98] sm:$0xff]
      %v194 = vld [vmem:[%s166 + $0xa0] sm:$0xff]
      %v195 = vld [vmem:[%s166 + $0xa8] sm:$0xff]
      %v196 = vld [vmem:[%s166 + $0xb0] sm:$0xff]
      %v197 = vld [vmem:[%s166 + $0xb8] sm:$0xff]
      %v198 = vld [vmem:[%s166 + $0xc0] sm:$0xff]
      %v199 = vld [vmem:[%s166 + $0xc8] sm:$0xff]
      %v200 = vld [vmem:[%s166 + $0xd0] sm:$0xff]
      %v201 = vld [vmem:[%s166 + $0xd8] sm:$0xff]
      %v202 = vld [vmem:[%s166 + $0xe0] sm:$0xff]
      %v203 = vld [vmem:[%s166 + $0xe8] sm:$0xff]
      %v204 = vld [vmem:[%s166 + $0xf0] sm:$0xff]
      %v205 = vld [vmem:[%s166 + $0xf8] sm:$0xff]
      %v206 = vld [vmem:[%s1] sm:$0xff]
      %v207 = vld [vmem:[%s1 + $0x8] sm:$0xff]
      %v208 = vld [vmem:[%s1 + $0x10] sm:$0xff]
      %v209 = vld [vmem:[%s1 + $0x18] sm:$0xff]
      %v210 = vld [vmem:[%s2] sm:$0x1]
      %v212 = vlaneseq
      %v213 = vshrl.u32 %v212, 7
      %v214 = vsub.s32 0, %v213
      %v215 = vrot.slane %v210, %v214
      %vm217 = vcmask 261120
      %v219 = vsel %vm217, %v174, 0
      %v222 = vsel %vm217, %v175, 0
      %v225 = vsel %vm217, %v176, 0
      %v228 = vsel %vm217, %v177, 0
      %v231 = vsel %vm217, %v178, 0
      %v234 = vsel %vm217, %v179, 0
      %v237 = vsel %vm217, %v180, 0
      %v240 = vsel %vm217, %v181, 0
      %v243 = vsel %vm217, %v182, 0
      %v246 = vsel %vm217, %v183, 0
      %v249 = vsel %vm217, %v184, 0
      %v252 = vsel %vm217, %v185, 0
      %v255 = vsel %vm217, %v186, 0
      %v258 = vsel %vm217, %v187, 0
      %v261 = vsel %vm217, %v188, 0
      %v264 = vsel %vm217, %v189, 0
      %v267 = vsel %vm217, %v190, 0
      %v270 = vsel %vm217, %v191, 0
      %v273 = vsel %vm217, %v192, 0
      %v276 = vsel %vm217, %v193, 0
      %v279 = vsel %vm217, %v194, 0
      %v282 = vsel %vm217, %v195, 0
      %v285 = vsel %vm217, %v196, 0
      %v288 = vsel %vm217, %v197, 0
      %v291 = vsel %vm217, %v198, 0
      %v294 = vsel %vm217, %v199, 0
      %v297 = vsel %vm217, %v200, 0
      %v300 = vsel %vm217, %v201, 0
      %v303 = vsel %vm217, %v202, 0
      %v306 = vsel %vm217, %v203, 0
      %v309 = vsel %vm217, %v204, 0
      %v312 = vsel %vm217, %v205, 0
      %314 = vmatprep.subr.mxu0 0.0
      %315 = vmatpush1.msra.mxu0 0.0
      %316 = vmatprep.subr.mxu0 0.0
      %317 = vmatpush1.msra.mxu0 0.0
      %318 = vmatprep.subr.mxu0 0.0
      %319 = vmatpush1.msra.mxu0 0.0
      %320 = vmatprep.subr.mxu0 0.0
      %321 = vmatpush1.msra.mxu0 0.0
      %322 = vmatprep.subr.mxu0 0.0
      %323 = vmatpush1.msra.mxu0 0.0
      %324 = vmatprep.subr.mxu0 0.0
      %325 = vmatpush1.msra.mxu0 0.0
      %326 = vmatprep.subr.mxu0 0.0
      %327 = vmatpush1.msra.mxu0 0.0
      %328 = vmatprep.subr.mxu0 0.0
      %329 = vmatpush1.msra.mxu0 0.0
      %330 = vmatprep.subr.mxu0 0.0
      %331 = vmatpush1.msra.mxu0 0.0
      %332 = vmatprep.subr.mxu0 0.0
      %333 = vmatpush1.msra.mxu0 0.0
      %334 = vmatprep.subr.mxu0 0.0
      %335 = vmatpush1.msra.mxu0 0.0
      %336 = vmatprep.subr.mxu0 0.0
      %337 = vmatpush1.msra.mxu0 0.0
      %338 = vmatprep.subr.mxu0 0.0
      %339 = vmatpush1.msra.mxu0 %v209
      %340 = vmatprep.subr.mxu0 0.0
      %341 = vmatpush1.msra.mxu0 %v208
      %342 = vmatprep.subr.mxu0 0.0
      %343 = vmatpush1.msra.mxu0 %v207
      %344 = vmatprep.subr.mxu0 0.0
      %345 = vmatpush1.msra.mxu0 %v206
      %346 = vmatprep.subr.mxu0 0.0
      %347 = vmatpush2.msra.mxu0 0.0
      %348 = vmatprep.subr.mxu0 0.0
      %349 = vmatpush2.msra.mxu0 0.0
      %350 = vmatprep.subr.mxu0 0.0
      %351 = vmatpush2.msra.mxu0 0.0
      %352 = vmatprep.subr.mxu0 0.0
      %353 = vmatpush2.msra.mxu0 0.0
      %354 = vmatprep.subr.mxu0 0.0
      %355 = vmatpush2.msra.mxu0 0.0
      %356 = vmatprep.subr.mxu0 0.0
      %357 = vmatpush2.msra.mxu0 0.0
      %358 = vmatprep.subr.mxu0 0.0
      %359 = vmatpush2.msra.mxu0 0.0
      %360 = vmatprep.subr.mxu0 0.0
      %361 = vmatpush2.msra.mxu0 0.0
      %362 = vmatprep.subr.mxu0 0.0
      %363 = vmatpush2.msra.mxu0 0.0
      %364 = vmatprep.subr.mxu0 0.0
      %365 = vmatpush2.msra.mxu0 0.0
      %366 = vmatprep.subr.mxu0 0.0
      %367 = vmatpush2.msra.mxu0 0.0
      %368 = vmatprep.subr.mxu0 0.0
      %369 = vmatpush2.msra.mxu0 0.0
      %370 = vmatprep.subr.mxu0 0.0
      %371 = vmatpush2.msra.mxu0 0.0
      %372 = vmatprep.subr.mxu0 0.0
      %373 = vmatpush2.msra.mxu0 0.0
      %374 = vmatprep.subr.mxu0 0.0
      %375 = vmatpush2.msra.mxu0 0.0
      %376 = vmatprep.subr.mxu0 0.0
      %377 = vmatpush2.msra.mxu0 0.0
      %378 = vmatprep.mubr.f32.mxu0 0.0
      %379 = vmatmul.mubr.f32.gmra.mxu0 %v219
      %v380 = vpop.f32.mrf.mxu0
      %v381 = vadd.f32 %v215, %v380
      %v382 = vpop.f32.mrf.mxu0
      %383 = vmatprep.mubr.f32.mxu0 0.0
      %384 = vmatmul.mubr.f32.gmra.mxu0 %v222
      %v385 = vpop.f32.mrf.mxu0
      %v386 = vadd.f32 %v215, %v385
      %v387 = vpop.f32.mrf.mxu0
      %388 = vmatprep.mubr.f32.mxu0 0.0
      %389 = vmatmul.mubr.f32.gmra.mxu0 %v225
      %v390 = vpop.f32.mrf.mxu0
      %v391 = vadd.f32 %v215, %v390
      %v392 = vpop.f32.mrf.mxu0
      %393 = vmatprep.mubr.f32.mxu0 0.0
      %394 = vmatmul.mubr.f32.gmra.mxu0 %v228
      %v395 = vpop.f32.mrf.mxu0
      %v396 = vadd.f32 %v215, %v395
      %v397 = vpop.f32.mrf.mxu0
      %398 = vmatprep.mubr.f32.mxu0 0.0
      %399 = vmatmul.mubr.f32.gmra.mxu0 %v231
      %v400 = vpop.f32.mrf.mxu0
      %v401 = vadd.f32 %v215, %v400
      %v402 = vpop.f32.mrf.mxu0
      %403 = vmatprep.mubr.f32.mxu0 0.0
      %404 = vmatmul.mubr.f32.gmra.mxu0 %v234
      %v405 = vpop.f32.mrf.mxu0
      %v406 = vadd.f32 %v215, %v405
      %v407 = vpop.f32.mrf.mxu0
      %408 = vmatprep.mubr.f32.mxu0 0.0
      %409 = vmatmul.mubr.f32.gmra.mxu0 %v237
      %v410 = vpop.f32.mrf.mxu0
      %v411 = vadd.f32 %v215, %v410
      %v412 = vpop.f32.mrf.mxu0
      %413 = vmatprep.mubr.f32.mxu0 0.0
      %414 = vmatmul.mubr.f32.gmra.mxu0 %v240
      %v415 = vpop.f32.mrf.mxu0
      %v416 = vadd.f32 %v215, %v415
      %v417 = vpop.f32.mrf.mxu0
      %418 = vmatprep.mubr.f32.mxu0 0.0
      %419 = vmatmul.mubr.f32.gmra.mxu0 %v243
      %v420 = vpop.f32.mrf.mxu0
      %v421 = vadd.f32 %v215, %v420
      %v422 = vpop.f32.mrf.mxu0
      %423 = vmatprep.mubr.f32.mxu0 0.0
      %424 = vmatmul.mubr.f32.gmra.mxu0 %v246
      %v425 = vpop.f32.mrf.mxu0
      %v426 = vadd.f32 %v215, %v425
      %v427 = vpop.f32.mrf.mxu0
      %428 = vmatprep.mubr.f32.mxu0 0.0
      %429 = vmatmul.mubr.f32.gmra.mxu0 %v249
      %v430 = vpop.f32.mrf.mxu0
      %v431 = vadd.f32 %v215, %v430
      %v432 = vpop.f32.mrf.mxu0
      %433 = vmatprep.mubr.f32.mxu0 0.0
      %434 = vmatmul.mubr.f32.gmra.mxu0 %v252
      %v435 = vpop.f32.mrf.mxu0
      %v436 = vadd.f32 %v215, %v435
      %v437 = vpop.f32.mrf.mxu0
      %438 = vmatprep.mubr.f32.mxu0 0.0
      %439 = vmatmul.mubr.f32.gmra.mxu0 %v255
      %v440 = vpop.f32.mrf.mxu0
      %v441 = vadd.f32 %v215, %v440
      %v442 = vpop.f32.mrf.mxu0
      %443 = vmatprep.mubr.f32.mxu0 0.0
      %444 = vmatmul.mubr.f32.gmra.mxu0 %v258
      %v445 = vpop.f32.mrf.mxu0
      %v446 = vadd.f32 %v215, %v445
      %v447 = vpop.f32.mrf.mxu0
      %448 = vmatprep.mubr.f32.mxu0 0.0
      %449 = vmatmul.mubr.f32.gmra.mxu0 %v261
      %v450 = vpop.f32.mrf.mxu0
      %v451 = vadd.f32 %v215, %v450
      %v452 = vpop.f32.mrf.mxu0
      %453 = vmatprep.mubr.f32.mxu0 0.0
      %454 = vmatmul.mubr.f32.gmra.mxu0 %v264
      %v455 = vpop.f32.mrf.mxu0
      %v456 = vadd.f32 %v215, %v455
      %v457 = vpop.f32.mrf.mxu0
      %458 = vmatprep.mubr.f32.mxu0 0.0
      %459 = vmatmul.mubr.f32.gmra.mxu0 %v267
      %v460 = vpop.f32.mrf.mxu0
      %v461 = vadd.f32 %v215, %v460
      %v462 = vpop.f32.mrf.mxu0
      %463 = vmatprep.mubr.f32.mxu0 0.0
      %464 = vmatmul.mubr.f32.gmra.mxu0 %v270
      %v465 = vpop.f32.mrf.mxu0
      %v466 = vadd.f32 %v215, %v465
      %v467 = vpop.f32.mrf.mxu0
      %468 = vmatprep.mubr.f32.mxu0 0.0
      %469 = vmatmul.mubr.f32.gmra.mxu0 %v273
      %v470 = vpop.f32.mrf.mxu0
      %v471 = vadd.f32 %v215, %v470
      %v472 = vpop.f32.mrf.mxu0
      %473 = vmatprep.mubr.f32.mxu0 0.0
      %474 = vmatmul.mubr.f32.gmra.mxu0 %v276
      %v475 = vpop.f32.mrf.mxu0
      %v476 = vadd.f32 %v215, %v475
      %v477 = vpop.f32.mrf.mxu0
      %478 = vmatprep.mubr.f32.mxu0 0.0
      %479 = vmatmul.mubr.f32.gmra.mxu0 %v279
      %v480 = vpop.f32.mrf.mxu0
      %v481 = vadd.f32 %v215, %v480
      %v482 = vpop.f32.mrf.mxu0
      %483 = vmatprep.mubr.f32.mxu0 0.0
      %484 = vmatmul.mubr.f32.gmra.mxu0 %v282
      %v485 = vpop.f32.mrf.mxu0
      %v486 = vadd.f32 %v215, %v485
      %v487 = vpop.f32.mrf.mxu0
      %488 = vmatprep.mubr.f32.mxu0 0.0
      %489 = vmatmul.mubr.f32.gmra.mxu0 %v285
      %v490 = vpop.f32.mrf.mxu0
      %v491 = vadd.f32 %v215, %v490
      %v492 = vpop.f32.mrf.mxu0
      %493 = vmatprep.mubr.f32.mxu0 0.0
      %494 = vmatmul.mubr.f32.gmra.mxu0 %v288
      %v495 = vpop.f32.mrf.mxu0
      %v496 = vadd.f32 %v215, %v495
      %v497 = vpop.f32.mrf.mxu0
      %498 = vmatprep.mubr.f32.mxu0 0.0
      %499 = vmatmul.mubr.f32.gmra.mxu0 %v291
      %v500 = vpop.f32.mrf.mxu0
      %v501 = vadd.f32 %v215, %v500
      %v502 = vpop.f32.mrf.mxu0
      %503 = vmatprep.mubr.f32.mxu0 0.0
      %504 = vmatmul.mubr.f32.gmra.mxu0 %v294
      %v505 = vpop.f32.mrf.mxu0
      %v506 = vadd.f32 %v215, %v505
      %v507 = vpop.f32.mrf.mxu0
      %508 = vmatprep.mubr.f32.mxu0 0.0
      %509 = vmatmul.mubr.f32.gmra.mxu0 %v297
      %v510 = vpop.f32.mrf.mxu0
      %v511 = vadd.f32 %v215, %v510
      %v512 = vpop.f32.mrf.mxu0
      %513 = vmatprep.mubr.f32.mxu0 0.0
      %514 = vmatmul.mubr.f32.gmra.mxu0 %v300
      %v515 = vpop.f32.mrf.mxu0
      %v516 = vadd.f32 %v215, %v515
      %v517 = vpop.f32.mrf.mxu0
      %518 = vmatprep.mubr.f32.mxu0 0.0
      %519 = vmatmul.mubr.f32.gmra.mxu0 %v303
      %v520 = vpop.f32.mrf.mxu0
      %v521 = vadd.f32 %v215, %v520
      %v522 = vpop.f32.mrf.mxu0
      %523 = vmatprep.mubr.f32.mxu0 0.0
      %524 = vmatmul.mubr.f32.gmra.mxu0 %v306
      %v525 = vpop.f32.mrf.mxu0
      %v526 = vadd.f32 %v215, %v525
      %v527 = vpop.f32.mrf.mxu0
      %528 = vmatprep.mubr.f32.mxu0 0.0
      %529 = vmatmul.mubr.f32.gmra.mxu0 %v309
      %v530 = vpop.f32.mrf.mxu0
      %v531 = vadd.f32 %v215, %v530
      %v532 = vpop.f32.mrf.mxu0
      %533 = vmatprep.mubr.f32.mxu0 0.0
      %534 = vmatmul.mubr.f32.gmra.mxu0 %v312
      %v535 = vpop.f32.mrf.mxu0
      %v536 = vadd.f32 %v215, %v535
      %v537 = vpop.f32.mrf.mxu0
      %538 = vdwg.mxu0
      %539 = vst.msk [vmem:[%s172] sm:$0xff] %vm217, %v381
      %540 = vst.msk [vmem:[%s172 + $0x8] sm:$0xff] %vm217, %v386
      %541 = vst.msk [vmem:[%s172 + $0x10] sm:$0xff] %vm217, %v391
      %542 = vst.msk [vmem:[%s172 + $0x18] sm:$0xff] %vm217, %v396
      %543 = vst.msk [vmem:[%s172 + $0x20] sm:$0xff] %vm217, %v401
      %544 = vst.msk [vmem:[%s172 + $0x28] sm:$0xff] %vm217, %v406
      %545 = vst.msk [vmem:[%s172 + $0x30] sm:$0xff] %vm217, %v411
      %546 = vst.msk [vmem:[%s172 + $0x38] sm:$0xff] %vm217, %v416
      %547 = vst.msk [vmem:[%s172 + $0x40] sm:$0xff] %vm217, %v421
      %548 = vst.msk [vmem:[%s172 + $0x48] sm:$0xff] %vm217, %v426
      %549 = vst.msk [vmem:[%s172 + $0x50] sm:$0xff] %vm217, %v431
      %550 = vst.msk [vmem:[%s172 + $0x58] sm:$0xff] %vm217, %v436
      %551 = vst.msk [vmem:[%s172 + $0x60] sm:$0xff] %vm217, %v441
      %552 = vst.msk [vmem:[%s172 + $0x68] sm:$0xff] %vm217, %v446
      %553 = vst.msk [vmem:[%s172 + $0x70] sm:$0xff] %vm217, %v451
      %554 = vst.msk [vmem:[%s172 + $0x78] sm:$0xff] %vm217, %v456
      %555 = vst.msk [vmem:[%s172 + $0x80] sm:$0xff] %vm217, %v461
      %556 = vst.msk [vmem:[%s172 + $0x88] sm:$0xff] %vm217, %v466
      %557 = vst.msk [vmem:[%s172 + $0x90] sm:$0xff] %vm217, %v471
      %558 = vst.msk [vmem:[%s172 + $0x98] sm:$0xff] %vm217, %v476
      %559 = vst.msk [vmem:[%s172 + $0xa0] sm:$0xff] %vm217, %v481
      %560 = vst.msk [vmem:[%s172 + $0xa8] sm:$0xff] %vm217, %v486
      %561 = vst.msk [vmem:[%s172 + $0xb0] sm:$0xff] %vm217, %v491
      %562 = vst.msk [vmem:[%s172 + $0xb8] sm:$0xff] %vm217, %v496
      %563 = vst.msk [vmem:[%s172 + $0xc0] sm:$0xff] %vm217, %v501
      %564 = vst.msk [vmem:[%s172 + $0xc8] sm:$0xff] %vm217, %v506
      %565 = vst.msk [vmem:[%s172 + $0xd0] sm:$0xff] %vm217, %v511
      %566 = vst.msk [vmem:[%s172 + $0xd8] sm:$0xff] %vm217, %v516
      %567 = vst.msk [vmem:[%s172 + $0xe0] sm:$0xff] %vm217, %v521
      %568 = vst.msk [vmem:[%s172 + $0xe8] sm:$0xff] %vm217, %v526
      %569 = vst.msk [vmem:[%s172 + $0xf0] sm:$0xff] %vm217, %v531
      %570 = vst.msk [vmem:[%s172 + $0xf8] sm:$0xff] %vm217, %v536
      %s571 = smul.u32 32, %s14
      %p572 = scmp.lt.s32.totalorder %s571, 63
      %s573 = scalar_select %p572, %s571, 63
      %s574 = smul.addr %s573, 8
      %s575 = scalar_lea.vmem %s3, %s574
      // Predicated region
      $region33: #{_lambda_.6} parent=31 // pred_check
        %p576 = pneg %p100
      $region34: #{_lambda_.6} parent=31 // pred_check_branch
        %578 = sbr.rel (%p576) target = $region36
      $region35: #{_lambda_.6} parent=31 // pred_region
        %s579 = smul.u32 32, %s14
      $region36: #{_lambda_.6} parent=31 // pred_fallthru
        _
    $region32: #{_lambda_.6} parent=5 // pred_fallthru
      _
    %p580 = scmp.le.s32.totalorder 2, %s9
    // Predicated region
    $region37: #{_lambda_.6} parent=5 // pred_check
      %p581 = pneg %p580
    $region38: #{_lambda_.6} parent=5 // pred_check_branch
      %583 = sbr.rel (%p581) target = $region40
    $region39: #{_lambda_.6} parent=5 // pred_region
      %s584 = ssub.s32 %s9, 2
      // Predicated region
      $region41: #{_lambda_.6} parent=39 // pred_check
        %p585 = pneg %p106
      $region42: #{_lambda_.6} parent=39 // pred_check_branch
        %587 = sbr.rel (%p585) target = $region44
      $region43: #{_lambda_.6} parent=39 // pred_region
        %s588 = smul.u32 32, %s15
        %p589 = scmp.lt.s32.totalorder %s588, 63
        %s590 = scalar_select %p589, %s588, 63
        %s591 = smul.addr %s590, 8
        %s592 = scalar_lea.vmem %s3, %s591
      $region44: #{_lambda_.6} parent=39 // pred_fallthru
        _
    $region40: #{_lambda_.6} parent=5 // pred_fallthru
      _
  $region6: #{_lambda_.6} parent=0 // loop_footer
    %s13 = sadd.s32 1, %s9
  $region7: #{_lambda_.6} parent=0 // loop_footer_branch
    %8 = sbr.rel target = $region3
  $region8: #{_lambda_.6} parent=0 // loop_exit
    _

// kernel: _lambda_.11
$region0: #{_lambda_.11}
  #allocation0 [shape = 'u32[]', space=smem, size = 0x4, offset = 0x4, fixed_abs, tag = 'smem constant byte address 0x4 - core index']
  #allocation1 [shape = 'u32[144,128]{1,0:T(1,128)}', space=vmem, size = 0x12000, scoped, tag = 'internal scratch']
  %s0 = inlined_call_operand.vmem [shape: f32[2,8,32], index: 0, kind: input, shape index: {}]
  %s1 = inlined_call_operand.vmem [shape: f32[2,32,256], index: 1, kind: input, shape index: {}]
  %s2 = inlined_call_operand.vmem [shape: f32[2,8,256], index: 2, kind: output, shape index: {}]
  %s3 = sld [smem:[#allocation0]]
  $region41: #{_lambda_.11} parent=0
    _
  %s5 = ssub.s32 1, %s3
  %s6 = scalar_select 0, %s5, %s3
  loop: start=0, step=1, limit=4
  $region2: #{_lambda_.11} parent=0 // loop_pre_header
    _
  $region3: #{_lambda_.11} parent=0 // loop_header
    %s8 = sphi 0, %s12
    %p9 = scmp.ge.s32.totalorder %s8, 4
    %s15 = sphi 0, %s27
    %s16 = sphi 0, %s23
    %s17 = sphi 0, %s15
    %s18 = sphi 0, %s16
    %s19 = sphi 0, %s17
    %s20 = sphi 0, %s18
    %s30 = sphi 0, %s32
    %s33 = sphi 0, %s30
    %s34 = sphi 0, %s33
    %s50 = sphi 0, %s34
    %s58 = sphi 0, %s60
    %s61 = sphi 0, %s58
    %s62 = sphi 0, %s61
    %s78 = sphi 0, %s62
    %s86 = sphi 0, %s88
    %s89 = sphi 0, %s86
    %s90 = sphi 0, %s89
    %s106 = sphi 0, %s90
  $region4: #{_lambda_.11} parent=0 // loop_header_branch
    %11 = sbr.rel (%p9) target = $region8
  $region5: #{_lambda_.11} parent=0 // loop_body
    %s13 = ssub.s32 %s8, 1
    %s14 = ssub.s32 %s8, 2
    %s21 = sadd.s32 1, %s16
    %p22 = scmp.ge.s32.totalorder %s21, 1
    %s23 = scalar_select %p22, 0, %s21
    %s24 = sadd.s32 1, %s15
    %s25 = scalar_select %p22, %s24, %s15
    %p26 = scmp.ge.s32.totalorder %s25, 2
    %s27 = scalar_select %p26, 0, %s25
    %s28 = ssub.s32 %s15, %s27
    %p29 = scmp.eq.s32.totalorder %s28, 0
    %s31 = sadd.s32 %s30, 1
    %s32 = scalar_select %p29, %s30, %s31
    %p35 = pneg %p29
    %p36 = scmp.eq.s32.totalorder %s8, 1
    %p37 = por %p35, %p36
    %p38 = scmp.ne.s32.totalorder %s30, %s33
    %p39 = scmp.eq.s32.totalorder %s8, 0
    %p40 = por %p38, %p39
    %p41 = scmp.ne.s32.totalorder %s30, %s33
    %p42 = scmp.eq.s32.totalorder %s13, 1
    %p43 = por %p41, %p42
    %p44 = scmp.ne.s32.totalorder %s33, %s34
    %p45 = scmp.eq.s32.totalorder %s13, 0
    %p46 = por %p44, %p45
    %p47 = scmp.ne.s32.totalorder %s33, %s34
    %p48 = scmp.eq.s32.totalorder %s14, 1
    %p49 = por %p47, %p48
    %p51 = scmp.ne.s32.totalorder %s34, %s50
    %p52 = scmp.eq.s32.totalorder %s14, 0
    %p53 = por %p51, %p52
    %s54 = ssub.s32 %s15, %s27
    %s55 = ssub.s32 %s16, %s23
    %s56 = sor.u32 %s54, %s55
    %p57 = scmp.eq.s32.totalorder %s56, 0
    %s59 = sadd.s32 %s58, 1
    %s60 = scalar_select %p57, %s58, %s59
    %p63 = pneg %p57
    %p64 = scmp.eq.s32.totalorder %s8, 1
    %p65 = por %p63, %p64
    %p66 = scmp.ne.s32.totalorder %s58, %s61
    %p67 = scmp.eq.s32.totalorder %s8, 0
    %p68 = por %p66, %p67
    %p69 = scmp.ne.s32.totalorder %s58, %s61
    %p70 = scmp.eq.s32.totalorder %s13, 1
    %p71 = por %p69, %p70
    %p72 = scmp.ne.s32.totalorder %s61, %s62
    %p73 = scmp.eq.s32.totalorder %s13, 0
    %p74 = por %p72, %p73
    %p75 = scmp.ne.s32.totalorder %s61, %s62
    %p76 = scmp.eq.s32.totalorder %s14, 1
    %p77 = por %p75, %p76
    %p79 = scmp.ne.s32.totalorder %s62, %s78
    %p80 = scmp.eq.s32.totalorder %s14, 0
    %p81 = por %p79, %p80
    %s82 = ssub.s32 %s15, %s27
    %s83 = ssub.s32 %s16, %s23
    %s84 = sor.u32 %s82, %s83
    %p85 = scmp.eq.s32.totalorder %s84, 0
    %s87 = sadd.s32 %s86, 1
    %s88 = scalar_select %p85, %s86, %s87
    %p91 = pneg %p85
    %p92 = scmp.eq.s32.totalorder %s8, 1
    %p93 = por %p91, %p92
    %p94 = scmp.ne.s32.totalorder %s86, %s89
    %p95 = scmp.eq.s32.totalorder %s8, 0
    %p96 = por %p94, %p95
    %p97 = scmp.ne.s32.totalorder %s86, %s89
    %p98 = scmp.eq.s32.totalorder %s13, 1
    %p99 = por %p97, %p98
    %p100 = scmp.ne.s32.totalorder %s89, %s90
    %p101 = scmp.eq.s32.totalorder %s13, 0
    %p102 = por %p100, %p101
    %p103 = scmp.ne.s32.totalorder %s89, %s90
    %p104 = scmp.eq.s32.totalorder %s14, 1
    %p105 = por %p103, %p104
    %p107 = scmp.ne.s32.totalorder %s90, %s106
    %p108 = scmp.eq.s32.totalorder %s14, 0
    %p109 = por %p107, %p108
    %p110 = scmp.le.s32.totalorder 1, %s8
    %p111 = scmp.lt.s32.totalorder %s8, 3
    %p112 = pnand %p110, %p111
    %p113 = pneg %p112
    // Predicated region
    $region9: #{_lambda_.11} parent=5 // pred_check
      _
    $region10: #{_lambda_.11} parent=5 // pred_check_branch
      %115 = sbr.rel (%p112) target = $region12
    $region11: #{_lambda_.11} parent=5 // pred_region
      %s116 = ssub.s32 %s8, 1
    $region12: #{_lambda_.11} parent=5 // pred_fallthru
      _
    %p117 = scmp.lt.s32.totalorder %s8, 2
    // Predicated region
    $region13: #{_lambda_.11} parent=5 // pred_check
      %p118 = pneg %p117
    $region14: #{_lambda_.11} parent=5 // pred_check_branch
      %120 = sbr.rel (%p118) target = $region16
    $region15: #{_lambda_.11} parent=5 // pred_region
      // Predicated region
      $region17: #{_lambda_.11} parent=15 // pred_check
        %p121 = pneg %p40
      $region18: #{_lambda_.11} parent=15 // pred_check_branch
        %123 = sbr.rel (%p121) target = $region20
      $region19: #{_lambda_.11} parent=15 // pred_region
        %p124 = scmp.lt.s32.totalorder %s15, 1
        %s125 = scalar_select %p124, %s15, 1
        %s126 = smul.addr %s125, 8
        %s127 = scalar_lea.vmem %s0, %s126
      $region20: #{_lambda_.11} parent=15 // pred_fallthru
        _
      // Predicated region
      $region21: #{_lambda_.11} parent=15 // pred_check
        %p128 = pneg %p68
      $region22: #{_lambda_.11} parent=15 // pred_check_branch
        %130 = sbr.rel (%p128) target = $region24
      $region23: #{_lambda_.11} parent=15 // pred_region
        %s131 = smul.u32 2, %s16
        %p132 = scmp.lt.s32.totalorder %s15, 1
        %s133 = scalar_select %p132, %s15, 1
        %p134 = scmp.lt.s32.totalorder %s131, 1
        %s135 = scalar_select %p134, %s131, 1
        %s136 = smul.addr %s133, 8
        %s137 = sadd.s32 %s135, %s136
        %s138 = smul.addr %s137, 8
        %s139 = scalar_lea.vmem %s1, %s138
        %s140 = smul.u32 2, %s16
      $region24: #{_lambda_.11} parent=15 // pred_fallthru
        _
    $region16: #{_lambda_.11} parent=5 // pred_fallthru
      _
    %p141 = scmp.le.s32.totalorder 1, %s8
    %p142 = scmp.lt.s32.totalorder %s8, 3
    %p143 = pnand %p141, %p142
    %p144 = pneg %p143
    // Predicated region
    $region25: #{_lambda_.11} parent=5 // pred_check
      _
    $region26: #{_lambda_.11} parent=5 // pred_check_branch
      %146 = sbr.rel (%p143) target = $region28
    $region27: #{_lambda_.11} parent=5 // pred_region
      %s147 = ssub.s32 %s8, 1
      %p148 = scmp.lt.s32.totalorder %s17, 1
      %s149 = scalar_select %p148, %s17, 1
      %s150 = smul.addr %s149, 8
      %s151 = scalar_lea.vmem %s0, %s150
      %p152 = pneg %p46
      %p153 = pneg %p43
      %s154 = smul.u32 2, %s18
      %p155 = scmp.lt.s32.totalorder %s17, 1
      %s156 = scalar_select %p155, %s17, 1
      %p157 = scmp.lt.s32.totalorder %s154, 1
      %s158 = scalar_select %p157, %s154, 1
      %s159 = smul.addr %s156, 8
      %s160 = sadd.s32 %s158, %s159
      %s161 = smul.addr %s160, 8
      %s162 = scalar_lea.vmem %s1, %s161
      %p163 = pneg %p74
      %p164 = pneg %p71
      %p165 = pneg %p102
      %p166 = pneg %p99
      %s167 = smul.u32 2, %s18
      %p168 = scmp.lt.s32.totalorder %s17, 1
      %s169 = scalar_select %p168, %s17, 1
      %p170 = scmp.lt.s32.totalorder %s167, 1
      %s171 = scalar_select %p170, %s167, 1
      %s172 = smul.addr %s169, 2
      %s173 = sadd.s32 %s171, %s172
      %s174 = smul.addr %s173, 8
      %s175 = scalar_lea.vmem %s2, %s174
      %p176 = scmp.lt.s32.totalorder %s17, 1
      %s177 = scalar_select %p176, %s17, 1
      %s178 = smul.addr %s177, 8
      %s179 = scalar_lea.vmem %s0, %s178
      %s180 = smul.u32 2, %s18
      %p181 = scmp.lt.s32.totalorder %s17, 1
      %s182 = scalar_select %p181, %s17, 1
      %p183 = scmp.lt.s32.totalorder %s180, 1
      %s184 = scalar_select %p183, %s180, 1
      %s185 = smul.addr %s182, 8
      %s186 = sadd.s32 %s184, %s185
      %s187 = smul.addr %s186, 8
      %s188 = scalar_lea.vmem %s1, %s187
      %s189 = smul.u32 2, %s18
      %s190 = smul.u32 2, %s18
      %p191 = scmp.lt.s32.totalorder %s17, 1
      %s192 = scalar_select %p191, %s17, 1
      %p193 = scmp.lt.s32.totalorder %s190, 1
      %s194 = scalar_select %p193, %s190, 1
      %s195 = smul.addr %s192, 2
      %s196 = sadd.s32 %s194, %s195
      %s197 = smul.addr %s196, 8
      %s198 = scalar_lea.vmem %s2, %s197
      %s199 = smul.u32 2, %s18
      %v200 = vld [vmem:[%s179] sm:$0xff]
      %v201 = vld [vmem:[%s188] sm:$0xff]
      %v202 = vld [vmem:[%s188 + $0x8] sm:$0xff]
      %v203 = vld [vmem:[%s188 + $0x10] sm:$0xff]
      %v204 = vld [vmem:[%s188 + $0x18] sm:$0xff]
      %v205 = vld [vmem:[%s188 + $0x20] sm:$0xff]
      %v206 = vld [vmem:[%s188 + $0x28] sm:$0xff]
      %v207 = vld [vmem:[%s188 + $0x30] sm:$0xff]
      %v208 = vld [vmem:[%s188 + $0x38] sm:$0xff]
      %vm209 = vcmask 261120
      %v211 = vsel %vm209, %v200, 0
      %213 = vmatprep.subr.mxu0 0.0
      %214 = vmatpush1.msra.mxu0 0.0
      %215 = vmatprep.subr.mxu0 0.0
      %216 = vmatpush1.msra.mxu0 0.0
      %217 = vmatprep.subr.mxu0 0.0
      %218 = vmatpush1.msra.mxu0 0.0
      %219 = vmatprep.subr.mxu0 0.0
      %220 = vmatpush1.msra.mxu0 0.0
      %221 = vmatprep.subr.mxu0 0.0
      %222 = vmatpush1.msra.mxu0 0.0
      %223 = vmatprep.subr.mxu0 0.0
      %224 = vmatpush1.msra.mxu0 0.0
      %225 = vmatprep.subr.mxu0 0.0
      %226 = vmatpush1.msra.mxu0 0.0
      %227 = vmatprep.subr.mxu0 0.0
      %228 = vmatpush1.msra.mxu0 0.0
      %229 = vmatprep.subr.mxu0 0.0
      %230 = vmatpush1.msra.mxu0 0.0
      %231 = vmatprep.subr.mxu0 0.0
      %232 = vmatpush1.msra.mxu0 0.0
      %233 = vmatprep.subr.mxu0 0.0
      %234 = vmatpush1.msra.mxu0 0.0
      %235 = vmatprep.subr.mxu0 0.0
      %236 = vmatpush1.msra.mxu0 0.0
      %237 = vmatprep.subr.mxu0 %v208
      %238 = vmatpush1.msra.mxu0 %v207
      %239 = vmatprep.subr.mxu0 %v206
      %240 = vmatpush1.msra.mxu0 %v205
      %241 = vmatprep.subr.mxu0 %v204
      %242 = vmatpush1.msra.mxu0 %v203
      %243 = vmatprep.subr.mxu0 %v202
      %244 = vmatpush1.msra.mxu0 %v201
      %245 = vmatprep.subr.mxu0 0.0
      %246 = vmatpush2.msra.mxu0 0.0
      %247 = vmatprep.subr.mxu0 0.0
      %248 = vmatpush2.msra.mxu0 0.0
      %249 = vmatprep.subr.mxu0 0.0
      %250 = vmatpush2.msra.mxu0 0.0
      %251 = vmatprep.subr.mxu0 0.0
      %252 = vmatpush2.msra.mxu0 0.0
      %253 = vmatprep.subr.mxu0 0.0
      %254 = vmatpush2.msra.mxu0 0.0
      %255 = vmatprep.subr.mxu0 0.0
      %256 = vmatpush2.msra.mxu0 0.0
      %257 = vmatprep.subr.mxu0 0.0
      %258 = vmatpush2.msra.mxu0 0.0
      %259 = vmatprep.subr.mxu0 0.0
      %260 = vmatpush2.msra.mxu0 0.0
      %261 = vmatprep.subr.mxu0 0.0
      %262 = vmatpush2.msra.mxu0 0.0
      %263 = vmatprep.subr.mxu0 0.0
      %264 = vmatpush2.msra.mxu0 0.0
      %265 = vmatprep.subr.mxu0 0.0
      %266 = vmatpush2.msra.mxu0 0.0
      %267 = vmatprep.subr.mxu0 0.0
      %268 = vmatpush2.msra.mxu0 0.0
      %269 = vmatprep.subr.mxu0 0.0
      %270 = vmatpush2.msra.mxu0 0.0
      %271 = vmatprep.subr.mxu0 0.0
      %272 = vmatpush2.msra.mxu0 0.0
      %273 = vmatprep.subr.mxu0 0.0
      %274 = vmatpush2.msra.mxu0 0.0
      %275 = vmatprep.subr.mxu0 0.0
      %276 = vmatpush2.msra.mxu0 0.0
      %277 = vmatprep.mubr.f32.mxu0 0.0
      %278 = vmatmul.mubr.f32.gmra.mxu0 %v211
      %v279 = vpop.f32.mrf.mxu0
      %v280 = vadd.f32 0.0, %v279
      %v281 = vpop.f32.mrf.mxu0
      %v282 = vadd.f32 0.0, %v281
      %283 = vdwg.mxu0
      %284 = vst [vmem:[%s198] sm:$0xff] %v280
      %285 = vst [vmem:[%s198 + $0x8] sm:$0xff] %v282
      %s286 = smul.u32 2, %s18
      %p287 = scmp.lt.s32.totalorder %s17, 1
      %s288 = scalar_select %p287, %s17, 1
      %p289 = scmp.lt.s32.totalorder %s286, 1
      %s290 = scalar_select %p289, %s286, 1
      %s291 = smul.addr %s288, 2
      %s292 = sadd.s32 %s290, %s291
      %s293 = smul.addr %s292, 8
      %s294 = scalar_lea.vmem %s2, %s293
      // Predicated region
      $region29: #{_lambda_.11} parent=27 // pred_check
        %p295 = pneg %p99
      $region30: #{_lambda_.11} parent=27 // pred_check_branch
        %297 = sbr.rel (%p295) target = $region32
      $region31: #{_lambda_.11} parent=27 // pred_region
        %s298 = smul.u32 2, %s18
      $region32: #{_lambda_.11} parent=27 // pred_fallthru
        _
    $region28: #{_lambda_.11} parent=5 // pred_fallthru
      _
    %p299 = scmp.le.s32.totalorder 2, %s8
    // Predicated region
    $region33: #{_lambda_.11} parent=5 // pred_check
      %p300 = pneg %p299
    $region34: #{_lambda_.11} parent=5 // pred_check_branch
      %302 = sbr.rel (%p300) target = $region36
    $region35: #{_lambda_.11} parent=5 // pred_region
      %s303 = ssub.s32 %s8, 2
      // Predicated region
      $region37: #{_lambda_.11} parent=35 // pred_check
        %p304 = pneg %p105
      $region38: #{_lambda_.11} parent=35 // pred_check_branch
        %306 = sbr.rel (%p304) target = $region40
      $region39: #{_lambda_.11} parent=35 // pred_region
        %s307 = smul.u32 2, %s20
        %p308 = scmp.lt.s32.totalorder %s19, 1
        %s309 = scalar_select %p308, %s19, 1
        %p310 = scmp.lt.s32.totalorder %s307, 1
        %s311 = scalar_select %p310, %s307, 1
        %s312 = smul.addr %s309, 2
        %s313 = sadd.s32 %s311, %s312
        %s314 = smul.addr %s313, 8
        %s315 = scalar_lea.vmem %s2, %s314
      $region40: #{_lambda_.11} parent=35 // pred_fallthru
        _
    $region36: #{_lambda_.11} parent=5 // pred_fallthru
      _
  $region6: #{_lambda_.11} parent=0 // loop_footer
    %s12 = sadd.s32 1, %s8
  $region7: #{_lambda_.11} parent=0 // loop_footer_branch
    %7 = sbr.rel target = $region3
  $region8: #{_lambda_.11} parent=0 // loop_exit
    _

// kernel: _lambda_.8
$region0: #{_lambda_.8}
  #allocation0 [shape = 'u32[]', space=smem, size = 0x4, offset = 0x4, fixed_abs, tag = 'smem constant byte address 0x4 - core index']
  #allocation1 [shape = 'u32[144,128]{1,0:T(1,128)}', space=vmem, size = 0x12000, scoped, tag = 'internal scratch']
  %s0 = inlined_call_operand.vmem [shape: f32[2,8,32], index: 0, kind: input, shape index: {}]
  %s1 = inlined_call_operand.vmem [shape: f32[2,8,32], index: 1, kind: input, shape index: {}]
  %s2 = inlined_call_operand.vmem [shape: f32[32,64], index: 2, kind: input, shape index: {}]
  %s3 = inlined_call_operand.vmem [shape: f32[1,64], index: 3, kind: input, shape index: {}]
  %s4 = inlined_call_operand.vmem [shape: f32[32,64], index: 4, kind: input, shape index: {}]
  %s5 = inlined_call_operand.vmem [shape: f32[1,64], index: 5, kind: input, shape index: {}]
  %s6 = inlined_call_operand.vmem [shape: f32[32,64], index: 6, kind: input, shape index: {}]
  %s7 = inlined_call_operand.vmem [shape: f32[1,64], index: 7, kind: input, shape index: {}]
  %s8 = inlined_call_operand.vmem [shape: f32[2,32], index: 8, kind: input, shape index: {}, may-alias: {8,9,10,11,14}]
  %s9 = inlined_call_operand.vmem [shape: f32[2,32], index: 9, kind: input, shape index: {}, may-alias: {8,9,10,11,14}]
  %s10 = inlined_call_operand.vmem [shape: f32[2,32], index: 10, kind: input, shape index: {}, may-alias: {8,9,10,11,14}]
  %s11 = inlined_call_operand.vmem [shape: f32[2,32], index: 11, kind: input, shape index: {}, may-alias: {8,9,10,11,14}]
  %s12 = inlined_call_operand.vmem [shape: f32[32,32], index: 12, kind: input, shape index: {}]
  %s13 = inlined_call_operand.vmem [shape: f32[1,32], index: 13, kind: input, shape index: {}]
  %s14 = inlined_call_operand.vmem [shape: f32[2,32], index: 14, kind: input, shape index: {}, may-alias: {8,9,10,11,14}]
  %s15 = inlined_call_operand.vmem [shape: f32[2,8,32], index: 15, kind: output, shape index: {}]
  %s16 = sld [smem:[#allocation0]]
  $region93: #{_lambda_.8} parent=0
    _
  %s18 = ssub.s32 1, %s16
  %s19 = scalar_select 0, %s18, %s16
  loop: start=0, step=1, limit=4
  $region2: #{_lambda_.8} parent=0 // loop_pre_header
    _
  $region3: #{_lambda_.8} parent=0 // loop_header
    %s21 = sphi 0, %s25
    %p22 = scmp.ge.s32.totalorder %s21, 4
    %s31 = sphi 0, %s33
    %s34 = sphi 0, %s31
    %s35 = sphi 0, %s34
    %s51 = sphi 0, %s35
    %s57 = sphi 0, %s59
    %s60 = sphi 0, %s57
    %s61 = sphi 0, %s60
    %s77 = sphi 0, %s61
    %s81 = sphi 0, %s81
    %s83 = sphi 0, %s81
    %s84 = sphi 0, %s83
    %s98 = sphi 0, %s84
    %s102 = sphi 0, %s102
    %s104 = sphi 0, %s102
    %s105 = sphi 0, %s104
    %s119 = sphi 0, %s105
    %s123 = sphi 0, %s123
    %s125 = sphi 0, %s123
    %s126 = sphi 0, %s125
    %s140 = sphi 0, %s126
    %s144 = sphi 0, %s144
    %s146 = sphi 0, %s144
    %s147 = sphi 0, %s146
    %s161 = sphi 0, %s147
    %s165 = sphi 0, %s165
    %s167 = sphi 0, %s165
    %s168 = sphi 0, %s167
    %s182 = sphi 0, %s168
    %s186 = sphi 0, %s186
    %s188 = sphi 0, %s186
    %s189 = sphi 0, %s188
    %s203 = sphi 0, %s189
    %s207 = sphi 0, %s207
    %s209 = sphi 0, %s207
    %s210 = sphi 0, %s209
    %s224 = sphi 0, %s210
    %s228 = sphi 0, %s228
    %s230 = sphi 0, %s228
    %s231 = sphi 0, %s230
    %s245 = sphi 0, %s231
    %s249 = sphi 0, %s249
    %s251 = sphi 0, %s249
    %s252 = sphi 0, %s251
    %s266 = sphi 0, %s252
    %s270 = sphi 0, %s270
    %s272 = sphi 0, %s270
    %s273 = sphi 0, %s272
    %s287 = sphi 0, %s273
    %s291 = sphi 0, %s291
    %s293 = sphi 0, %s291
    %s294 = sphi 0, %s293
    %s308 = sphi 0, %s294
    %s312 = sphi 0, %s312
    %s314 = sphi 0, %s312
    %s315 = sphi 0, %s314
    %s329 = sphi 0, %s315
    %s333 = sphi 0, %s333
    %s335 = sphi 0, %s333
    %s336 = sphi 0, %s335
    %s350 = sphi 0, %s336
    %s356 = sphi 0, %s358
    %s359 = sphi 0, %s356
    %s360 = sphi 0, %s359
    %s376 = sphi 0, %s360
  $region4: #{_lambda_.8} parent=0 // loop_header_branch
    %24 = sbr.rel (%p22) target = $region8
  $region5: #{_lambda_.8} parent=0 // loop_body
    %s26 = ssub.s32 %s21, 1
    %s27 = ssub.s32 %s21, 2
    %s28 = sadd.s32 %s21, 1
    %s29 = ssub.s32 %s21, %s28
    %p30 = scmp.eq.s32.totalorder %s29, 0
    %s32 = sadd.s32 %s31, 1
    %s33 = scalar_select %p30, %s31, %s32
    %p36 = pneg %p30
    %p37 = scmp.eq.s32.totalorder %s21, 1
    %p38 = por %p36, %p37
    %p39 = scmp.ne.s32.totalorder %s31, %s34
    %p40 = scmp.eq.s32.totalorder %s21, 0
    %p41 = por %p39, %p40
    %p42 = scmp.ne.s32.totalorder %s31, %s34
    %p43 = scmp.eq.s32.totalorder %s26, 1
    %p44 = por %p42, %p43
    %p45 = scmp.ne.s32.totalorder %s34, %s35
    %p46 = scmp.eq.s32.totalorder %s26, 0
    %p47 = por %p45, %p46
    %p48 = scmp.ne.s32.totalorder %s34, %s35
    %p49 = scmp.eq.s32.totalorder %s27, 1
    %p50 = por %p48, %p49
    %p52 = scmp.ne.s32.totalorder %s35, %s51
    %p53 = scmp.eq.s32.totalorder %s27, 0
    %p54 = por %p52, %p53
    %s55 = ssub.s32 %s21, %s28
    %p56 = scmp.eq.s32.totalorder %s55, 0
    %s58 = sadd.s32 %s57, 1
    %s59 = scalar_select %p56, %s57, %s58
    %p62 = pneg %p56
    %p63 = scmp.eq.s32.totalorder %s21, 1
    %p64 = por %p62, %p63
    %p65 = scmp.ne.s32.totalorder %s57, %s60
    %p66 = scmp.eq.s32.totalorder %s21, 0
    %p67 = por %p65, %p66
    %p68 = scmp.ne.s32.totalorder %s57, %s60
    %p69 = scmp.eq.s32.totalorder %s26, 1
    %p70 = por %p68, %p69
    %p71 = scmp.ne.s32.totalorder %s60, %s61
    %p72 = scmp.eq.s32.totalorder %s26, 0
    %p73 = por %p71, %p72
    %p74 = scmp.ne.s32.totalorder %s60, %s61
    %p75 = scmp.eq.s32.totalorder %s27, 1
    %p76 = por %p74, %p75
    %p78 = scmp.ne.s32.totalorder %s61, %s77
    %p79 = scmp.eq.s32.totalorder %s27, 0
    %p80 = por %p78, %p79
    %s82 = sadd.s32 %s81, 1
    %p85 = scmp.eq.s32.totalorder %s21, 1
    %p86 = scmp.ne.s32.totalorder %s81, %s83
    %p87 = scmp.eq.s32.totalorder %s21, 0
    %p88 = por %p86, %p87
    %p89 = scmp.ne.s32.totalorder %s81, %s83
    %p90 = scmp.eq.s32.totalorder %s26, 1
    %p91 = por %p89, %p90
    %p92 = scmp.ne.s32.totalorder %s83, %s84
    %p93 = scmp.eq.s32.totalorder %s26, 0
    %p94 = por %p92, %p93
    %p95 = scmp.ne.s32.totalorder %s83, %s84
    %p96 = scmp.eq.s32.totalorder %s27, 1
    %p97 = por %p95, %p96
    %p99 = scmp.ne.s32.totalorder %s84, %s98
    %p100 = scmp.eq.s32.totalorder %s27, 0
    %p101 = por %p99, %p100
    %s103 = sadd.s32 %s102, 1
    %p106 = scmp.eq.s32.totalorder %s21, 1
    %p107 = scmp.ne.s32.totalorder %s102, %s104
    %p108 = scmp.eq.s32.totalorder %s21, 0
    %p109 = por %p107, %p108
    %p110 = scmp.ne.s32.totalorder %s102, %s104
    %p111 = scmp.eq.s32.totalorder %s26, 1
    %p112 = por %p110, %p111
    %p113 = scmp.ne.s32.totalorder %s104, %s105
    %p114 = scmp.eq.s32.totalorder %s26, 0
    %p115 = por %p113, %p114
    %p116 = scmp.ne.s32.totalorder %s104, %s105
    %p117 = scmp.eq.s32.totalorder %s27, 1
    %p118 = por %p116, %p117
    %p120 = scmp.ne.s32.totalorder %s105, %s119
    %p121 = scmp.eq.s32.totalorder %s27, 0
    %p122 = por %p120, %p121
    %s124 = sadd.s32 %s123, 1
    %p127 = scmp.eq.s32.totalorder %s21, 1
    %p128 = scmp.ne.s32.totalorder %s123, %s125
    %p129 = scmp.eq.s32.totalorder %s21, 0
    %p130 = por %p128, %p129
    %p131 = scmp.ne.s32.totalorder %s123, %s125
    %p132 = scmp.eq.s32.totalorder %s26, 1
    %p133 = por %p131, %p132
    %p134 = scmp.ne.s32.totalorder %s125, %s126
    %p135 = scmp.eq.s32.totalorder %s26, 0
    %p136 = por %p134, %p135
    %p137 = scmp.ne.s32.totalorder %s125, %s126
    %p138 = scmp.eq.s32.totalorder %s27, 1
    %p139 = por %p137, %p138
    %p141 = scmp.ne.s32.totalorder %s126, %s140
    %p142 = scmp.eq.s32.totalorder %s27, 0
    %p143 = por %p141, %p142
    %s145 = sadd.s32 %s144, 1
    %p148 = scmp.eq.s32.totalorder %s21, 1
    %p149 = scmp.ne.s32.totalorder %s144, %s146
    %p150 = scmp.eq.s32.totalorder %s21, 0
    %p151 = por %p149, %p150
    %p152 = scmp.ne.s32.totalorder %s144, %s146
    %p153 = scmp.eq.s32.totalorder %s26, 1
    %p154 = por %p152, %p153
    %p155 = scmp.ne.s32.totalorder %s146, %s147
    %p156 = scmp.eq.s32.totalorder %s26, 0
    %p157 = por %p155, %p156
    %p158 = scmp.ne.s32.totalorder %s146, %s147
    %p159 = scmp.eq.s32.totalorder %s27, 1
    %p160 = por %p158, %p159
    %p162 = scmp.ne.s32.totalorder %s147, %s161
    %p163 = scmp.eq.s32.totalorder %s27, 0
    %p164 = por %p162, %p163
    %s166 = sadd.s32 %s165, 1
    %p169 = scmp.eq.s32.totalorder %s21, 1
    %p170 = scmp.ne.s32.totalorder %s165, %s167
    %p171 = scmp.eq.s32.totalorder %s21, 0
    %p172 = por %p170, %p171
    %p173 = scmp.ne.s32.totalorder %s165, %s167
    %p174 = scmp.eq.s32.totalorder %s26, 1
    %p175 = por %p173, %p174
    %p176 = scmp.ne.s32.totalorder %s167, %s168
    %p177 = scmp.eq.s32.totalorder %s26, 0
    %p178 = por %p176, %p177
    %p179 = scmp.ne.s32.totalorder %s167, %s168
    %p180 = scmp.eq.s32.totalorder %s27, 1
    %p181 = por %p179, %p180
    %p183 = scmp.ne.s32.totalorder %s168, %s182
    %p184 = scmp.eq.s32.totalorder %s27, 0
    %p185 = por %p183, %p184
    %s187 = sadd.s32 %s186, 1
    %p190 = scmp.eq.s32.totalorder %s21, 1
    %p191 = scmp.ne.s32.totalorder %s186, %s188
    %p192 = scmp.eq.s32.totalorder %s21, 0
    %p193 = por %p191, %p192
    %p194 = scmp.ne.s32.totalorder %s186, %s188
    %p195 = scmp.eq.s32.totalorder %s26, 1
    %p196 = por %p194, %p195
    %p197 = scmp.ne.s32.totalorder %s188, %s189
    %p198 = scmp.eq.s32.totalorder %s26, 0
    %p199 = por %p197, %p198
    %p200 = scmp.ne.s32.totalorder %s188, %s189
    %p201 = scmp.eq.s32.totalorder %s27, 1
    %p202 = por %p200, %p201
    %p204 = scmp.ne.s32.totalorder %s189, %s203
    %p205 = scmp.eq.s32.totalorder %s27, 0
    %p206 = por %p204, %p205
    %s208 = sadd.s32 %s207, 1
    %p211 = scmp.eq.s32.totalorder %s21, 1
    %p212 = scmp.ne.s32.totalorder %s207, %s209
    %p213 = scmp.eq.s32.totalorder %s21, 0
    %p214 = por %p212, %p213
    %p215 = scmp.ne.s32.totalorder %s207, %s209
    %p216 = scmp.eq.s32.totalorder %s26, 1
    %p217 = por %p215, %p216
    %p218 = scmp.ne.s32.totalorder %s209, %s210
    %p219 = scmp.eq.s32.totalorder %s26, 0
    %p220 = por %p218, %p219
    %p221 = scmp.ne.s32.totalorder %s209, %s210
    %p222 = scmp.eq.s32.totalorder %s27, 1
    %p223 = por %p221, %p222
    %p225 = scmp.ne.s32.totalorder %s210, %s224
    %p226 = scmp.eq.s32.totalorder %s27, 0
    %p227 = por %p225, %p226
    %s229 = sadd.s32 %s228, 1
    %p232 = scmp.eq.s32.totalorder %s21, 1
    %p233 = scmp.ne.s32.totalorder %s228, %s230
    %p234 = scmp.eq.s32.totalorder %s21, 0
    %p235 = por %p233, %p234
    %p236 = scmp.ne.s32.totalorder %s228, %s230
    %p237 = scmp.eq.s32.totalorder %s26, 1
    %p238 = por %p236, %p237
    %p239 = scmp.ne.s32.totalorder %s230, %s231
    %p240 = scmp.eq.s32.totalorder %s26, 0
    %p241 = por %p239, %p240
    %p242 = scmp.ne.s32.totalorder %s230, %s231
    %p243 = scmp.eq.s32.totalorder %s27, 1
    %p244 = por %p242, %p243
    %p246 = scmp.ne.s32.totalorder %s231, %s245
    %p247 = scmp.eq.s32.totalorder %s27, 0
    %p248 = por %p246, %p247
    %s250 = sadd.s32 %s249, 1
    %p253 = scmp.eq.s32.totalorder %s21, 1
    %p254 = scmp.ne.s32.totalorder %s249, %s251
    %p255 = scmp.eq.s32.totalorder %s21, 0
    %p256 = por %p254, %p255
    %p257 = scmp.ne.s32.totalorder %s249, %s251
    %p258 = scmp.eq.s32.totalorder %s26, 1
    %p259 = por %p257, %p258
    %p260 = scmp.ne.s32.totalorder %s251, %s252
    %p261 = scmp.eq.s32.totalorder %s26, 0
    %p262 = por %p260, %p261
    %p263 = scmp.ne.s32.totalorder %s251, %s252
    %p264 = scmp.eq.s32.totalorder %s27, 1
    %p265 = por %p263, %p264
    %p267 = scmp.ne.s32.totalorder %s252, %s266
    %p268 = scmp.eq.s32.totalorder %s27, 0
    %p269 = por %p267, %p268
    %s271 = sadd.s32 %s270, 1
    %p274 = scmp.eq.s32.totalorder %s21, 1
    %p275 = scmp.ne.s32.totalorder %s270, %s272
    %p276 = scmp.eq.s32.totalorder %s21, 0
    %p277 = por %p275, %p276
    %p278 = scmp.ne.s32.totalorder %s270, %s272
    %p279 = scmp.eq.s32.totalorder %s26, 1
    %p280 = por %p278, %p279
    %p281 = scmp.ne.s32.totalorder %s272, %s273
    %p282 = scmp.eq.s32.totalorder %s26, 0
    %p283 = por %p281, %p282
    %p284 = scmp.ne.s32.totalorder %s272, %s273
    %p285 = scmp.eq.s32.totalorder %s27, 1
    %p286 = por %p284, %p285
    %p288 = scmp.ne.s32.totalorder %s273, %s287
    %p289 = scmp.eq.s32.totalorder %s27, 0
    %p290 = por %p288, %p289
    %s292 = sadd.s32 %s291, 1
    %p295 = scmp.eq.s32.totalorder %s21, 1
    %p296 = scmp.ne.s32.totalorder %s291, %s293
    %p297 = scmp.eq.s32.totalorder %s21, 0
    %p298 = por %p296, %p297
    %p299 = scmp.ne.s32.totalorder %s291, %s293
    %p300 = scmp.eq.s32.totalorder %s26, 1
    %p301 = por %p299, %p300
    %p302 = scmp.ne.s32.totalorder %s293, %s294
    %p303 = scmp.eq.s32.totalorder %s26, 0
    %p304 = por %p302, %p303
    %p305 = scmp.ne.s32.totalorder %s293, %s294
    %p306 = scmp.eq.s32.totalorder %s27, 1
    %p307 = por %p305, %p306
    %p309 = scmp.ne.s32.totalorder %s294, %s308
    %p310 = scmp.eq.s32.totalorder %s27, 0
    %p311 = por %p309, %p310
    %s313 = sadd.s32 %s312, 1
    %p316 = scmp.eq.s32.totalorder %s21, 1
    %p317 = scmp.ne.s32.totalorder %s312, %s314
    %p318 = scmp.eq.s32.totalorder %s21, 0
    %p319 = por %p317, %p318
    %p320 = scmp.ne.s32.totalorder %s312, %s314
    %p321 = scmp.eq.s32.totalorder %s26, 1
    %p322 = por %p320, %p321
    %p323 = scmp.ne.s32.totalorder %s314, %s315
    %p324 = scmp.eq.s32.totalorder %s26, 0
    %p325 = por %p323, %p324
    %p326 = scmp.ne.s32.totalorder %s314, %s315
    %p327 = scmp.eq.s32.totalorder %s27, 1
    %p328 = por %p326, %p327
    %p330 = scmp.ne.s32.totalorder %s315, %s329
    %p331 = scmp.eq.s32.totalorder %s27, 0
    %p332 = por %p330, %p331
    %s334 = sadd.s32 %s333, 1
    %p337 = scmp.eq.s32.totalorder %s21, 1
    %p338 = scmp.ne.s32.totalorder %s333, %s335
    %p339 = scmp.eq.s32.totalorder %s21, 0
    %p340 = por %p338, %p339
    %p341 = scmp.ne.s32.totalorder %s333, %s335
    %p342 = scmp.eq.s32.totalorder %s26, 1
    %p343 = por %p341, %p342
    %p344 = scmp.ne.s32.totalorder %s335, %s336
    %p345 = scmp.eq.s32.totalorder %s26, 0
    %p346 = por %p344, %p345
    %p347 = scmp.ne.s32.totalorder %s335, %s336
    %p348 = scmp.eq.s32.totalorder %s27, 1
    %p349 = por %p347, %p348
    %p351 = scmp.ne.s32.totalorder %s336, %s350
    %p352 = scmp.eq.s32.totalorder %s27, 0
    %p353 = por %p351, %p352
    %s354 = ssub.s32 %s21, %s28
    %p355 = scmp.eq.s32.totalorder %s354, 0
    %s357 = sadd.s32 %s356, 1
    %s358 = scalar_select %p355, %s356, %s357
    %p361 = pneg %p355
    %p362 = scmp.eq.s32.totalorder %s21, 1
    %p363 = por %p361, %p362
    %p364 = scmp.ne.s32.totalorder %s356, %s359
    %p365 = scmp.eq.s32.totalorder %s21, 0
    %p366 = por %p364, %p365
    %p367 = scmp.ne.s32.totalorder %s356, %s359
    %p368 = scmp.eq.s32.totalorder %s26, 1
    %p369 = por %p367, %p368
    %p370 = scmp.ne.s32.totalorder %s359, %s360
    %p371 = scmp.eq.s32.totalorder %s26, 0
    %p372 = por %p370, %p371
    %p373 = scmp.ne.s32.totalorder %s359, %s360
    %p374 = scmp.eq.s32.totalorder %s27, 1
    %p375 = por %p373, %p374
    %p377 = scmp.ne.s32.totalorder %s360, %s376
    %p378 = scmp.eq.s32.totalorder %s27, 0
    %p379 = por %p377, %p378
    %p380 = scmp.le.s32.totalorder 1, %s21
    %p381 = scmp.lt.s32.totalorder %s21, 3
    %p382 = pnand %p380, %p381
    %p383 = pneg %p382
    // Predicated region
    $region9: #{_lambda_.8} parent=5 // pred_check
      _
    $region10: #{_lambda_.8} parent=5 // pred_check_branch
      %385 = sbr.rel (%p382) target = $region12
    $region11: #{_lambda_.8} parent=5 // pred_region
      %s386 = ssub.s32 %s21, 1
      // Predicated region
      $region13: #{_lambda_.8} parent=11 // pred_check
        %p387 = pneg %p94
      $region14: #{_lambda_.8} parent=11 // pred_check_branch
        %389 = sbr.rel (%p387) target = $region16
      $region15: #{_lambda_.8} parent=11 // pred_region
        _
      $region16: #{_lambda_.8} parent=11 // pred_fallthru
        _
      // Predicated region
      $region17: #{_lambda_.8} parent=11 // pred_check
        %p390 = pneg %p115
      $region18: #{_lambda_.8} parent=11 // pred_check_branch
        %392 = sbr.rel (%p390) target = $region20
      $region19: #{_lambda_.8} parent=11 // pred_region
        _
      $region20: #{_lambda_.8} parent=11 // pred_fallthru
        _
      // Predicated region
      $region21: #{_lambda_.8} parent=11 // pred_check
        %p393 = pneg %p136
      $region22: #{_lambda_.8} parent=11 // pred_check_branch
        %395 = sbr.rel (%p393) target = $region24
      $region23: #{_lambda_.8} parent=11 // pred_region
        _
      $region24: #{_lambda_.8} parent=11 // pred_fallthru
        _
      // Predicated region
      $region25: #{_lambda_.8} parent=11 // pred_check
        %p396 = pneg %p157
      $region26: #{_lambda_.8} parent=11 // pred_check_branch
        %398 = sbr.rel (%p396) target = $region28
      $region27: #{_lambda_.8} parent=11 // pred_region
        _
      $region28: #{_lambda_.8} parent=11 // pred_fallthru
        _
      // Predicated region
      $region29: #{_lambda_.8} parent=11 // pred_check
        %p399 = pneg %p178
      $region30: #{_lambda_.8} parent=11 // pred_check_branch
        %401 = sbr.rel (%p399) target = $region32
      $region31: #{_lambda_.8} parent=11 // pred_region
        _
      $region32: #{_lambda_.8} parent=11 // pred_fallthru
        _
      // Predicated region
      $region33: #{_lambda_.8} parent=11 // pred_check
        %p402 = pneg %p199
      $region34: #{_lambda_.8} parent=11 // pred_check_branch
        %404 = sbr.rel (%p402) target = $region36
      $region35: #{_lambda_.8} parent=11 // pred_region
        _
      $region36: #{_lambda_.8} parent=11 // pred_fallthru
        _
      // Predicated region
      $region37: #{_lambda_.8} parent=11 // pred_check
        %p405 = pneg %p220
      $region38: #{_lambda_.8} parent=11 // pred_check_branch
        %407 = sbr.rel (%p405) target = $region40
      $region39: #{_lambda_.8} parent=11 // pred_region
        _
      $region40: #{_lambda_.8} parent=11 // pred_fallthru
        _
      // Predicated region
      $region41: #{_lambda_.8} parent=11 // pred_check
        %p408 = pneg %p241
      $region42: #{_lambda_.8} parent=11 // pred_check_branch
        %410 = sbr.rel (%p408) target = $region44
      $region43: #{_lambda_.8} parent=11 // pred_region
        _
      $region44: #{_lambda_.8} parent=11 // pred_fallthru
        _
      // Predicated region
      $region45: #{_lambda_.8} parent=11 // pred_check
        %p411 = pneg %p262
      $region46: #{_lambda_.8} parent=11 // pred_check_branch
        %413 = sbr.rel (%p411) target = $region48
      $region47: #{_lambda_.8} parent=11 // pred_region
        _
      $region48: #{_lambda_.8} parent=11 // pred_fallthru
        _
      // Predicated region
      $region49: #{_lambda_.8} parent=11 // pred_check
        %p414 = pneg %p283
      $region50: #{_lambda_.8} parent=11 // pred_check_branch
        %416 = sbr.rel (%p414) target = $region52
      $region51: #{_lambda_.8} parent=11 // pred_region
        _
      $region52: #{_lambda_.8} parent=11 // pred_fallthru
        _
      // Predicated region
      $region53: #{_lambda_.8} parent=11 // pred_check
        %p417 = pneg %p304
      $region54: #{_lambda_.8} parent=11 // pred_check_branch
        %419 = sbr.rel (%p417) target = $region56
      $region55: #{_lambda_.8} parent=11 // pred_region
        _
      $region56: #{_lambda_.8} parent=11 // pred_fallthru
        _
      // Predicated region
      $region57: #{_lambda_.8} parent=11 // pred_check
        %p420 = pneg %p325
      $region58: #{_lambda_.8} parent=11 // pred_check_branch
        %422 = sbr.rel (%p420) target = $region60
      $region59: #{_lambda_.8} parent=11 // pred_region
        _
      $region60: #{_lambda_.8} parent=11 // pred_fallthru
        _
      // Predicated region
      $region61: #{_lambda_.8} parent=11 // pred_check
        %p423 = pneg %p346
      $region62: #{_lambda_.8} parent=11 // pred_check_branch
        %425 = sbr.rel (%p423) target = $region64
      $region63: #{_lambda_.8} parent=11 // pred_region
        _
      $region64: #{_lambda_.8} parent=11 // pred_fallthru
        _
    $region12: #{_lambda_.8} parent=5 // pred_fallthru
      _
    %p426 = scmp.lt.s32.totalorder %s21, 2
    // Predicated region
    $region65: #{_lambda_.8} parent=5 // pred_check
      %p427 = pneg %p426
    $region66: #{_lambda_.8} parent=5 // pred_check_branch
      %429 = sbr.rel (%p427) target = $region68
    $region67: #{_lambda_.8} parent=5 // pred_region
      // Predicated region
      $region69: #{_lambda_.8} parent=67 // pred_check
        %p430 = pneg %p41
      $region70: #{_lambda_.8} parent=67 // pred_check_branch
        %432 = sbr.rel (%p430) target = $region72
      $region71: #{_lambda_.8} parent=67 // pred_region
        %p433 = scmp.lt.s32.totalorder %s21, 1
        %s434 = scalar_select %p433, %s21, 1
        %s435 = smul.addr %s434, 8
        %s436 = scalar_lea.vmem %s0, %s435
      $region72: #{_lambda_.8} parent=67 // pred_fallthru
        _
      // Predicated region
      $region73: #{_lambda_.8} parent=67 // pred_check
        %p437 = pneg %p67
      $region74: #{_lambda_.8} parent=67 // pred_check_branch
        %439 = sbr.rel (%p437) target = $region76
      $region75: #{_lambda_.8} parent=67 // pred_region
        %p440 = scmp.lt.s32.totalorder %s21, 1
        %s441 = scalar_select %p440, %s21, 1
        %s442 = smul.addr %s441, 8
        %s443 = scalar_lea.vmem %s1, %s442
      $region76: #{_lambda_.8} parent=67 // pred_fallthru
        _
    $region68: #{_lambda_.8} parent=5 // pred_fallthru
      _
    %p444 = scmp.le.s32.totalorder 1, %s21
    %p445 = scmp.lt.s32.totalorder %s21, 3
    %p446 = pnand %p444, %p445
    %p447 = pneg %p446
    // Predicated region
    $region77: #{_lambda_.8} parent=5 // pred_check
      _
    $region78: #{_lambda_.8} parent=5 // pred_check_branch
      %449 = sbr.rel (%p446) target = $region80
    $region79: #{_lambda_.8} parent=5 // pred_region
      %s450 = ssub.s32 %s21, 1
      %p451 = scmp.lt.s32.totalorder %s26, 1
      %s452 = scalar_select %p451, %s26, 1
      %s453 = smul.addr %s452, 8
      %s454 = scalar_lea.vmem %s0, %s453
      %p455 = pneg %p47
      %p456 = pneg %p44
      %p457 = scmp.lt.s32.totalorder %s26, 1
      %s458 = scalar_select %p457, %s26, 1
      %s459 = smul.addr %s458, 8
      %s460 = scalar_lea.vmem %s1, %s459
      %p461 = pneg %p73
      %p462 = pneg %p70
      %p463 = pneg %p94
      %p464 = pneg %p91
      %p465 = pneg %p115
      %p466 = pneg %p112
      %p467 = pneg %p136
      %p468 = pneg %p133
      %p469 = pneg %p157
      %p470 = pneg %p154
      %p471 = pneg %p178
      %p472 = pneg %p175
      %p473 = pneg %p199
      %p474 = pneg %p196
      %p475 = pneg %p220
      %p476 = pneg %p217
      %p477 = pneg %p241
      %p478 = pneg %p238
      %p479 = pneg %p262
      %p480 = pneg %p259
      %p481 = pneg %p283
      %p482 = pneg %p280
      %p483 = pneg %p304
      %p484 = pneg %p301
      %p485 = pneg %p325
      %p486 = pneg %p322
      %p487 = pneg %p346
      %p488 = pneg %p343
      %p489 = pneg %p372
      %p490 = pneg %p369
      %p491 = scmp.lt.s32.totalorder %s26, 1
      %s492 = scalar_select %p491, %s26, 1
      %s493 = smul.addr %s492, 8
      %s494 = scalar_lea.vmem %s15, %s493
      %p495 = scmp.lt.s32.totalorder %s26, 1
      %s496 = scalar_select %p495, %s26, 1
      %s497 = smul.addr %s496, 8
      %s498 = scalar_lea.vmem %s0, %s497
      %p499 = scmp.lt.s32.totalorder %s26, 1
      %s500 = scalar_select %p499, %s26, 1
      %s501 = smul.addr %s500, 8
      %s502 = scalar_lea.vmem %s1, %s501
      %p503 = scmp.lt.s32.totalorder %s26, 1
      %s504 = scalar_select %p503, %s26, 1
      %s505 = smul.addr %s504, 8
      %s506 = scalar_lea.vmem %s15, %s505
      %v507 = vld [vmem:[%s498] sm:$0xff]
      %v508 = vld [vmem:[%s502] sm:$0xff]
      %v509 = vld [vmem:[%s2] sm:$0xff]
      %v510 = vld [vmem:[%s2 + $0x8] sm:$0xff]
      %v511 = vld [vmem:[%s2 + $0x10] sm:$0xff]
      %v512 = vld [vmem:[%s2 + $0x18] sm:$0xff]
      %v513 = vld [vmem:[%s3] sm:$0x1]
      %v515 = vlaneseq
      %v516 = vshrl.u32 %v515, 7
      %v517 = vsub.s32 0, %v516
      %v518 = vrot.slane %v513, %v517
      %vm520 = vcmask 261120
      %v522 = vsel %vm520, %v507, 0
      %524 = vmatprep.subr.mxu0 0.0
      %525 = vmatpush1.msra.mxu0 0.0
      %526 = vmatprep.subr.mxu0 0.0
      %527 = vmatpush1.msra.mxu0 0.0
      %528 = vmatprep.subr.mxu0 0.0
      %529 = vmatpush1.msra.mxu0 0.0
      %530 = vmatprep.subr.mxu0 0.0
      %531 = vmatpush1.msra.mxu0 0.0
      %532 = vmatprep.subr.mxu0 0.0
      %533 = vmatpush1.msra.mxu0 0.0
      %534 = vmatprep.subr.mxu0 0.0
      %535 = vmatpush1.msra.mxu0 0.0
      %536 = vmatprep.subr.mxu0 0.0
      %537 = vmatpush1.msra.mxu0 0.0
      %538 = vmatprep.subr.mxu0 0.0
      %539 = vmatpush1.msra.mxu0 0.0
      %540 = vmatprep.subr.mxu0 0.0
      %541 = vmatpush1.msra.mxu0 0.0
      %542 = vmatprep.subr.mxu0 0.0
      %543 = vmatpush1.msra.mxu0 0.0
      %544 = vmatprep.subr.mxu0 0.0
      %545 = vmatpush1.msra.mxu0 0.0
      %546 = vmatprep.subr.mxu0 0.0
      %547 = vmatpush1.msra.mxu0 0.0
      %548 = vmatprep.subr.mxu0 0.0
      %549 = vmatpush1.msra.mxu0 %v512
      %550 = vmatprep.subr.mxu0 0.0
      %551 = vmatpush1.msra.mxu0 %v511
      %552 = vmatprep.subr.mxu0 0.0
      %553 = vmatpush1.msra.mxu0 %v510
      %554 = vmatprep.subr.mxu0 0.0
      %555 = vmatpush1.msra.mxu0 %v509
      %556 = vmatprep.subr.mxu0 0.0
      %557 = vmatpush2.msra.mxu0 0.0
      %558 = vmatprep.subr.mxu0 0.0
      %559 = vmatpush2.msra.mxu0 0.0
      %560 = vmatprep.subr.mxu0 0.0
      %561 = vmatpush2.msra.mxu0 0.0
      %562 = vmatprep.subr.mxu0 0.0
      %563 = vmatpush2.msra.mxu0 0.0
      %564 = vmatprep.subr.mxu0 0.0
      %565 = vmatpush2.msra.mxu0 0.0
      %566 = vmatprep.subr.mxu0 0.0
      %567 = vmatpush2.msra.mxu0 0.0
      %568 = vmatprep.subr.mxu0 0.0
      %569 = vmatpush2.msra.mxu0 0.0
      %570 = vmatprep.subr.mxu0 0.0
      %571 = vmatpush2.msra.mxu0 0.0
      %572 = vmatprep.subr.mxu0 0.0
      %573 = vmatpush2.msra.mxu0 0.0
      %574 = vmatprep.subr.mxu0 0.0
      %575 = vmatpush2.msra.mxu0 0.0
      %576 = vmatprep.subr.mxu0 0.0
      %577 = vmatpush2.msra.mxu0 0.0
      %578 = vmatprep.subr.mxu0 0.0
      %579 = vmatpush2.msra.mxu0 0.0
      %580 = vmatprep.subr.mxu0 0.0
      %581 = vmatpush2.msra.mxu0 0.0
      %582 = vmatprep.subr.mxu0 0.0
      %583 = vmatpush2.msra.mxu0 0.0
      %584 = vmatprep.subr.mxu0 0.0
      %585 = vmatpush2.msra.mxu0 0.0
      %586 = vmatprep.subr.mxu0 0.0
      %587 = vmatpush2.msra.mxu0 0.0
      %588 = vmatprep.mubr.f32.mxu0 0.0
      %589 = vmatmul.mubr.f32.gmra.mxu0 %v522
      %v590 = vpop.f32.mrf.mxu0
      %v591 = vadd.f32 %v518, %v590
      %v592 = vpop.f32.mrf.mxu0
      %593 = vdwg.mxu0
      %v594 = vld [vmem:[%s4] sm:$0xff]
      %v595 = vld [vmem:[%s4 + $0x8] sm:$0xff]
      %v596 = vld [vmem:[%s4 + $0x10] sm:$0xff]
      %v597 = vld [vmem:[%s4 + $0x18] sm:$0xff]
      %v598 = vld [vmem:[%s5] sm:$0x1]
      %v600 = vlaneseq
      %v601 = vshrl.u32 %v600, 7
      %v602 = vsub.s32 0, %v601
      %v603 = vrot.slane %v598, %v602
      %v606 = vsel %vm520, %v508, 0
      %608 = vmatprep.subr.mxu0 0.0
      %609 = vmatpush1.msra.mxu0 0.0
      %610 = vmatprep.subr.mxu0 0.0
      %611 = vmatpush1.msra.mxu0 0.0
      %612 = vmatprep.subr.mxu0 0.0
      %613 = vmatpush1.msra.mxu0 0.0
      %614 = vmatprep.subr.mxu0 0.0
      %615 = vmatpush1.msra.mxu0 0.0
      %616 = vmatprep.subr.mxu0 0.0
      %617 = vmatpush1.msra.mxu0 0.0
      %618 = vmatprep.subr.mxu0 0.0
      %619 = vmatpush1.msra.mxu0 0.0
      %620 = vmatprep.subr.mxu0 0.0
      %621 = vmatpush1.msra.mxu0 0.0
      %622 = vmatprep.subr.mxu0 0.0
      %623 = vmatpush1.msra.mxu0 0.0
      %624 = vmatprep.subr.mxu0 0.0
      %625 = vmatpush1.msra.mxu0 0.0
      %626 = vmatprep.subr.mxu0 0.0
      %627 = vmatpush1.msra.mxu0 0.0
      %628 = vmatprep.subr.mxu0 0.0
      %629 = vmatpush1.msra.mxu0 0.0
      %630 = vmatprep.subr.mxu0 0.0
      %631 = vmatpush1.msra.mxu0 0.0
      %632 = vmatprep.subr.mxu0 0.0
      %633 = vmatpush1.msra.mxu0 %v597
      %634 = vmatprep.subr.mxu0 0.0
      %635 = vmatpush1.msra.mxu0 %v596
      %636 = vmatprep.subr.mxu0 0.0
      %637 = vmatpush1.msra.mxu0 %v595
      %638 = vmatprep.subr.mxu0 0.0
      %639 = vmatpush1.msra.mxu0 %v594
      %640 = vmatprep.subr.mxu0 0.0
      %641 = vmatpush2.msra.mxu0 0.0
      %642 = vmatprep.subr.mxu0 0.0
      %643 = vmatpush2.msra.mxu0 0.0
      %644 = vmatprep.subr.mxu0 0.0
      %645 = vmatpush2.msra.mxu0 0.0
      %646 = vmatprep.subr.mxu0 0.0
      %647 = vmatpush2.msra.mxu0 0.0
      %648 = vmatprep.subr.mxu0 0.0
      %649 = vmatpush2.msra.mxu0 0.0
      %650 = vmatprep.subr.mxu0 0.0
      %651 = vmatpush2.msra.mxu0 0.0
      %652 = vmatprep.subr.mxu0 0.0
      %653 = vmatpush2.msra.mxu0 0.0
      %654 = vmatprep.subr.mxu0 0.0
      %655 = vmatpush2.msra.mxu0 0.0
      %656 = vmatprep.subr.mxu0 0.0
      %657 = vmatpush2.msra.mxu0 0.0
      %658 = vmatprep.subr.mxu0 0.0
      %659 = vmatpush2.msra.mxu0 0.0
      %660 = vmatprep.subr.mxu0 0.0
      %661 = vmatpush2.msra.mxu0 0.0
      %662 = vmatprep.subr.mxu0 0.0
      %663 = vmatpush2.msra.mxu0 0.0
      %664 = vmatprep.subr.mxu0 0.0
      %665 = vmatpush2.msra.mxu0 0.0
      %666 = vmatprep.subr.mxu0 0.0
      %667 = vmatpush2.msra.mxu0 0.0
      %668 = vmatprep.subr.mxu0 0.0
      %669 = vmatpush2.msra.mxu0 0.0
      %670 = vmatprep.subr.mxu0 0.0
      %671 = vmatpush2.msra.mxu0 0.0
      %672 = vmatprep.mubr.f32.mxu0 0.0
      %673 = vmatmul.mubr.f32.gmra.mxu0 %v606
      %v674 = vpop.f32.mrf.mxu0
      %v675 = vadd.f32 %v603, %v674
      %v676 = vpop.f32.mrf.mxu0
      %677 = vdwg.mxu0
      %v678 = vmul.f32 %v675, %v591
      %v679 = vld [vmem:[%s6] sm:$0xff]
      %v680 = vld [vmem:[%s6 + $0x8] sm:$0xff]
      %v681 = vld [vmem:[%s6 + $0x10] sm:$0xff]
      %v682 = vld [vmem:[%s6 + $0x18] sm:$0xff]
      %v683 = vld [vmem:[%s7] sm:$0x1]
      %v685 = vlaneseq
      %v686 = vshrl.u32 %v685, 7
      %v687 = vsub.s32 0, %v686
      %v688 = vrot.slane %v683, %v687
      %v691 = vsel %vm520, %v678, 0
      %693 = vmatprep.subr.mxu0 0.0
      %694 = vmatpush1.msra.mxu0 0.0
      %695 = vmatprep.subr.mxu0 0.0
      %696 = vmatpush1.msra.mxu0 0.0
      %697 = vmatprep.subr.mxu0 0.0
      %698 = vmatpush1.msra.mxu0 0.0
      %699 = vmatprep.subr.mxu0 0.0
      %700 = vmatpush1.msra.mxu0 0.0
      %701 = vmatprep.subr.mxu0 0.0
      %702 = vmatpush1.msra.mxu0 0.0
      %703 = vmatprep.subr.mxu0 0.0
      %704 = vmatpush1.msra.mxu0 0.0
      %705 = vmatprep.subr.mxu0 0.0
      %706 = vmatpush1.msra.mxu0 0.0
      %707 = vmatprep.subr.mxu0 0.0
      %708 = vmatpush1.msra.mxu0 0.0
      %709 = vmatprep.subr.mxu0 0.0
      %710 = vmatpush1.msra.mxu0 0.0
      %711 = vmatprep.subr.mxu0 0.0
      %712 = vmatpush1.msra.mxu0 0.0
      %713 = vmatprep.subr.mxu0 0.0
      %714 = vmatpush1.msra.mxu0 0.0
      %715 = vmatprep.subr.mxu0 0.0
      %716 = vmatpush1.msra.mxu0 0.0
      %717 = vmatprep.subr.mxu0 0.0
      %718 = vmatpush1.msra.mxu0 %v682
      %719 = vmatprep.subr.mxu0 0.0
      %720 = vmatpush1.msra.mxu0 %v681
      %721 = vmatprep.subr.mxu0 0.0
      %722 = vmatpush1.msra.mxu0 %v680
      %723 = vmatprep.subr.mxu0 0.0
      %724 = vmatpush1.msra.mxu0 %v679
      %725 = vmatprep.subr.mxu0 0.0
      %726 = vmatpush2.msra.mxu0 0.0
      %727 = vmatprep.subr.mxu0 0.0
      %728 = vmatpush2.msra.mxu0 0.0
      %729 = vmatprep.subr.mxu0 0.0
      %730 = vmatpush2.msra.mxu0 0.0
      %731 = vmatprep.subr.mxu0 0.0
      %732 = vmatpush2.msra.mxu0 0.0
      %733 = vmatprep.subr.mxu0 0.0
      %734 = vmatpush2.msra.mxu0 0.0
      %735 = vmatprep.subr.mxu0 0.0
      %736 = vmatpush2.msra.mxu0 0.0
      %737 = vmatprep.subr.mxu0 0.0
      %738 = vmatpush2.msra.mxu0 0.0
      %739 = vmatprep.subr.mxu0 0.0
      %740 = vmatpush2.msra.mxu0 0.0
      %741 = vmatprep.subr.mxu0 0.0
      %742 = vmatpush2.msra.mxu0 0.0
      %743 = vmatprep.subr.mxu0 0.0
      %744 = vmatpush2.msra.mxu0 0.0
      %745 = vmatprep.subr.mxu0 0.0
      %746 = vmatpush2.msra.mxu0 0.0
      %747 = vmatprep.subr.mxu0 0.0
      %748 = vmatpush2.msra.mxu0 0.0
      %749 = vmatprep.subr.mxu0 0.0
      %750 = vmatpush2.msra.mxu0 0.0
      %751 = vmatprep.subr.mxu0 0.0
      %752 = vmatpush2.msra.mxu0 0.0
      %753 = vmatprep.subr.mxu0 0.0
      %754 = vmatpush2.msra.mxu0 0.0
      %755 = vmatprep.subr.mxu0 0.0
      %756 = vmatpush2.msra.mxu0 0.0
      %757 = vmatprep.mubr.f32.mxu0 0.0
      %758 = vmatmul.mubr.f32.gmra.mxu0 %v691
      %v759 = vpop.f32.mrf.mxu0
      %v760 = vadd.f32 %v688, %v759
      %v761 = vpop.f32.mrf.mxu0
      %762 = vdwg.mxu0
      %v763 = vld [vmem:[%s8] sm:$0x3]
      %v764 = vsel %vm520, %v760, 0.0
      %765 = vadd.xlane.f32.xlu0 %v764
      %v766 = vpop.xlane.xlu0 %765
      %v767 = vrcp.pop 32.0
      %v768 = vmul.f32 %v766, %v767
      %v769 = vsub.f32 %v760, %v768
      %v770 = vmul.f32 %v769, %v769
      %v771 = vsel %vm520, %v770, 0.0
      %772 = vadd.xlane.f32.xlu0 %v771
      %v773 = vpop.xlane.xlu0 %772
      %v774 = vmul.f32 %v773, %v767
      %v775 = vadd.f32 %v774, 1e-05
      %v776 = vrsqrt.pop %v775
      %v777 = vmul.f32 %v769, %v776
      %v778 = vlaneseq
      %v779 = vshrl.u32 %v778, 7
      %v780 = vsub.s32 0, %v779
      %v781 = vrot.slane %v763, %v780
      %v782 = vmul.f32 %v777, %v781
      %v783 = vlaneseq
      %v784 = vshrl.u32 %v783, 7
      %v785 = vsub.s32 1, %v784
      %v786 = vrot.slane %v763, %v785
      %v787 = vadd.f32 %v782, %v786
      %v788 = vxor.u32 %v787, 2147483648
      %v789 = vmul.f32 %v788, 1.442695
      %v790 = vpow.pop %v789
      %v791 = vadd.f32 %v790, 1.0
      %v792 = vrcp.pop %v791
      %v793 = vmul.f32 1.0, %v792
      %v794 = vld [vmem:[%s9] sm:$0x3]
      %796 = vrot.lane.b32.xlu0 %v760, 96
      %v797 = vpop.permute.xlu0 %796
      %v799 = vsel %vm520, %v797, 0.0
      %800 = vadd.xlane.f32.xlu0 %v799
      %v801 = vpop.xlane.xlu0 %800
      %v802 = vmul.f32 %v801, %v767
      %v803 = vsub.f32 %v760, %v802
      %v804 = vmul.f32 %v803, %v803
      %806 = vrot.lane.b32.xlu0 %v804, 96
      %v807 = vpop.permute.xlu0 %806
      %v809 = vsel %vm520, %v807, 0.0
      %810 = vadd.xlane.f32.xlu0 %v809
      %v811 = vpop.xlane.xlu0 %810
      %v812 = vmul.f32 %v811, %v767
      %v813 = vadd.f32 %v812, 1e-05
      %v814 = vrsqrt.pop %v813
      %v815 = vmul.f32 %v803, %v814
      %v816 = vlaneseq
      %v817 = vshrl.u32 %v816, 7
      %v818 = vsub.s32 0, %v817
      %v819 = vrot.slane %v794, %v818
      %821 = vrot.lane.b32.xlu0 %v819, 32
      %v822 = vpop.permute.xlu0 %821
      %v824 = vmul.f32 %v815, %v822
      %v825 = vlaneseq
      %v826 = vshrl.u32 %v825, 7
      %v827 = vsub.s32 1, %v826
      %v828 = vrot.slane %v794, %v827
      %830 = vrot.lane.b32.xlu0 %v828, 32
      %v831 = vpop.permute.xlu0 %830
      %v833 = vadd.f32 %v824, %v831
      %v834 = vxor.u32 %v833, 2147483648
      %v835 = vmul.f32 %v834, 1.442695
      %v836 = vpow.pop %v835
      %v837 = vadd.f32 %v836, 1.0
      %v838 = vrcp.pop %v837
      %v839 = vmul.f32 1.0, %v838
      %v840 = vld [vmem:[%s10] sm:$0x3]
      %842 = vrot.lane.b32.xlu0 %v591, 96
      %v843 = vpop.permute.xlu0 %842
      %v845 = vsel %vm520, %v843, 0.0
      %846 = vadd.xlane.f32.xlu0 %v845
      %v847 = vpop.xlane.xlu0 %846
      %v848 = vmul.f32 %v847, %v767
      %v849 = vsub.f32 %v591, %v848
      %v850 = vmul.f32 %v849, %v849
      %852 = vrot.lane.b32.xlu0 %v850, 96
      %v853 = vpop.permute.xlu0 %852
      %v855 = vsel %vm520, %v853, 0.0
      %856 = vadd.xlane.f32.xlu0 %v855
      %v857 = vpop.xlane.xlu0 %856
      %v858 = vmul.f32 %v857, %v767
      %v859 = vadd.f32 %v858, 1e-05
      %v860 = vrsqrt.pop %v859
      %v861 = vmul.f32 %v849, %v860
      %v862 = vlaneseq
      %v863 = vshrl.u32 %v862, 7
      %v864 = vsub.s32 0, %v863
      %v865 = vrot.slane %v840, %v864
      %867 = vrot.lane.b32.xlu0 %v865, 32
      %v868 = vpop.permute.xlu0 %867
      %v870 = vmul.f32 %v861, %v868
      %v871 = vlaneseq
      %v872 = vshrl.u32 %v871, 7
      %v873 = vsub.s32 1, %v872
      %v874 = vrot.slane %v840, %v873
      %876 = vrot.lane.b32.xlu0 %v874, 32
      %v877 = vpop.permute.xlu0 %876
      %v879 = vadd.f32 %v870, %v877
      %v880 = vld [vmem:[%s11] sm:$0x3]
      %882 = vrot.lane.b32.xlu0 %v675, 96
      %v883 = vpop.permute.xlu0 %882
      %v885 = vsel %vm520, %v883, 0.0
      %886 = vadd.xlane.f32.xlu0 %v885
      %v887 = vpop.xlane.xlu0 %886
      %v888 = vmul.f32 %v887, %v767
      %v889 = vsub.f32 %v675, %v888
      %v890 = vmul.f32 %v889, %v889
      %892 = vrot.lane.b32.xlu0 %v890, 96
      %v893 = vpop.permute.xlu0 %892
      %v895 = vsel %vm520, %v893, 0.0
      %896 = vadd.xlane.f32.xlu0 %v895
      %v897 = vpop.xlane.xlu0 %896
      %v898 = vmul.f32 %v897, %v767
      %v899 = vadd.f32 %v898, 1e-05
      %v900 = vrsqrt.pop %v899
      %v901 = vmul.f32 %v889, %v900
      %v902 = vlaneseq
      %v903 = vshrl.u32 %v902, 7
      %v904 = vsub.s32 0, %v903
      %v905 = vrot.slane %v880, %v904
      %907 = vrot.lane.b32.xlu0 %v905, 32
      %v908 = vpop.permute.xlu0 %907
      %v910 = vmul.f32 %v901, %v908
      %v911 = vlaneseq
      %v912 = vshrl.u32 %v911, 7
      %v913 = vsub.s32 1, %v912
      %v914 = vrot.slane %v880, %v913
      %916 = vrot.lane.b32.xlu0 %v914, 32
      %v917 = vpop.permute.xlu0 %916
      %v919 = vadd.f32 %v910, %v917
      %v920 = vmul.f32 %v839, %v879
      %922 = vrot.lane.b32.xlu0 %v919, 96
      %v923 = vpop.permute.xlu0 %922
      %v925 = vmul.f32 %v793, %v923
      %927 = vrot.lane.b32.xlu0 %v925, 32
      %v928 = vpop.permute.xlu0 %927
      %v930 = vadd.f32 %v920, %v928
      %v931 = vld [vmem:[%s12] sm:$0xff]
      %v932 = vld [vmem:[%s12 + $0x8] sm:$0xff]
      %v933 = vld [vmem:[%s12 + $0x10] sm:$0xff]
      %v934 = vld [vmem:[%s12 + $0x18] sm:$0xff]
      %v935 = vld [vmem:[%s13] sm:$0x1]
      %v937 = vlaneseq
      %v938 = vshrl.u32 %v937, 7
      %v939 = vsub.s32 0, %v938
      %v940 = vrot.slane %v935, %v939
      %943 = vrot.lane.b32.xlu0 %v930, 96
      %v944 = vpop.permute.xlu0 %943
      %v945 = vsel %vm520, %v944, 0
      %947 = vmatprep.subr.mxu0 0.0
      %948 = vmatpush1.msra.mxu0 0.0
      %949 = vmatprep.subr.mxu0 0.0
      %950 = vmatpush1.msra.mxu0 0.0
      %951 = vmatprep.subr.mxu0 0.0
      %952 = vmatpush1.msra.mxu0 0.0
      %953 = vmatprep.subr.mxu0 0.0
      %954 = vmatpush1.msra.mxu0 0.0
      %955 = vmatprep.subr.mxu0 0.0
      %956 = vmatpush1.msra.mxu0 0.0
      %957 = vmatprep.subr.mxu0 0.0
      %958 = vmatpush1.msra.mxu0 0.0
      %959 = vmatprep.subr.mxu0 0.0
      %960 = vmatpush1.msra.mxu0 0.0
      %961 = vmatprep.subr.mxu0 0.0
      %962 = vmatpush1.msra.mxu0 0.0
      %963 = vmatprep.subr.mxu0 0.0
      %964 = vmatpush1.msra.mxu0 0.0
      %965 = vmatprep.subr.mxu0 0.0
      %966 = vmatpush1.msra.mxu0 0.0
      %967 = vmatprep.subr.mxu0 0.0
      %968 = vmatpush1.msra.mxu0 0.0
      %969 = vmatprep.subr.mxu0 0.0
      %970 = vmatpush1.msra.mxu0 0.0
      %971 = vmatprep.subr.mxu0 0.0
      %972 = vmatpush1.msra.mxu0 %v934
      %973 = vmatprep.subr.mxu0 0.0
      %974 = vmatpush1.msra.mxu0 %v933
      %975 = vmatprep.subr.mxu0 0.0
      %976 = vmatpush1.msra.mxu0 %v932
      %977 = vmatprep.subr.mxu0 0.0
      %978 = vmatpush1.msra.mxu0 %v931
      %979 = vmatprep.subr.mxu0 0.0
      %980 = vmatpush2.msra.mxu0 0.0
      %981 = vmatprep.subr.mxu0 0.0
      %982 = vmatpush2.msra.mxu0 0.0
      %983 = vmatprep.subr.mxu0 0.0
      %984 = vmatpush2.msra.mxu0 0.0
      %985 = vmatprep.subr.mxu0 0.0
      %986 = vmatpush2.msra.mxu0 0.0
      %987 = vmatprep.subr.mxu0 0.0
      %988 = vmatpush2.msra.mxu0 0.0
      %989 = vmatprep.subr.mxu0 0.0
      %990 = vmatpush2.msra.mxu0 0.0
      %991 = vmatprep.subr.mxu0 0.0
      %992 = vmatpush2.msra.mxu0 0.0
      %993 = vmatprep.subr.mxu0 0.0
      %994 = vmatpush2.msra.mxu0 0.0
      %995 = vmatprep.subr.mxu0 0.0
      %996 = vmatpush2.msra.mxu0 0.0
      %997 = vmatprep.subr.mxu0 0.0
      %998 = vmatpush2.msra.mxu0 0.0
      %999 = vmatprep.subr.mxu0 0.0
      %1000 = vmatpush2.msra.mxu0 0.0
      %1001 = vmatprep.subr.mxu0 0.0
      %1002 = vmatpush2.msra.mxu0 0.0
      %1003 = vmatprep.subr.mxu0 0.0
      %1004 = vmatpush2.msra.mxu0 0.0
      %1005 = vmatprep.subr.mxu0 0.0
      %1006 = vmatpush2.msra.mxu0 0.0
      %1007 = vmatprep.subr.mxu0 0.0
      %1008 = vmatpush2.msra.mxu0 0.0
      %1009 = vmatprep.subr.mxu0 0.0
      %1010 = vmatpush2.msra.mxu0 0.0
      %1011 = vmatprep.mubr.f32.mxu0 0.0
      %1012 = vmatmul.mubr.f32.gmra.mxu0 %v945
      %v1013 = vpop.f32.mrf.mxu0
      %v1014 = vadd.f32 %v940, %v1013
      %v1015 = vpop.f32.mrf.mxu0
      %1016 = vdwg.mxu0
      %v1017 = vld [vmem:[%s14] sm:$0x3]
      %v1018 = vsel %vm520, %v1014, 0.0
      %1019 = vadd.xlane.f32.xlu0 %v1018
      %v1020 = vpop.xlane.xlu0 %1019
      %v1021 = vmul.f32 %v1020, %v767
      %v1022 = vsub.f32 %v1014, %v1021
      %v1023 = vmul.f32 %v1022, %v1022
      %v1024 = vsel %vm520, %v1023, 0.0
      %1025 = vadd.xlane.f32.xlu0 %v1024
      %v1026 = vpop.xlane.xlu0 %1025
      %v1027 = vmul.f32 %v1026, %v767
      %v1028 = vadd.f32 %v1027, 1e-05
      %v1029 = vrsqrt.pop %v1028
      %v1030 = vmul.f32 %v1022, %v1029
      %v1031 = vlaneseq
      %v1032 = vshrl.u32 %v1031, 7
      %v1033 = vsub.s32 0, %v1032
      %v1034 = vrot.slane %v1017, %v1033
      %v1035 = vmul.f32 %v1030, %v1034
      %v1036 = vlaneseq
      %v1037 = vshrl.u32 %v1036, 7
      %v1038 = vsub.s32 1, %v1037
      %v1039 = vrot.slane %v1017, %v1038
      %v1040 = vadd.f32 %v1035, %v1039
      %v1041 = vmax.f32 %v1040, 0.0
      %1042 = vst.msk [vmem:[%s506] sm:$0xff] %vm520, %v1041
      %p1043 = scmp.lt.s32.totalorder %s26, 1
      %s1044 = scalar_select %p1043, %s26, 1
      %s1045 = smul.addr %s1044, 8
      %s1046 = scalar_lea.vmem %s15, %s1045
      // Predicated region
      $region81: #{_lambda_.8} parent=79 // pred_check
        %p1047 = pneg %p369
      $region82: #{_lambda_.8} parent=79 // pred_check_branch
        %1049 = sbr.rel (%p1047) target = $region84
      $region83: #{_lambda_.8} parent=79 // pred_region
        _
      $region84: #{_lambda_.8} parent=79 // pred_fallthru
        _
    $region80: #{_lambda_.8} parent=5 // pred_fallthru
      _
    %p1050 = scmp.le.s32.totalorder 2, %s21
    // Predicated region
    $region85: #{_lambda_.8} parent=5 // pred_check
      %p1051 = pneg %p1050
    $region86: #{_lambda_.8} parent=5 // pred_check_branch
      %1053 = sbr.rel (%p1051) target = $region88
    $region87: #{_lambda_.8} parent=5 // pred_region
      %s1054 = ssub.s32 %s21, 2
      // Predicated region
      $region89: #{_lambda_.8} parent=87 // pred_check
        %p1055 = pneg %p375
      $region90: #{_lambda_.8} parent=87 // pred_check_branch
        %1057 = sbr.rel (%p1055) target = $region92
      $region91: #{_lambda_.8} parent=87 // pred_region
        %p1058 = scmp.lt.s32.totalorder %s27, 1
        %s1059 = scalar_select %p1058, %s27, 1
        %s1060 = smul.addr %s1059, 8
        %s1061 = scalar_lea.vmem %s15, %s1060
      $region92: #{_lambda_.8} parent=87 // pred_fallthru
        _
    $region88: #{_lambda_.8} parent=5 // pred_fallthru
      _
  $region6: #{_lambda_.8} parent=0 // loop_footer
    %s25 = sadd.s32 1, %s21
  $region7: #{_lambda_.8} parent=0 // loop_footer_branch
    %20 = sbr.rel target = $region3
  $region8: #{_lambda_.8} parent=0 // loop_exit
    _

// kernel: _lambda_.9
$region0: #{_lambda_.9}
  #allocation0 [shape = 'u32[]', space=smem, size = 0x4, offset = 0x4, fixed_abs, tag = 'smem constant byte address 0x4 - core index']
  #allocation1 [shape = 'u32[144,128]{1,0:T(1,128)}', space=vmem, size = 0x12000, scoped, tag = 'internal scratch']
  %s0 = inlined_call_operand.vmem [shape: f32[2,8,32], index: 0, kind: input, shape index: {}]
  %s1 = inlined_call_operand.vmem [shape: f32[32,96], index: 1, kind: input, shape index: {}]
  %s2 = inlined_call_operand.vmem [shape: f32[1,96], index: 2, kind: input, shape index: {}]
  %s3 = inlined_call_operand.vmem [shape: f32[32,32], index: 3, kind: input, shape index: {}]
  %s4 = inlined_call_operand.vmem [shape: f32[1,32], index: 4, kind: input, shape index: {}]
  %s5 = inlined_call_operand.vmem [shape: f32[2,32], index: 5, kind: input, shape index: {}]
  %s6 = inlined_call_operand.vmem [shape: f32[2,8,32], index: 6, kind: output, shape index: {}]
  %s7 = sld [smem:[#allocation0]]
  $region57: #{_lambda_.9} parent=0
    _
  %s9 = ssub.s32 1, %s7
  %s10 = scalar_select 0, %s9, %s7
  loop: start=0, step=1, limit=4
  $region2: #{_lambda_.9} parent=0 // loop_pre_header
    _
  $region3: #{_lambda_.9} parent=0 // loop_header
    %s12 = sphi 0, %s16
    %p13 = scmp.ge.s32.totalorder %s12, 4
    %s22 = sphi 0, %s24
    %s25 = sphi 0, %s22
    %s26 = sphi 0, %s25
    %s42 = sphi 0, %s26
    %s46 = sphi 0, %s46
    %s48 = sphi 0, %s46
    %s49 = sphi 0, %s48
    %s63 = sphi 0, %s49
    %s67 = sphi 0, %s67
    %s69 = sphi 0, %s67
    %s70 = sphi 0, %s69
    %s84 = sphi 0, %s70
    %s88 = sphi 0, %s88
    %s90 = sphi 0, %s88
    %s91 = sphi 0, %s90
    %s105 = sphi 0, %s91
    %s109 = sphi 0, %s109
    %s111 = sphi 0, %s109
    %s112 = sphi 0, %s111
    %s126 = sphi 0, %s112
    %s130 = sphi 0, %s130
    %s132 = sphi 0, %s130
    %s133 = sphi 0, %s132
    %s147 = sphi 0, %s133
    %s153 = sphi 0, %s155
    %s156 = sphi 0, %s153
    %s157 = sphi 0, %s156
    %s173 = sphi 0, %s157
  $region4: #{_lambda_.9} parent=0 // loop_header_branch
    %15 = sbr.rel (%p13) target = $region8
  $region5: #{_lambda_.9} parent=0 // loop_body
    %s17 = ssub.s32 %s12, 1
    %s18 = ssub.s32 %s12, 2
    %s19 = sadd.s32 %s12, 1
    %s20 = ssub.s32 %s12, %s19
    %p21 = scmp.eq.s32.totalorder %s20, 0
    %s23 = sadd.s32 %s22, 1
    %s24 = scalar_select %p21, %s22, %s23
    %p27 = pneg %p21
    %p28 = scmp.eq.s32.totalorder %s12, 1
    %p29 = por %p27, %p28
    %p30 = scmp.ne.s32.totalorder %s22, %s25
    %p31 = scmp.eq.s32.totalorder %s12, 0
    %p32 = por %p30, %p31
    %p33 = scmp.ne.s32.totalorder %s22, %s25
    %p34 = scmp.eq.s32.totalorder %s17, 1
    %p35 = por %p33, %p34
    %p36 = scmp.ne.s32.totalorder %s25, %s26
    %p37 = scmp.eq.s32.totalorder %s17, 0
    %p38 = por %p36, %p37
    %p39 = scmp.ne.s32.totalorder %s25, %s26
    %p40 = scmp.eq.s32.totalorder %s18, 1
    %p41 = por %p39, %p40
    %p43 = scmp.ne.s32.totalorder %s26, %s42
    %p44 = scmp.eq.s32.totalorder %s18, 0
    %p45 = por %p43, %p44
    %s47 = sadd.s32 %s46, 1
    %p50 = scmp.eq.s32.totalorder %s12, 1
    %p51 = scmp.ne.s32.totalorder %s46, %s48
    %p52 = scmp.eq.s32.totalorder %s12, 0
    %p53 = por %p51, %p52
    %p54 = scmp.ne.s32.totalorder %s46, %s48
    %p55 = scmp.eq.s32.totalorder %s17, 1
    %p56 = por %p54, %p55
    %p57 = scmp.ne.s32.totalorder %s48, %s49
    %p58 = scmp.eq.s32.totalorder %s17, 0
    %p59 = por %p57, %p58
    %p60 = scmp.ne.s32.totalorder %s48, %s49
    %p61 = scmp.eq.s32.totalorder %s18, 1
    %p62 = por %p60, %p61
    %p64 = scmp.ne.s32.totalorder %s49, %s63
    %p65 = scmp.eq.s32.totalorder %s18, 0
    %p66 = por %p64, %p65
    %s68 = sadd.s32 %s67, 1
    %p71 = scmp.eq.s32.totalorder %s12, 1
    %p72 = scmp.ne.s32.totalorder %s67, %s69
    %p73 = scmp.eq.s32.totalorder %s12, 0
    %p74 = por %p72, %p73
    %p75 = scmp.ne.s32.totalorder %s67, %s69
    %p76 = scmp.eq.s32.totalorder %s17, 1
    %p77 = por %p75, %p76
    %p78 = scmp.ne.s32.totalorder %s69, %s70
    %p79 = scmp.eq.s32.totalorder %s17, 0
    %p80 = por %p78, %p79
    %p81 = scmp.ne.s32.totalorder %s69, %s70
    %p82 = scmp.eq.s32.totalorder %s18, 1
    %p83 = por %p81, %p82
    %p85 = scmp.ne.s32.totalorder %s70, %s84
    %p86 = scmp.eq.s32.totalorder %s18, 0
    %p87 = por %p85, %p86
    %s89 = sadd.s32 %s88, 1
    %p92 = scmp.eq.s32.totalorder %s12, 1
    %p93 = scmp.ne.s32.totalorder %s88, %s90
    %p94 = scmp.eq.s32.totalorder %s12, 0
    %p95 = por %p93, %p94
    %p96 = scmp.ne.s32.totalorder %s88, %s90
    %p97 = scmp.eq.s32.totalorder %s17, 1
    %p98 = por %p96, %p97
    %p99 = scmp.ne.s32.totalorder %s90, %s91
    %p100 = scmp.eq.s32.totalorder %s17, 0
    %p101 = por %p99, %p100
    %p102 = scmp.ne.s32.totalorder %s90, %s91
    %p103 = scmp.eq.s32.totalorder %s18, 1
    %p104 = por %p102, %p103
    %p106 = scmp.ne.s32.totalorder %s91, %s105
    %p107 = scmp.eq.s32.totalorder %s18, 0
    %p108 = por %p106, %p107
    %s110 = sadd.s32 %s109, 1
    %p113 = scmp.eq.s32.totalorder %s12, 1
    %p114 = scmp.ne.s32.totalorder %s109, %s111
    %p115 = scmp.eq.s32.totalorder %s12, 0
    %p116 = por %p114, %p115
    %p117 = scmp.ne.s32.totalorder %s109, %s111
    %p118 = scmp.eq.s32.totalorder %s17, 1
    %p119 = por %p117, %p118
    %p120 = scmp.ne.s32.totalorder %s111, %s112
    %p121 = scmp.eq.s32.totalorder %s17, 0
    %p122 = por %p120, %p121
    %p123 = scmp.ne.s32.totalorder %s111, %s112
    %p124 = scmp.eq.s32.totalorder %s18, 1
    %p125 = por %p123, %p124
    %p127 = scmp.ne.s32.totalorder %s112, %s126
    %p128 = scmp.eq.s32.totalorder %s18, 0
    %p129 = por %p127, %p128
    %s131 = sadd.s32 %s130, 1
    %p134 = scmp.eq.s32.totalorder %s12, 1
    %p135 = scmp.ne.s32.totalorder %s130, %s132
    %p136 = scmp.eq.s32.totalorder %s12, 0
    %p137 = por %p135, %p136
    %p138 = scmp.ne.s32.totalorder %s130, %s132
    %p139 = scmp.eq.s32.totalorder %s17, 1
    %p140 = por %p138, %p139
    %p141 = scmp.ne.s32.totalorder %s132, %s133
    %p142 = scmp.eq.s32.totalorder %s17, 0
    %p143 = por %p141, %p142
    %p144 = scmp.ne.s32.totalorder %s132, %s133
    %p145 = scmp.eq.s32.totalorder %s18, 1
    %p146 = por %p144, %p145
    %p148 = scmp.ne.s32.totalorder %s133, %s147
    %p149 = scmp.eq.s32.totalorder %s18, 0
    %p150 = por %p148, %p149
    %s151 = ssub.s32 %s12, %s19
    %p152 = scmp.eq.s32.totalorder %s151, 0
    %s154 = sadd.s32 %s153, 1
    %s155 = scalar_select %p152, %s153, %s154
    %p158 = pneg %p152
    %p159 = scmp.eq.s32.totalorder %s12, 1
    %p160 = por %p158, %p159
    %p161 = scmp.ne.s32.totalorder %s153, %s156
    %p162 = scmp.eq.s32.totalorder %s12, 0
    %p163 = por %p161, %p162
    %p164 = scmp.ne.s32.totalorder %s153, %s156
    %p165 = scmp.eq.s32.totalorder %s17, 1
    %p166 = por %p164, %p165
    %p167 = scmp.ne.s32.totalorder %s156, %s157
    %p168 = scmp.eq.s32.totalorder %s17, 0
    %p169 = por %p167, %p168
    %p170 = scmp.ne.s32.totalorder %s156, %s157
    %p171 = scmp.eq.s32.totalorder %s18, 1
    %p172 = por %p170, %p171
    %p174 = scmp.ne.s32.totalorder %s157, %s173
    %p175 = scmp.eq.s32.totalorder %s18, 0
    %p176 = por %p174, %p175
    %p177 = scmp.le.s32.totalorder 1, %s12
    %p178 = scmp.lt.s32.totalorder %s12, 3
    %p179 = pnand %p177, %p178
    %p180 = pneg %p179
    // Predicated region
    $region9: #{_lambda_.9} parent=5 // pred_check
      _
    $region10: #{_lambda_.9} parent=5 // pred_check_branch
      %182 = sbr.rel (%p179) target = $region12
    $region11: #{_lambda_.9} parent=5 // pred_region
      %s183 = ssub.s32 %s12, 1
      // Predicated region
      $region13: #{_lambda_.9} parent=11 // pred_check
        %p184 = pneg %p59
      $region14: #{_lambda_.9} parent=11 // pred_check_branch
        %186 = sbr.rel (%p184) target = $region16
      $region15: #{_lambda_.9} parent=11 // pred_region
        _
      $region16: #{_lambda_.9} parent=11 // pred_fallthru
        _
      // Predicated region
      $region17: #{_lambda_.9} parent=11 // pred_check
        %p187 = pneg %p80
      $region18: #{_lambda_.9} parent=11 // pred_check_branch
        %189 = sbr.rel (%p187) target = $region20
      $region19: #{_lambda_.9} parent=11 // pred_region
        _
      $region20: #{_lambda_.9} parent=11 // pred_fallthru
        _
      // Predicated region
      $region21: #{_lambda_.9} parent=11 // pred_check
        %p190 = pneg %p101
      $region22: #{_lambda_.9} parent=11 // pred_check_branch
        %192 = sbr.rel (%p190) target = $region24
      $region23: #{_lambda_.9} parent=11 // pred_region
        _
      $region24: #{_lambda_.9} parent=11 // pred_fallthru
        _
      // Predicated region
      $region25: #{_lambda_.9} parent=11 // pred_check
        %p193 = pneg %p122
      $region26: #{_lambda_.9} parent=11 // pred_check_branch
        %195 = sbr.rel (%p193) target = $region28
      $region27: #{_lambda_.9} parent=11 // pred_region
        _
      $region28: #{_lambda_.9} parent=11 // pred_fallthru
        _
      // Predicated region
      $region29: #{_lambda_.9} parent=11 // pred_check
        %p196 = pneg %p143
      $region30: #{_lambda_.9} parent=11 // pred_check_branch
        %198 = sbr.rel (%p196) target = $region32
      $region31: #{_lambda_.9} parent=11 // pred_region
        _
      $region32: #{_lambda_.9} parent=11 // pred_fallthru
        _
    $region12: #{_lambda_.9} parent=5 // pred_fallthru
      _
    %p199 = scmp.lt.s32.totalorder %s12, 2
    // Predicated region
    $region33: #{_lambda_.9} parent=5 // pred_check
      %p200 = pneg %p199
    $region34: #{_lambda_.9} parent=5 // pred_check_branch
      %202 = sbr.rel (%p200) target = $region36
    $region35: #{_lambda_.9} parent=5 // pred_region
      // Predicated region
      $region37: #{_lambda_.9} parent=35 // pred_check
        %p203 = pneg %p32
      $region38: #{_lambda_.9} parent=35 // pred_check_branch
        %205 = sbr.rel (%p203) target = $region40
      $region39: #{_lambda_.9} parent=35 // pred_region
        %p206 = scmp.lt.s32.totalorder %s12, 1
        %s207 = scalar_select %p206, %s12, 1
        %s208 = smul.addr %s207, 8
        %s209 = scalar_lea.vmem %s0, %s208
      $region40: #{_lambda_.9} parent=35 // pred_fallthru
        _
    $region36: #{_lambda_.9} parent=5 // pred_fallthru
      _
    %p210 = scmp.le.s32.totalorder 1, %s12
    %p211 = scmp.lt.s32.totalorder %s12, 3
    %p212 = pnand %p210, %p211
    %p213 = pneg %p212
    // Predicated region
    $region41: #{_lambda_.9} parent=5 // pred_check
      _
    $region42: #{_lambda_.9} parent=5 // pred_check_branch
      %215 = sbr.rel (%p212) target = $region44
    $region43: #{_lambda_.9} parent=5 // pred_region
      %s216 = ssub.s32 %s12, 1
      %p217 = scmp.lt.s32.totalorder %s17, 1
      %s218 = scalar_select %p217, %s17, 1
      %s219 = smul.addr %s218, 8
      %s220 = scalar_lea.vmem %s0, %s219
      %p221 = pneg %p38
      %p222 = pneg %p35
      %p223 = pneg %p59
      %p224 = pneg %p56
      %p225 = pneg %p80
      %p226 = pneg %p77
      %p227 = pneg %p101
      %p228 = pneg %p98
      %p229 = pneg %p122
      %p230 = pneg %p119
      %p231 = pneg %p143
      %p232 = pneg %p140
      %p233 = pneg %p169
      %p234 = pneg %p166
      %p235 = scmp.lt.s32.totalorder %s17, 1
      %s236 = scalar_select %p235, %s17, 1
      %s237 = smul.addr %s236, 8
      %s238 = scalar_lea.vmem %s6, %s237
      %p239 = scmp.lt.s32.totalorder %s17, 1
      %s240 = scalar_select %p239, %s17, 1
      %s241 = smul.addr %s240, 8
      %s242 = scalar_lea.vmem %s0, %s241
      %p243 = scmp.lt.s32.totalorder %s17, 1
      %s244 = scalar_select %p243, %s17, 1
      %s245 = smul.addr %s244, 8
      %s246 = scalar_lea.vmem %s6, %s245
      %v247 = vld [vmem:[%s242] sm:$0xff]
      %v248 = vld [vmem:[%s1] sm:$0xff]
      %v249 = vld [vmem:[%s1 + $0x8] sm:$0xff]
      %v250 = vld [vmem:[%s1 + $0x10] sm:$0xff]
      %v251 = vld [vmem:[%s1 + $0x18] sm:$0xff]
      %v252 = vld [vmem:[%s2] sm:$0x1]
      %v254 = vlaneseq
      %v255 = vshrl.u32 %v254, 7
      %v256 = vsub.s32 0, %v255
      %v257 = vrot.slane %v252, %v256
      %vm259 = vcmask 261120
      %v261 = vsel %vm259, %v247, 0
      %263 = vmatprep.subr.mxu0 0.0
      %264 = vmatpush1.msra.mxu0 0.0
      %265 = vmatprep.subr.mxu0 0.0
      %266 = vmatpush1.msra.mxu0 0.0
      %267 = vmatprep.subr.mxu0 0.0
      %268 = vmatpush1.msra.mxu0 0.0
      %269 = vmatprep.subr.mxu0 0.0
      %270 = vmatpush1.msra.mxu0 0.0
      %271 = vmatprep.subr.mxu0 0.0
      %272 = vmatpush1.msra.mxu0 0.0
      %273 = vmatprep.subr.mxu0 0.0
      %274 = vmatpush1.msra.mxu0 0.0
      %275 = vmatprep.subr.mxu0 0.0
      %276 = vmatpush1.msra.mxu0 0.0
      %277 = vmatprep.subr.mxu0 0.0
      %278 = vmatpush1.msra.mxu0 0.0
      %279 = vmatprep.subr.mxu0 0.0
      %280 = vmatpush1.msra.mxu0 0.0
      %281 = vmatprep.subr.mxu0 0.0
      %282 = vmatpush1.msra.mxu0 0.0
      %283 = vmatprep.subr.mxu0 0.0
      %284 = vmatpush1.msra.mxu0 0.0
      %285 = vmatprep.subr.mxu0 0.0
      %286 = vmatpush1.msra.mxu0 0.0
      %287 = vmatprep.subr.mxu0 0.0
      %288 = vmatpush1.msra.mxu0 %v251
      %289 = vmatprep.subr.mxu0 0.0
      %290 = vmatpush1.msra.mxu0 %v250
      %291 = vmatprep.subr.mxu0 0.0
      %292 = vmatpush1.msra.mxu0 %v249
      %293 = vmatprep.subr.mxu0 0.0
      %294 = vmatpush1.msra.mxu0 %v248
      %295 = vmatprep.subr.mxu0 0.0
      %296 = vmatpush2.msra.mxu0 0.0
      %297 = vmatprep.subr.mxu0 0.0
      %298 = vmatpush2.msra.mxu0 0.0
      %299 = vmatprep.subr.mxu0 0.0
      %300 = vmatpush2.msra.mxu0 0.0
      %301 = vmatprep.subr.mxu0 0.0
      %302 = vmatpush2.msra.mxu0 0.0
      %303 = vmatprep.subr.mxu0 0.0
      %304 = vmatpush2.msra.mxu0 0.0
      %305 = vmatprep.subr.mxu0 0.0
      %306 = vmatpush2.msra.mxu0 0.0
      %307 = vmatprep.subr.mxu0 0.0
      %308 = vmatpush2.msra.mxu0 0.0
      %309 = vmatprep.subr.mxu0 0.0
      %310 = vmatpush2.msra.mxu0 0.0
      %311 = vmatprep.subr.mxu0 0.0
      %312 = vmatpush2.msra.mxu0 0.0
      %313 = vmatprep.subr.mxu0 0.0
      %314 = vmatpush2.msra.mxu0 0.0
      %315 = vmatprep.subr.mxu0 0.0
      %316 = vmatpush2.msra.mxu0 0.0
      %317 = vmatprep.subr.mxu0 0.0
      %318 = vmatpush2.msra.mxu0 0.0
      %319 = vmatprep.subr.mxu0 0.0
      %320 = vmatpush2.msra.mxu0 0.0
      %321 = vmatprep.subr.mxu0 0.0
      %322 = vmatpush2.msra.mxu0 0.0
      %323 = vmatprep.subr.mxu0 0.0
      %324 = vmatpush2.msra.mxu0 0.0
      %325 = vmatprep.subr.mxu0 0.0
      %326 = vmatpush2.msra.mxu0 0.0
      %327 = vmatprep.mubr.f32.mxu0 0.0
      %328 = vmatmul.mubr.f32.gmra.mxu0 %v261
      %v329 = vpop.f32.mrf.mxu0
      %v330 = vadd.f32 %v257, %v329
      %v331 = vpop.f32.mrf.mxu0
      %332 = vdwg.mxu0
      %v333 = vld [vmem:[%s4] sm:$0x1]
      %v335 = vlaneseq
      %v336 = vshrl.u32 %v335, 7
      %v337 = vsub.s32 0, %v336
      %v338 = vrot.slane %v333, %v337
      %v340 = vadd.f32 %v247, %v338
      %342 = vrot.lane.b32.xlu0 %v330, 96
      %v343 = vpop.permute.xlu0 %342
      %vm344 = vcmask 64512
      %v345 = vsel %vm344, %v330, 0
      %v347 = vsel %vm344, %v343, 0
      %349 = vmatprep.subr.mxu0 0.0
      %350 = vmatpush1.xpose.msra.mxu0 0.0
      %351 = vmatprep.subr.mxu0 0.0
      %352 = vmatpush1.xpose.msra.mxu0 0.0
      %353 = vmatprep.subr.mxu0 0.0
      %354 = vmatpush1.xpose.msra.mxu0 0.0
      %355 = vmatprep.subr.mxu0 0.0
      %356 = vmatpush1.xpose.msra.mxu0 0.0
      %357 = vmatprep.subr.mxu0 0.0
      %358 = vmatpush1.xpose.msra.mxu0 0.0
      %359 = vmatprep.subr.mxu0 0.0
      %360 = vmatpush1.xpose.msra.mxu0 0.0
      %361 = vmatprep.subr.mxu0 0.0
      %362 = vmatpush1.xpose.msra.mxu0 0.0
      %363 = vmatprep.subr.mxu0 0.0
      %364 = vmatpush1.xpose.msra.mxu0 0.0
      %365 = vmatprep.subr.mxu0 0.0
      %366 = vmatpush1.xpose.msra.mxu0 0.0
      %367 = vmatprep.subr.mxu0 0.0
      %368 = vmatpush1.xpose.msra.mxu0 0.0
      %369 = vmatprep.subr.mxu0 0.0
      %370 = vmatpush1.xpose.msra.mxu0 0.0
      %371 = vmatprep.subr.mxu0 0.0
      %372 = vmatpush1.xpose.msra.mxu0 0.0
      %373 = vmatprep.subr.mxu0 0.0
      %374 = vmatpush1.xpose.msra.mxu0 0.0
      %375 = vmatprep.subr.mxu0 0.0
      %376 = vmatpush1.xpose.msra.mxu0 0.0
      %377 = vmatprep.subr.mxu0 0.0
      %378 = vmatpush1.xpose.msra.mxu0 0.0
      %379 = vmatprep.subr.mxu0 0.0
      %380 = vmatpush1.xpose.msra.mxu0 %v347
      %381 = vmatprep.subr.mxu0 0.0
      %382 = vmatpush2.xpose.msra.mxu0 0.0
      %383 = vmatprep.subr.mxu0 0.0
      %384 = vmatpush2.xpose.msra.mxu0 0.0
      %385 = vmatprep.subr.mxu0 0.0
      %386 = vmatpush2.xpose.msra.mxu0 0.0
      %387 = vmatprep.subr.mxu0 0.0
      %388 = vmatpush2.xpose.msra.mxu0 0.0
      %389 = vmatprep.subr.mxu0 0.0
      %390 = vmatpush2.xpose.msra.mxu0 0.0
      %391 = vmatprep.subr.mxu0 0.0
      %392 = vmatpush2.xpose.msra.mxu0 0.0
      %393 = vmatprep.subr.mxu0 0.0
      %394 = vmatpush2.xpose.msra.mxu0 0.0
      %395 = vmatprep.subr.mxu0 0.0
      %396 = vmatpush2.xpose.msra.mxu0 0.0
      %397 = vmatprep.subr.mxu0 0.0
      %398 = vmatpush2.xpose.msra.mxu0 0.0
      %399 = vmatprep.subr.mxu0 0.0
      %400 = vmatpush2.xpose.msra.mxu0 0.0
      %401 = vmatprep.subr.mxu0 0.0
      %402 = vmatpush2.xpose.msra.mxu0 0.0
      %403 = vmatprep.subr.mxu0 0.0
      %404 = vmatpush2.xpose.msra.mxu0 0.0
      %405 = vmatprep.subr.mxu0 0.0
      %406 = vmatpush2.xpose.msra.mxu0 0.0
      %407 = vmatprep.subr.mxu0 0.0
      %408 = vmatpush2.xpose.msra.mxu0 0.0
      %409 = vmatprep.subr.mxu0 0.0
      %410 = vmatpush2.xpose.msra.mxu0 0.0
      %411 = vmatprep.subr.mxu0 0.0
      %412 = vmatpush2.xpose.msra.mxu0 0.0
      %413 = vmatprep.mubr.f32.mxu0 0.0
      %414 = vmatmul.mubr.f32.gmra.mxu0 %v345
      %v415 = vpop.f32.mrf.mxu0
      %v416 = vadd.f32 0.0, %v415
      %v417 = vpop.f32.mrf.mxu0
      %418 = vdwg.mxu0
      %v419 = vmul.f32 %v416, 0.35355338
      %v420 = vsel %vm344, %v419, -inf
      %421 = vmax.xlane.f32.xlu0 %v420
      %v422 = vpop.xlane.xlu0 %421
      %v423 = vsub.f32 %v419, %v422
      %v424 = vmul.f32 %v423, 1.442695
      %v425 = vpow.pop %v424
      %v426 = vsel %vm344, %v425, 0.0
      %427 = vadd.xlane.f32.xlu0 %v426
      %v428 = vpop.xlane.xlu0 %427
      %v429 = vrcp.pop %v428
      %v430 = vmul.f32 %v425, %v429
      %431 = vrot.lane.b32.xlu0 %v330, 64
      %v432 = vpop.permute.xlu0 %431
      %v435 = vsel %vm344, %v430, 0
      %437 = vmatprep.subr.mxu0 0.0
      %438 = vmatpush1.msra.mxu0 0.0
      %439 = vmatprep.subr.mxu0 0.0
      %440 = vmatpush1.msra.mxu0 0.0
      %441 = vmatprep.subr.mxu0 0.0
      %442 = vmatpush1.msra.mxu0 0.0
      %443 = vmatprep.subr.mxu0 0.0
      %444 = vmatpush1.msra.mxu0 0.0
      %445 = vmatprep.subr.mxu0 0.0
      %446 = vmatpush1.msra.mxu0 0.0
      %447 = vmatprep.subr.mxu0 0.0
      %448 = vmatpush1.msra.mxu0 0.0
      %449 = vmatprep.subr.mxu0 0.0
      %450 = vmatpush1.msra.mxu0 0.0
      %451 = vmatprep.subr.mxu0 0.0
      %452 = vmatpush1.msra.mxu0 0.0
      %453 = vmatprep.subr.mxu0 0.0
      %454 = vmatpush1.msra.mxu0 0.0
      %455 = vmatprep.subr.mxu0 0.0
      %456 = vmatpush1.msra.mxu0 0.0
      %457 = vmatprep.subr.mxu0 0.0
      %458 = vmatpush1.msra.mxu0 0.0
      %459 = vmatprep.subr.mxu0 0.0
      %460 = vmatpush1.msra.mxu0 0.0
      %461 = vmatprep.subr.mxu0 0.0
      %462 = vmatpush1.msra.mxu0 0.0
      %463 = vmatprep.subr.mxu0 0.0
      %464 = vmatpush1.msra.mxu0 0.0
      %465 = vmatprep.subr.mxu0 0.0
      %466 = vmatpush1.msra.mxu0 0.0
      %467 = vmatprep.subr.mxu0 0.0
      %468 = vmatpush1.msra.mxu0 %v432
      %469 = vmatprep.subr.mxu0 0.0
      %470 = vmatpush2.msra.mxu0 0.0
      %471 = vmatprep.subr.mxu0 0.0
      %472 = vmatpush2.msra.mxu0 0.0
      %473 = vmatprep.subr.mxu0 0.0
      %474 = vmatpush2.msra.mxu0 0.0
      %475 = vmatprep.subr.mxu0 0.0
      %476 = vmatpush2.msra.mxu0 0.0
      %477 = vmatprep.subr.mxu0 0.0
      %478 = vmatpush2.msra.mxu0 0.0
      %479 = vmatprep.subr.mxu0 0.0
      %480 = vmatpush2.msra.mxu0 0.0
      %481 = vmatprep.subr.mxu0 0.0
      %482 = vmatpush2.msra.mxu0 0.0
      %483 = vmatprep.subr.mxu0 0.0
      %484 = vmatpush2.msra.mxu0 0.0
      %485 = vmatprep.subr.mxu0 0.0
      %486 = vmatpush2.msra.mxu0 0.0
      %487 = vmatprep.subr.mxu0 0.0
      %488 = vmatpush2.msra.mxu0 0.0
      %489 = vmatprep.subr.mxu0 0.0
      %490 = vmatpush2.msra.mxu0 0.0
      %491 = vmatprep.subr.mxu0 0.0
      %492 = vmatpush2.msra.mxu0 0.0
      %493 = vmatprep.subr.mxu0 0.0
      %494 = vmatpush2.msra.mxu0 0.0
      %495 = vmatprep.subr.mxu0 0.0
      %496 = vmatpush2.msra.mxu0 0.0
      %497 = vmatprep.subr.mxu0 0.0
      %498 = vmatpush2.msra.mxu0 0.0
      %499 = vmatprep.subr.mxu0 0.0
      %500 = vmatpush2.msra.mxu0 0.0
      %501 = vmatprep.mubr.f32.mxu0 0.0
      %502 = vmatmul.mubr.f32.gmra.mxu0 %v435
      %v503 = vpop.f32.mrf.mxu0
      %v504 = vadd.f32 0.0, %v503
      %v505 = vpop.f32.mrf.mxu0
      %506 = vdwg.mxu0
      %v507 = vld [vmem:[%s3] sm:$0xff]
      %v509 = vsel %vm344, %v504, 0
      %511 = vmatprep.subr.mxu0 0.0
      %512 = vmatpush1.msra.mxu0 0.0
      %513 = vmatprep.subr.mxu0 0.0
      %514 = vmatpush1.msra.mxu0 0.0
      %515 = vmatprep.subr.mxu0 0.0
      %516 = vmatpush1.msra.mxu0 0.0
      %517 = vmatprep.subr.mxu0 0.0
      %518 = vmatpush1.msra.mxu0 0.0
      %519 = vmatprep.subr.mxu0 0.0
      %520 = vmatpush1.msra.mxu0 0.0
      %521 = vmatprep.subr.mxu0 0.0
      %522 = vmatpush1.msra.mxu0 0.0
      %523 = vmatprep.subr.mxu0 0.0
      %524 = vmatpush1.msra.mxu0 0.0
      %525 = vmatprep.subr.mxu0 0.0
      %526 = vmatpush1.msra.mxu0 0.0
      %527 = vmatprep.subr.mxu0 0.0
      %528 = vmatpush1.msra.mxu0 0.0
      %529 = vmatprep.subr.mxu0 0.0
      %530 = vmatpush1.msra.mxu0 0.0
      %531 = vmatprep.subr.mxu0 0.0
      %532 = vmatpush1.msra.mxu0 0.0
      %533 = vmatprep.subr.mxu0 0.0
      %534 = vmatpush1.msra.mxu0 0.0
      %535 = vmatprep.subr.mxu0 0.0
      %536 = vmatpush1.msra.mxu0 0.0
      %537 = vmatprep.subr.mxu0 0.0
      %538 = vmatpush1.msra.mxu0 0.0
      %539 = vmatprep.subr.mxu0 0.0
      %540 = vmatpush1.msra.mxu0 0.0
      %541 = vmatprep.subr.mxu0 0.0
      %542 = vmatpush1.msra.mxu0 %v507
      %543 = vmatprep.subr.mxu0 0.0
      %544 = vmatpush2.msra.mxu0 0.0
      %545 = vmatprep.subr.mxu0 0.0
      %546 = vmatpush2.msra.mxu0 0.0
      %547 = vmatprep.subr.mxu0 0.0
      %548 = vmatpush2.msra.mxu0 0.0
      %549 = vmatprep.subr.mxu0 0.0
      %550 = vmatpush2.msra.mxu0 0.0
      %551 = vmatprep.subr.mxu0 0.0
      %552 = vmatpush2.msra.mxu0 0.0
      %553 = vmatprep.subr.mxu0 0.0
      %554 = vmatpush2.msra.mxu0 0.0
      %555 = vmatprep.subr.mxu0 0.0
      %556 = vmatpush2.msra.mxu0 0.0
      %557 = vmatprep.subr.mxu0 0.0
      %558 = vmatpush2.msra.mxu0 0.0
      %559 = vmatprep.subr.mxu0 0.0
      %560 = vmatpush2.msra.mxu0 0.0
      %561 = vmatprep.subr.mxu0 0.0
      %562 = vmatpush2.msra.mxu0 0.0
      %563 = vmatprep.subr.mxu0 0.0
      %564 = vmatpush2.msra.mxu0 0.0
      %565 = vmatprep.subr.mxu0 0.0
      %566 = vmatpush2.msra.mxu0 0.0
      %567 = vmatprep.subr.mxu0 0.0
      %568 = vmatpush2.msra.mxu0 0.0
      %569 = vmatprep.subr.mxu0 0.0
      %570 = vmatpush2.msra.mxu0 0.0
      %571 = vmatprep.subr.mxu0 0.0
      %572 = vmatpush2.msra.mxu0 0.0
      %573 = vmatprep.subr.mxu0 0.0
      %574 = vmatpush2.msra.mxu0 0.0
      %575 = vmatprep.mubr.f32.mxu0 0.0
      %576 = vmatmul.mubr.f32.gmra.mxu0 %v509
      %v577 = vpop.f32.mrf.mxu0
      %v578 = vadd.f32 0.0, %v577
      %v579 = vpop.f32.mrf.mxu0
      %580 = vdwg.mxu0
      %v581 = vadd.f32 %v340, %v578
      %582 = vrot.lane.b32.xlu0 %v330, 120
      %v583 = vpop.permute.xlu0 %582
      %584 = vrot.lane.b32.xlu0 %v330, 88
      %v585 = vpop.permute.xlu0 %584
      %v586 = vsel %vm344, %v583, 0
      %v588 = vsel %vm344, %v585, 0
      %590 = vmatprep.subr.mxu0 0.0
      %591 = vmatpush1.xpose.msra.mxu0 0.0
      %592 = vmatprep.subr.mxu0 0.0
      %593 = vmatpush1.xpose.msra.mxu0 0.0
      %594 = vmatprep.subr.mxu0 0.0
      %595 = vmatpush1.xpose.msra.mxu0 0.0
      %596 = vmatprep.subr.mxu0 0.0
      %597 = vmatpush1.xpose.msra.mxu0 0.0
      %598 = vmatprep.subr.mxu0 0.0
      %599 = vmatpush1.xpose.msra.mxu0 0.0
      %600 = vmatprep.subr.mxu0 0.0
      %601 = vmatpush1.xpose.msra.mxu0 0.0
      %602 = vmatprep.subr.mxu0 0.0
      %603 = vmatpush1.xpose.msra.mxu0 0.0
      %604 = vmatprep.subr.mxu0 0.0
      %605 = vmatpush1.xpose.msra.mxu0 0.0
      %606 = vmatprep.subr.mxu0 0.0
      %607 = vmatpush1.xpose.msra.mxu0 0.0
      %608 = vmatprep.subr.mxu0 0.0
      %609 = vmatpush1.xpose.msra.mxu0 0.0
      %610 = vmatprep.subr.mxu0 0.0
      %611 = vmatpush1.xpose.msra.mxu0 0.0
      %612 = vmatprep.subr.mxu0 0.0
      %613 = vmatpush1.xpose.msra.mxu0 0.0
      %614 = vmatprep.subr.mxu0 0.0
      %615 = vmatpush1.xpose.msra.mxu0 0.0
      %616 = vmatprep.subr.mxu0 0.0
      %617 = vmatpush1.xpose.msra.mxu0 0.0
      %618 = vmatprep.subr.mxu0 0.0
      %619 = vmatpush1.xpose.msra.mxu0 0.0
      %620 = vmatprep.subr.mxu0 0.0
      %621 = vmatpush1.xpose.msra.mxu0 %v588
      %622 = vmatprep.subr.mxu0 0.0
      %623 = vmatpush2.xpose.msra.mxu0 0.0
      %624 = vmatprep.subr.mxu0 0.0
      %625 = vmatpush2.xpose.msra.mxu0 0.0
      %626 = vmatprep.subr.mxu0 0.0
      %627 = vmatpush2.xpose.msra.mxu0 0.0
      %628 = vmatprep.subr.mxu0 0.0
      %629 = vmatpush2.xpose.msra.mxu0 0.0
      %630 = vmatprep.subr.mxu0 0.0
      %631 = vmatpush2.xpose.msra.mxu0 0.0
      %632 = vmatprep.subr.mxu0 0.0
      %633 = vmatpush2.xpose.msra.mxu0 0.0
      %634 = vmatprep.subr.mxu0 0.0
      %635 = vmatpush2.xpose.msra.mxu0 0.0
      %636 = vmatprep.subr.mxu0 0.0
      %637 = vmatpush2.xpose.msra.mxu0 0.0
      %638 = vmatprep.subr.mxu0 0.0
      %639 = vmatpush2.xpose.msra.mxu0 0.0
      %640 = vmatprep.subr.mxu0 0.0
      %641 = vmatpush2.xpose.msra.mxu0 0.0
      %642 = vmatprep.subr.mxu0 0.0
      %643 = vmatpush2.xpose.msra.mxu0 0.0
      %644 = vmatprep.subr.mxu0 0.0
      %645 = vmatpush2.xpose.msra.mxu0 0.0
      %646 = vmatprep.subr.mxu0 0.0
      %647 = vmatpush2.xpose.msra.mxu0 0.0
      %648 = vmatprep.subr.mxu0 0.0
      %649 = vmatpush2.xpose.msra.mxu0 0.0
      %650 = vmatprep.subr.mxu0 0.0
      %651 = vmatpush2.xpose.msra.mxu0 0.0
      %652 = vmatprep.subr.mxu0 0.0
      %653 = vmatpush2.xpose.msra.mxu0 0.0
      %654 = vmatprep.mubr.f32.mxu0 0.0
      %655 = vmatmul.mubr.f32.gmra.mxu0 %v586
      %v656 = vpop.f32.mrf.mxu0
      %v657 = vadd.f32 0.0, %v656
      %v658 = vpop.f32.mrf.mxu0
      %659 = vdwg.mxu0
      %v660 = vmul.f32 %v657, 0.35355338
      %v661 = vsel %vm344, %v660, -inf
      %662 = vmax.xlane.f32.xlu0 %v661
      %v663 = vpop.xlane.xlu0 %662
      %v664 = vsub.f32 %v660, %v663
      %v665 = vmul.f32 %v664, 1.442695
      %v666 = vpow.pop %v665
      %v667 = vsel %vm344, %v666, 0.0
      %668 = vadd.xlane.f32.xlu0 %v667
      %v669 = vpop.xlane.xlu0 %668
      %v670 = vrcp.pop %v669
      %v671 = vmul.f32 %v666, %v670
      %672 = vrot.lane.b32.xlu0 %v330, 56
      %v673 = vpop.permute.xlu0 %672
      %v676 = vsel %vm344, %v671, 0
      %678 = vmatprep.subr.mxu0 0.0
      %679 = vmatpush1.msra.mxu0 0.0
      %680 = vmatprep.subr.mxu0 0.0
      %681 = vmatpush1.msra.mxu0 0.0
      %682 = vmatprep.subr.mxu0 0.0
      %683 = vmatpush1.msra.mxu0 0.0
      %684 = vmatprep.subr.mxu0 0.0
      %685 = vmatpush1.msra.mxu0 0.0
      %686 = vmatprep.subr.mxu0 0.0
      %687 = vmatpush1.msra.mxu0 0.0
      %688 = vmatprep.subr.mxu0 0.0
      %689 = vmatpush1.msra.mxu0 0.0
      %690 = vmatprep.subr.mxu0 0.0
      %691 = vmatpush1.msra.mxu0 0.0
      %692 = vmatprep.subr.mxu0 0.0
      %693 = vmatpush1.msra.mxu0 0.0
      %694 = vmatprep.subr.mxu0 0.0
      %695 = vmatpush1.msra.mxu0 0.0
      %696 = vmatprep.subr.mxu0 0.0
      %697 = vmatpush1.msra.mxu0 0.0
      %698 = vmatprep.subr.mxu0 0.0
      %699 = vmatpush1.msra.mxu0 0.0
      %700 = vmatprep.subr.mxu0 0.0
      %701 = vmatpush1.msra.mxu0 0.0
      %702 = vmatprep.subr.mxu0 0.0
      %703 = vmatpush1.msra.mxu0 0.0
      %704 = vmatprep.subr.mxu0 0.0
      %705 = vmatpush1.msra.mxu0 0.0
      %706 = vmatprep.subr.mxu0 0.0
      %707 = vmatpush1.msra.mxu0 0.0
      %708 = vmatprep.subr.mxu0 0.0
      %709 = vmatpush1.msra.mxu0 %v673
      %710 = vmatprep.subr.mxu0 0.0
      %711 = vmatpush2.msra.mxu0 0.0
      %712 = vmatprep.subr.mxu0 0.0
      %713 = vmatpush2.msra.mxu0 0.0
      %714 = vmatprep.subr.mxu0 0.0
      %715 = vmatpush2.msra.mxu0 0.0
      %716 = vmatprep.subr.mxu0 0.0
      %717 = vmatpush2.msra.mxu0 0.0
      %718 = vmatprep.subr.mxu0 0.0
      %719 = vmatpush2.msra.mxu0 0.0
      %720 = vmatprep.subr.mxu0 0.0
      %721 = vmatpush2.msra.mxu0 0.0
      %722 = vmatprep.subr.mxu0 0.0
      %723 = vmatpush2.msra.mxu0 0.0
      %724 = vmatprep.subr.mxu0 0.0
      %725 = vmatpush2.msra.mxu0 0.0
      %726 = vmatprep.subr.mxu0 0.0
      %727 = vmatpush2.msra.mxu0 0.0
      %728 = vmatprep.subr.mxu0 0.0
      %729 = vmatpush2.msra.mxu0 0.0
      %730 = vmatprep.subr.mxu0 0.0
      %731 = vmatpush2.msra.mxu0 0.0
      %732 = vmatprep.subr.mxu0 0.0
      %733 = vmatpush2.msra.mxu0 0.0
      %734 = vmatprep.subr.mxu0 0.0
      %735 = vmatpush2.msra.mxu0 0.0
      %736 = vmatprep.subr.mxu0 0.0
      %737 = vmatpush2.msra.mxu0 0.0
      %738 = vmatprep.subr.mxu0 0.0
      %739 = vmatpush2.msra.mxu0 0.0
      %740 = vmatprep.subr.mxu0 0.0
      %741 = vmatpush2.msra.mxu0 0.0
      %742 = vmatprep.mubr.f32.mxu0 0.0
      %743 = vmatmul.mubr.f32.gmra.mxu0 %v676
      %v744 = vpop.f32.mrf.mxu0
      %v745 = vadd.f32 0.0, %v744
      %v746 = vpop.f32.mrf.mxu0
      %747 = vdwg.mxu0
      %v748 = vld [vmem:[%s3 + $0x8] sm:$0xff]
      %v750 = vsel %vm344, %v745, 0
      %752 = vmatprep.subr.mxu0 0.0
      %753 = vmatpush1.msra.mxu0 0.0
      %754 = vmatprep.subr.mxu0 0.0
      %755 = vmatpush1.msra.mxu0 0.0
      %756 = vmatprep.subr.mxu0 0.0
      %757 = vmatpush1.msra.mxu0 0.0
      %758 = vmatprep.subr.mxu0 0.0
      %759 = vmatpush1.msra.mxu0 0.0
      %760 = vmatprep.subr.mxu0 0.0
      %761 = vmatpush1.msra.mxu0 0.0
      %762 = vmatprep.subr.mxu0 0.0
      %763 = vmatpush1.msra.mxu0 0.0
      %764 = vmatprep.subr.mxu0 0.0
      %765 = vmatpush1.msra.mxu0 0.0
      %766 = vmatprep.subr.mxu0 0.0
      %767 = vmatpush1.msra.mxu0 0.0
      %768 = vmatprep.subr.mxu0 0.0
      %769 = vmatpush1.msra.mxu0 0.0
      %770 = vmatprep.subr.mxu0 0.0
      %771 = vmatpush1.msra.mxu0 0.0
      %772 = vmatprep.subr.mxu0 0.0
      %773 = vmatpush1.msra.mxu0 0.0
      %774 = vmatprep.subr.mxu0 0.0
      %775 = vmatpush1.msra.mxu0 0.0
      %776 = vmatprep.subr.mxu0 0.0
      %777 = vmatpush1.msra.mxu0 0.0
      %778 = vmatprep.subr.mxu0 0.0
      %779 = vmatpush1.msra.mxu0 0.0
      %780 = vmatprep.subr.mxu0 0.0
      %781 = vmatpush1.msra.mxu0 0.0
      %782 = vmatprep.subr.mxu0 0.0
      %783 = vmatpush1.msra.mxu0 %v748
      %784 = vmatprep.subr.mxu0 0.0
      %785 = vmatpush2.msra.mxu0 0.0
      %786 = vmatprep.subr.mxu0 0.0
      %787 = vmatpush2.msra.mxu0 0.0
      %788 = vmatprep.subr.mxu0 0.0
      %789 = vmatpush2.msra.mxu0 0.0
      %790 = vmatprep.subr.mxu0 0.0
      %791 = vmatpush2.msra.mxu0 0.0
      %792 = vmatprep.subr.mxu0 0.0
      %793 = vmatpush2.msra.mxu0 0.0
      %794 = vmatprep.subr.mxu0 0.0
      %795 = vmatpush2.msra.mxu0 0.0
      %796 = vmatprep.subr.mxu0 0.0
      %797 = vmatpush2.msra.mxu0 0.0
      %798 = vmatprep.subr.mxu0 0.0
      %799 = vmatpush2.msra.mxu0 0.0
      %800 = vmatprep.subr.mxu0 0.0
      %801 = vmatpush2.msra.mxu0 0.0
      %802 = vmatprep.subr.mxu0 0.0
      %803 = vmatpush2.msra.mxu0 0.0
      %804 = vmatprep.subr.mxu0 0.0
      %805 = vmatpush2.msra.mxu0 0.0
      %806 = vmatprep.subr.mxu0 0.0
      %807 = vmatpush2.msra.mxu0 0.0
      %808 = vmatprep.subr.mxu0 0.0
      %809 = vmatpush2.msra.mxu0 0.0
      %810 = vmatprep.subr.mxu0 0.0
      %811 = vmatpush2.msra.mxu0 0.0
      %812 = vmatprep.subr.mxu0 0.0
      %813 = vmatpush2.msra.mxu0 0.0
      %814 = vmatprep.subr.mxu0 0.0
      %815 = vmatpush2.msra.mxu0 0.0
      %816 = vmatprep.mubr.f32.mxu0 0.0
      %817 = vmatmul.mubr.f32.gmra.mxu0 %v750
      %v818 = vpop.f32.mrf.mxu0
      %v819 = vadd.f32 0.0, %v818
      %v820 = vpop.f32.mrf.mxu0
      %821 = vdwg.mxu0
      %v822 = vadd.f32 %v581, %v819
      %823 = vrot.lane.b32.xlu0 %v330, 112
      %v824 = vpop.permute.xlu0 %823
      %825 = vrot.lane.b32.xlu0 %v330, 80
      %v826 = vpop.permute.xlu0 %825
      %v827 = vsel %vm344, %v824, 0
      %v829 = vsel %vm344, %v826, 0
      %831 = vmatprep.subr.mxu0 0.0
      %832 = vmatpush1.xpose.msra.mxu0 0.0
      %833 = vmatprep.subr.mxu0 0.0
      %834 = vmatpush1.xpose.msra.mxu0 0.0
      %835 = vmatprep.subr.mxu0 0.0
      %836 = vmatpush1.xpose.msra.mxu0 0.0
      %837 = vmatprep.subr.mxu0 0.0
      %838 = vmatpush1.xpose.msra.mxu0 0.0
      %839 = vmatprep.subr.mxu0 0.0
      %840 = vmatpush1.xpose.msra.mxu0 0.0
      %841 = vmatprep.subr.mxu0 0.0
      %842 = vmatpush1.xpose.msra.mxu0 0.0
      %843 = vmatprep.subr.mxu0 0.0
      %844 = vmatpush1.xpose.msra.mxu0 0.0
      %845 = vmatprep.subr.mxu0 0.0
      %846 = vmatpush1.xpose.msra.mxu0 0.0
      %847 = vmatprep.subr.mxu0 0.0
      %848 = vmatpush1.xpose.msra.mxu0 0.0
      %849 = vmatprep.subr.mxu0 0.0
      %850 = vmatpush1.xpose.msra.mxu0 0.0
      %851 = vmatprep.subr.mxu0 0.0
      %852 = vmatpush1.xpose.msra.mxu0 0.0
      %853 = vmatprep.subr.mxu0 0.0
      %854 = vmatpush1.xpose.msra.mxu0 0.0
      %855 = vmatprep.subr.mxu0 0.0
      %856 = vmatpush1.xpose.msra.mxu0 0.0
      %857 = vmatprep.subr.mxu0 0.0
      %858 = vmatpush1.xpose.msra.mxu0 0.0
      %859 = vmatprep.subr.mxu0 0.0
      %860 = vmatpush1.xpose.msra.mxu0 0.0
      %861 = vmatprep.subr.mxu0 0.0
      %862 = vmatpush1.xpose.msra.mxu0 %v829
      %863 = vmatprep.subr.mxu0 0.0
      %864 = vmatpush2.xpose.msra.mxu0 0.0
      %865 = vmatprep.subr.mxu0 0.0
      %866 = vmatpush2.xpose.msra.mxu0 0.0
      %867 = vmatprep.subr.mxu0 0.0
      %868 = vmatpush2.xpose.msra.mxu0 0.0
      %869 = vmatprep.subr.mxu0 0.0
      %870 = vmatpush2.xpose.msra.mxu0 0.0
      %871 = vmatprep.subr.mxu0 0.0
      %872 = vmatpush2.xpose.msra.mxu0 0.0
      %873 = vmatprep.subr.mxu0 0.0
      %874 = vmatpush2.xpose.msra.mxu0 0.0
      %875 = vmatprep.subr.mxu0 0.0
      %876 = vmatpush2.xpose.msra.mxu0 0.0
      %877 = vmatprep.subr.mxu0 0.0
      %878 = vmatpush2.xpose.msra.mxu0 0.0
      %879 = vmatprep.subr.mxu0 0.0
      %880 = vmatpush2.xpose.msra.mxu0 0.0
      %881 = vmatprep.subr.mxu0 0.0
      %882 = vmatpush2.xpose.msra.mxu0 0.0
      %883 = vmatprep.subr.mxu0 0.0
      %884 = vmatpush2.xpose.msra.mxu0 0.0
      %885 = vmatprep.subr.mxu0 0.0
      %886 = vmatpush2.xpose.msra.mxu0 0.0
      %887 = vmatprep.subr.mxu0 0.0
      %888 = vmatpush2.xpose.msra.mxu0 0.0
      %889 = vmatprep.subr.mxu0 0.0
      %890 = vmatpush2.xpose.msra.mxu0 0.0
      %891 = vmatprep.subr.mxu0 0.0
      %892 = vmatpush2.xpose.msra.mxu0 0.0
      %893 = vmatprep.subr.mxu0 0.0
      %894 = vmatpush2.xpose.msra.mxu0 0.0
      %895 = vmatprep.mubr.f32.mxu0 0.0
      %896 = vmatmul.mubr.f32.gmra.mxu0 %v827
      %v897 = vpop.f32.mrf.mxu0
      %v898 = vadd.f32 0.0, %v897
      %v899 = vpop.f32.mrf.mxu0
      %900 = vdwg.mxu0
      %v901 = vmul.f32 %v898, 0.35355338
      %v902 = vsel %vm344, %v901, -inf
      %903 = vmax.xlane.f32.xlu0 %v902
      %v904 = vpop.xlane.xlu0 %903
      %v905 = vsub.f32 %v901, %v904
      %v906 = vmul.f32 %v905, 1.442695
      %v907 = vpow.pop %v906
      %v908 = vsel %vm344, %v907, 0.0
      %909 = vadd.xlane.f32.xlu0 %v908
      %v910 = vpop.xlane.xlu0 %909
      %v911 = vrcp.pop %v910
      %v912 = vmul.f32 %v907, %v911
      %913 = vrot.lane.b32.xlu0 %v330, 48
      %v914 = vpop.permute.xlu0 %913
      %v917 = vsel %vm344, %v912, 0
      %919 = vmatprep.subr.mxu0 0.0
      %920 = vmatpush1.msra.mxu0 0.0
      %921 = vmatprep.subr.mxu0 0.0
      %922 = vmatpush1.msra.mxu0 0.0
      %923 = vmatprep.subr.mxu0 0.0
      %924 = vmatpush1.msra.mxu0 0.0
      %925 = vmatprep.subr.mxu0 0.0
      %926 = vmatpush1.msra.mxu0 0.0
      %927 = vmatprep.subr.mxu0 0.0
      %928 = vmatpush1.msra.mxu0 0.0
      %929 = vmatprep.subr.mxu0 0.0
      %930 = vmatpush1.msra.mxu0 0.0
      %931 = vmatprep.subr.mxu0 0.0
      %932 = vmatpush1.msra.mxu0 0.0
      %933 = vmatprep.subr.mxu0 0.0
      %934 = vmatpush1.msra.mxu0 0.0
      %935 = vmatprep.subr.mxu0 0.0
      %936 = vmatpush1.msra.mxu0 0.0
      %937 = vmatprep.subr.mxu0 0.0
      %938 = vmatpush1.msra.mxu0 0.0
      %939 = vmatprep.subr.mxu0 0.0
      %940 = vmatpush1.msra.mxu0 0.0
      %941 = vmatprep.subr.mxu0 0.0
      %942 = vmatpush1.msra.mxu0 0.0
      %943 = vmatprep.subr.mxu0 0.0
      %944 = vmatpush1.msra.mxu0 0.0
      %945 = vmatprep.subr.mxu0 0.0
      %946 = vmatpush1.msra.mxu0 0.0
      %947 = vmatprep.subr.mxu0 0.0
      %948 = vmatpush1.msra.mxu0 0.0
      %949 = vmatprep.subr.mxu0 0.0
      %950 = vmatpush1.msra.mxu0 %v914
      %951 = vmatprep.subr.mxu0 0.0
      %952 = vmatpush2.msra.mxu0 0.0
      %953 = vmatprep.subr.mxu0 0.0
      %954 = vmatpush2.msra.mxu0 0.0
      %955 = vmatprep.subr.mxu0 0.0
      %956 = vmatpush2.msra.mxu0 0.0
      %957 = vmatprep.subr.mxu0 0.0
      %958 = vmatpush2.msra.mxu0 0.0
      %959 = vmatprep.subr.mxu0 0.0
      %960 = vmatpush2.msra.mxu0 0.0
      %961 = vmatprep.subr.mxu0 0.0
      %962 = vmatpush2.msra.mxu0 0.0
      %963 = vmatprep.subr.mxu0 0.0
      %964 = vmatpush2.msra.mxu0 0.0
      %965 = vmatprep.subr.mxu0 0.0
      %966 = vmatpush2.msra.mxu0 0.0
      %967 = vmatprep.subr.mxu0 0.0
      %968 = vmatpush2.msra.mxu0 0.0
      %969 = vmatprep.subr.mxu0 0.0
      %970 = vmatpush2.msra.mxu0 0.0
      %971 = vmatprep.subr.mxu0 0.0
      %972 = vmatpush2.msra.mxu0 0.0
      %973 = vmatprep.subr.mxu0 0.0
      %974 = vmatpush2.msra.mxu0 0.0
      %975 = vmatprep.subr.mxu0 0.0
      %976 = vmatpush2.msra.mxu0 0.0
      %977 = vmatprep.subr.mxu0 0.0
      %978 = vmatpush2.msra.mxu0 0.0
      %979 = vmatprep.subr.mxu0 0.0
      %980 = vmatpush2.msra.mxu0 0.0
      %981 = vmatprep.subr.mxu0 0.0
      %982 = vmatpush2.msra.mxu0 0.0
      %983 = vmatprep.mubr.f32.mxu0 0.0
      %984 = vmatmul.mubr.f32.gmra.mxu0 %v917
      %v985 = vpop.f32.mrf.mxu0
      %v986 = vadd.f32 0.0, %v985
      %v987 = vpop.f32.mrf.mxu0
      %988 = vdwg.mxu0
      %v989 = vld [vmem:[%s3 + $0x10] sm:$0xff]
      %v991 = vsel %vm344, %v986, 0
      %993 = vmatprep.subr.mxu0 0.0
      %994 = vmatpush1.msra.mxu0 0.0
      %995 = vmatprep.subr.mxu0 0.0
      %996 = vmatpush1.msra.mxu0 0.0
      %997 = vmatprep.subr.mxu0 0.0
      %998 = vmatpush1.msra.mxu0 0.0
      %999 = vmatprep.subr.mxu0 0.0
      %1000 = vmatpush1.msra.mxu0 0.0
      %1001 = vmatprep.subr.mxu0 0.0
      %1002 = vmatpush1.msra.mxu0 0.0
      %1003 = vmatprep.subr.mxu0 0.0
      %1004 = vmatpush1.msra.mxu0 0.0
      %1005 = vmatprep.subr.mxu0 0.0
      %1006 = vmatpush1.msra.mxu0 0.0
      %1007 = vmatprep.subr.mxu0 0.0
      %1008 = vmatpush1.msra.mxu0 0.0
      %1009 = vmatprep.subr.mxu0 0.0
      %1010 = vmatpush1.msra.mxu0 0.0
      %1011 = vmatprep.subr.mxu0 0.0
      %1012 = vmatpush1.msra.mxu0 0.0
      %1013 = vmatprep.subr.mxu0 0.0
      %1014 = vmatpush1.msra.mxu0 0.0
      %1015 = vmatprep.subr.mxu0 0.0
      %1016 = vmatpush1.msra.mxu0 0.0
      %1017 = vmatprep.subr.mxu0 0.0
      %1018 = vmatpush1.msra.mxu0 0.0
      %1019 = vmatprep.subr.mxu0 0.0
      %1020 = vmatpush1.msra.mxu0 0.0
      %1021 = vmatprep.subr.mxu0 0.0
      %1022 = vmatpush1.msra.mxu0 0.0
      %1023 = vmatprep.subr.mxu0 0.0
      %1024 = vmatpush1.msra.mxu0 %v989
      %1025 = vmatprep.subr.mxu0 0.0
      %1026 = vmatpush2.msra.mxu0 0.0
      %1027 = vmatprep.subr.mxu0 0.0
      %1028 = vmatpush2.msra.mxu0 0.0
      %1029 = vmatprep.subr.mxu0 0.0
      %1030 = vmatpush2.msra.mxu0 0.0
      %1031 = vmatprep.subr.mxu0 0.0
      %1032 = vmatpush2.msra.mxu0 0.0
      %1033 = vmatprep.subr.mxu0 0.0
      %1034 = vmatpush2.msra.mxu0 0.0
      %1035 = vmatprep.subr.mxu0 0.0
      %1036 = vmatpush2.msra.mxu0 0.0
      %1037 = vmatprep.subr.mxu0 0.0
      %1038 = vmatpush2.msra.mxu0 0.0
      %1039 = vmatprep.subr.mxu0 0.0
      %1040 = vmatpush2.msra.mxu0 0.0
      %1041 = vmatprep.subr.mxu0 0.0
      %1042 = vmatpush2.msra.mxu0 0.0
      %1043 = vmatprep.subr.mxu0 0.0
      %1044 = vmatpush2.msra.mxu0 0.0
      %1045 = vmatprep.subr.mxu0 0.0
      %1046 = vmatpush2.msra.mxu0 0.0
      %1047 = vmatprep.subr.mxu0 0.0
      %1048 = vmatpush2.msra.mxu0 0.0
      %1049 = vmatprep.subr.mxu0 0.0
      %1050 = vmatpush2.msra.mxu0 0.0
      %1051 = vmatprep.subr.mxu0 0.0
      %1052 = vmatpush2.msra.mxu0 0.0
      %1053 = vmatprep.subr.mxu0 0.0
      %1054 = vmatpush2.msra.mxu0 0.0
      %1055 = vmatprep.subr.mxu0 0.0
      %1056 = vmatpush2.msra.mxu0 0.0
      %1057 = vmatprep.mubr.f32.mxu0 0.0
      %1058 = vmatmul.mubr.f32.gmra.mxu0 %v991
      %v1059 = vpop.f32.mrf.mxu0
      %v1060 = vadd.f32 0.0, %v1059
      %v1061 = vpop.f32.mrf.mxu0
      %1062 = vdwg.mxu0
      %v1063 = vadd.f32 %v822, %v1060
      %1064 = vrot.lane.b32.xlu0 %v330, 104
      %v1065 = vpop.permute.xlu0 %1064
      %1066 = vrot.lane.b32.xlu0 %v330, 72
      %v1067 = vpop.permute.xlu0 %1066
      %v1068 = vsel %vm344, %v1065, 0
      %v1070 = vsel %vm344, %v1067, 0
      %1072 = vmatprep.subr.mxu0 0.0
      %1073 = vmatpush1.xpose.msra.mxu0 0.0
      %1074 = vmatprep.subr.mxu0 0.0
      %1075 = vmatpush1.xpose.msra.mxu0 0.0
      %1076 = vmatprep.subr.mxu0 0.0
      %1077 = vmatpush1.xpose.msra.mxu0 0.0
      %1078 = vmatprep.subr.mxu0 0.0
      %1079 = vmatpush1.xpose.msra.mxu0 0.0
      %1080 = vmatprep.subr.mxu0 0.0
      %1081 = vmatpush1.xpose.msra.mxu0 0.0
      %1082 = vmatprep.subr.mxu0 0.0
      %1083 = vmatpush1.xpose.msra.mxu0 0.0
      %1084 = vmatprep.subr.mxu0 0.0
      %1085 = vmatpush1.xpose.msra.mxu0 0.0
      %1086 = vmatprep.subr.mxu0 0.0
      %1087 = vmatpush1.xpose.msra.mxu0 0.0
      %1088 = vmatprep.subr.mxu0 0.0
      %1089 = vmatpush1.xpose.msra.mxu0 0.0
      %1090 = vmatprep.subr.mxu0 0.0
      %1091 = vmatpush1.xpose.msra.mxu0 0.0
      %1092 = vmatprep.subr.mxu0 0.0
      %1093 = vmatpush1.xpose.msra.mxu0 0.0
      %1094 = vmatprep.subr.mxu0 0.0
      %1095 = vmatpush1.xpose.msra.mxu0 0.0
      %1096 = vmatprep.subr.mxu0 0.0
      %1097 = vmatpush1.xpose.msra.mxu0 0.0
      %1098 = vmatprep.subr.mxu0 0.0
      %1099 = vmatpush1.xpose.msra.mxu0 0.0
      %1100 = vmatprep.subr.mxu0 0.0
      %1101 = vmatpush1.xpose.msra.mxu0 0.0
      %1102 = vmatprep.subr.mxu0 0.0
      %1103 = vmatpush1.xpose.msra.mxu0 %v1070
      %1104 = vmatprep.subr.mxu0 0.0
      %1105 = vmatpush2.xpose.msra.mxu0 0.0
      %1106 = vmatprep.subr.mxu0 0.0
      %1107 = vmatpush2.xpose.msra.mxu0 0.0
      %1108 = vmatprep.subr.mxu0 0.0
      %1109 = vmatpush2.xpose.msra.mxu0 0.0
      %1110 = vmatprep.subr.mxu0 0.0
      %1111 = vmatpush2.xpose.msra.mxu0 0.0
      %1112 = vmatprep.subr.mxu0 0.0
      %1113 = vmatpush2.xpose.msra.mxu0 0.0
      %1114 = vmatprep.subr.mxu0 0.0
      %1115 = vmatpush2.xpose.msra.mxu0 0.0
      %1116 = vmatprep.subr.mxu0 0.0
      %1117 = vmatpush2.xpose.msra.mxu0 0.0
      %1118 = vmatprep.subr.mxu0 0.0
      %1119 = vmatpush2.xpose.msra.mxu0 0.0
      %1120 = vmatprep.subr.mxu0 0.0
      %1121 = vmatpush2.xpose.msra.mxu0 0.0
      %1122 = vmatprep.subr.mxu0 0.0
      %1123 = vmatpush2.xpose.msra.mxu0 0.0
      %1124 = vmatprep.subr.mxu0 0.0
      %1125 = vmatpush2.xpose.msra.mxu0 0.0
      %1126 = vmatprep.subr.mxu0 0.0
      %1127 = vmatpush2.xpose.msra.mxu0 0.0
      %1128 = vmatprep.subr.mxu0 0.0
      %1129 = vmatpush2.xpose.msra.mxu0 0.0
      %1130 = vmatprep.subr.mxu0 0.0
      %1131 = vmatpush2.xpose.msra.mxu0 0.0
      %1132 = vmatprep.subr.mxu0 0.0
      %1133 = vmatpush2.xpose.msra.mxu0 0.0
      %1134 = vmatprep.subr.mxu0 0.0
      %1135 = vmatpush2.xpose.msra.mxu0 0.0
      %1136 = vmatprep.mubr.f32.mxu0 0.0
      %1137 = vmatmul.mubr.f32.gmra.mxu0 %v1068
      %v1138 = vpop.f32.mrf.mxu0
      %v1139 = vadd.f32 0.0, %v1138
      %v1140 = vpop.f32.mrf.mxu0
      %1141 = vdwg.mxu0
      %v1142 = vmul.f32 %v1139, 0.35355338
      %v1143 = vsel %vm344, %v1142, -inf
      %1144 = vmax.xlane.f32.xlu0 %v1143
      %v1145 = vpop.xlane.xlu0 %1144
      %v1146 = vsub.f32 %v1142, %v1145
      %v1147 = vmul.f32 %v1146, 1.442695
      %v1148 = vpow.pop %v1147
      %v1149 = vsel %vm344, %v1148, 0.0
      %1150 = vadd.xlane.f32.xlu0 %v1149
      %v1151 = vpop.xlane.xlu0 %1150
      %v1152 = vrcp.pop %v1151
      %v1153 = vmul.f32 %v1148, %v1152
      %1154 = vrot.lane.b32.xlu0 %v330, 40
      %v1155 = vpop.permute.xlu0 %1154
      %v1158 = vsel %vm344, %v1153, 0
      %1160 = vmatprep.subr.mxu0 0.0
      %1161 = vmatpush1.msra.mxu0 0.0
      %1162 = vmatprep.subr.mxu0 0.0
      %1163 = vmatpush1.msra.mxu0 0.0
      %1164 = vmatprep.subr.mxu0 0.0
      %1165 = vmatpush1.msra.mxu0 0.0
      %1166 = vmatprep.subr.mxu0 0.0
      %1167 = vmatpush1.msra.mxu0 0.0
      %1168 = vmatprep.subr.mxu0 0.0
      %1169 = vmatpush1.msra.mxu0 0.0
      %1170 = vmatprep.subr.mxu0 0.0
      %1171 = vmatpush1.msra.mxu0 0.0
      %1172 = vmatprep.subr.mxu0 0.0
      %1173 = vmatpush1.msra.mxu0 0.0
      %1174 = vmatprep.subr.mxu0 0.0
      %1175 = vmatpush1.msra.mxu0 0.0
      %1176 = vmatprep.subr.mxu0 0.0
      %1177 = vmatpush1.msra.mxu0 0.0
      %1178 = vmatprep.subr.mxu0 0.0
      %1179 = vmatpush1.msra.mxu0 0.0
      %1180 = vmatprep.subr.mxu0 0.0
      %1181 = vmatpush1.msra.mxu0 0.0
      %1182 = vmatprep.subr.mxu0 0.0
      %1183 = vmatpush1.msra.mxu0 0.0
      %1184 = vmatprep.subr.mxu0 0.0
      %1185 = vmatpush1.msra.mxu0 0.0
      %1186 = vmatprep.subr.mxu0 0.0
      %1187 = vmatpush1.msra.mxu0 0.0
      %1188 = vmatprep.subr.mxu0 0.0
      %1189 = vmatpush1.msra.mxu0 0.0
      %1190 = vmatprep.subr.mxu0 0.0
      %1191 = vmatpush1.msra.mxu0 %v1155
      %1192 = vmatprep.subr.mxu0 0.0
      %1193 = vmatpush2.msra.mxu0 0.0
      %1194 = vmatprep.subr.mxu0 0.0
      %1195 = vmatpush2.msra.mxu0 0.0
      %1196 = vmatprep.subr.mxu0 0.0
      %1197 = vmatpush2.msra.mxu0 0.0
      %1198 = vmatprep.subr.mxu0 0.0
      %1199 = vmatpush2.msra.mxu0 0.0
      %1200 = vmatprep.subr.mxu0 0.0
      %1201 = vmatpush2.msra.mxu0 0.0
      %1202 = vmatprep.subr.mxu0 0.0
      %1203 = vmatpush2.msra.mxu0 0.0
      %1204 = vmatprep.subr.mxu0 0.0
      %1205 = vmatpush2.msra.mxu0 0.0
      %1206 = vmatprep.subr.mxu0 0.0
      %1207 = vmatpush2.msra.mxu0 0.0
      %1208 = vmatprep.subr.mxu0 0.0
      %1209 = vmatpush2.msra.mxu0 0.0
      %1210 = vmatprep.subr.mxu0 0.0
      %1211 = vmatpush2.msra.mxu0 0.0
      %1212 = vmatprep.subr.mxu0 0.0
      %1213 = vmatpush2.msra.mxu0 0.0
      %1214 = vmatprep.subr.mxu0 0.0
      %1215 = vmatpush2.msra.mxu0 0.0
      %1216 = vmatprep.subr.mxu0 0.0
      %1217 = vmatpush2.msra.mxu0 0.0
      %1218 = vmatprep.subr.mxu0 0.0
      %1219 = vmatpush2.msra.mxu0 0.0
      %1220 = vmatprep.subr.mxu0 0.0
      %1221 = vmatpush2.msra.mxu0 0.0
      %1222 = vmatprep.subr.mxu0 0.0
      %1223 = vmatpush2.msra.mxu0 0.0
      %1224 = vmatprep.mubr.f32.mxu0 0.0
      %1225 = vmatmul.mubr.f32.gmra.mxu0 %v1158
      %v1226 = vpop.f32.mrf.mxu0
      %v1227 = vadd.f32 0.0, %v1226
      %v1228 = vpop.f32.mrf.mxu0
      %1229 = vdwg.mxu0
      %v1230 = vld [vmem:[%s3 + $0x18] sm:$0xff]
      %v1232 = vsel %vm344, %v1227, 0
      %1234 = vmatprep.subr.mxu0 0.0
      %1235 = vmatpush1.msra.mxu0 0.0
      %1236 = vmatprep.subr.mxu0 0.0
      %1237 = vmatpush1.msra.mxu0 0.0
      %1238 = vmatprep.subr.mxu0 0.0
      %1239 = vmatpush1.msra.mxu0 0.0
      %1240 = vmatprep.subr.mxu0 0.0
      %1241 = vmatpush1.msra.mxu0 0.0
      %1242 = vmatprep.subr.mxu0 0.0
      %1243 = vmatpush1.msra.mxu0 0.0
      %1244 = vmatprep.subr.mxu0 0.0
      %1245 = vmatpush1.msra.mxu0 0.0
      %1246 = vmatprep.subr.mxu0 0.0
      %1247 = vmatpush1.msra.mxu0 0.0
      %1248 = vmatprep.subr.mxu0 0.0
      %1249 = vmatpush1.msra.mxu0 0.0
      %1250 = vmatprep.subr.mxu0 0.0
      %1251 = vmatpush1.msra.mxu0 0.0
      %1252 = vmatprep.subr.mxu0 0.0
      %1253 = vmatpush1.msra.mxu0 0.0
      %1254 = vmatprep.subr.mxu0 0.0
      %1255 = vmatpush1.msra.mxu0 0.0
      %1256 = vmatprep.subr.mxu0 0.0
      %1257 = vmatpush1.msra.mxu0 0.0
      %1258 = vmatprep.subr.mxu0 0.0
      %1259 = vmatpush1.msra.mxu0 0.0
      %1260 = vmatprep.subr.mxu0 0.0
      %1261 = vmatpush1.msra.mxu0 0.0
      %1262 = vmatprep.subr.mxu0 0.0
      %1263 = vmatpush1.msra.mxu0 0.0
      %1264 = vmatprep.subr.mxu0 0.0
      %1265 = vmatpush1.msra.mxu0 %v1230
      %1266 = vmatprep.subr.mxu0 0.0
      %1267 = vmatpush2.msra.mxu0 0.0
      %1268 = vmatprep.subr.mxu0 0.0
      %1269 = vmatpush2.msra.mxu0 0.0
      %1270 = vmatprep.subr.mxu0 0.0
      %1271 = vmatpush2.msra.mxu0 0.0
      %1272 = vmatprep.subr.mxu0 0.0
      %1273 = vmatpush2.msra.mxu0 0.0
      %1274 = vmatprep.subr.mxu0 0.0
      %1275 = vmatpush2.msra.mxu0 0.0
      %1276 = vmatprep.subr.mxu0 0.0
      %1277 = vmatpush2.msra.mxu0 0.0
      %1278 = vmatprep.subr.mxu0 0.0
      %1279 = vmatpush2.msra.mxu0 0.0
      %1280 = vmatprep.subr.mxu0 0.0
      %1281 = vmatpush2.msra.mxu0 0.0
      %1282 = vmatprep.subr.mxu0 0.0
      %1283 = vmatpush2.msra.mxu0 0.0
      %1284 = vmatprep.subr.mxu0 0.0
      %1285 = vmatpush2.msra.mxu0 0.0
      %1286 = vmatprep.subr.mxu0 0.0
      %1287 = vmatpush2.msra.mxu0 0.0
      %1288 = vmatprep.subr.mxu0 0.0
      %1289 = vmatpush2.msra.mxu0 0.0
      %1290 = vmatprep.subr.mxu0 0.0
      %1291 = vmatpush2.msra.mxu0 0.0
      %1292 = vmatprep.subr.mxu0 0.0
      %1293 = vmatpush2.msra.mxu0 0.0
      %1294 = vmatprep.subr.mxu0 0.0
      %1295 = vmatpush2.msra.mxu0 0.0
      %1296 = vmatprep.subr.mxu0 0.0
      %1297 = vmatpush2.msra.mxu0 0.0
      %1298 = vmatprep.mubr.f32.mxu0 0.0
      %1299 = vmatmul.mubr.f32.gmra.mxu0 %v1232
      %v1300 = vpop.f32.mrf.mxu0
      %v1301 = vadd.f32 0.0, %v1300
      %v1302 = vpop.f32.mrf.mxu0
      %1303 = vdwg.mxu0
      %v1304 = vadd.f32 %v1063, %v1301
      %v1305 = vld [vmem:[%s5] sm:$0x3]
      %v1306 = vsel %vm259, %v1304, 0.0
      %1307 = vadd.xlane.f32.xlu0 %v1306
      %v1308 = vpop.xlane.xlu0 %1307
      %v1309 = vrcp.pop 32.0
      %v1310 = vmul.f32 %v1308, %v1309
      %v1311 = vsub.f32 %v1304, %v1310
      %v1312 = vmul.f32 %v1311, %v1311
      %v1313 = vsel %vm259, %v1312, 0.0
      %1314 = vadd.xlane.f32.xlu0 %v1313
      %v1315 = vpop.xlane.xlu0 %1314
      %v1316 = vmul.f32 %v1315, %v1309
      %v1317 = vadd.f32 %v1316, 1e-05
      %v1318 = vrsqrt.pop %v1317
      %v1319 = vmul.f32 %v1311, %v1318
      %v1320 = vlaneseq
      %v1321 = vshrl.u32 %v1320, 7
      %v1322 = vsub.s32 0, %v1321
      %v1323 = vrot.slane %v1305, %v1322
      %v1324 = vmul.f32 %v1319, %v1323
      %v1325 = vlaneseq
      %v1326 = vshrl.u32 %v1325, 7
      %v1327 = vsub.s32 1, %v1326
      %v1328 = vrot.slane %v1305, %v1327
      %v1329 = vadd.f32 %v1324, %v1328
      %1330 = vst.msk [vmem:[%s246] sm:$0xff] %vm259, %v1329
      %p1331 = scmp.lt.s32.totalorder %s17, 1
      %s1332 = scalar_select %p1331, %s17, 1
      %s1333 = smul.addr %s1332, 8
      %s1334 = scalar_lea.vmem %s6, %s1333
      // Predicated region
      $region45: #{_lambda_.9} parent=43 // pred_check
        %p1335 = pneg %p166
      $region46: #{_lambda_.9} parent=43 // pred_check_branch
        %1337 = sbr.rel (%p1335) target = $region48
      $region47: #{_lambda_.9} parent=43 // pred_region
        _
      $region48: #{_lambda_.9} parent=43 // pred_fallthru
        _
    $region44: #{_lambda_.9} parent=5 // pred_fallthru
      _
    %p1338 = scmp.le.s32.totalorder 2, %s12
    // Predicated region
    $region49: #{_lambda_.9} parent=5 // pred_check
      %p1339 = pneg %p1338
    $region50: #{_lambda_.9} parent=5 // pred_check_branch
      %1341 = sbr.rel (%p1339) target = $region52
    $region51: #{_lambda_.9} parent=5 // pred_region
      %s1342 = ssub.s32 %s12, 2
      // Predicated region
      $region53: #{_lambda_.9} parent=51 // pred_check
        %p1343 = pneg %p172
      $region54: #{_lambda_.9} parent=51 // pred_check_branch
        %1345 = sbr.rel (%p1343) target = $region56
      $region55: #{_lambda_.9} parent=51 // pred_region
        %p1346 = scmp.lt.s32.totalorder %s18, 1
        %s1347 = scalar_select %p1346, %s18, 1
        %s1348 = smul.addr %s1347, 8
        %s1349 = scalar_lea.vmem %s6, %s1348
      $region56: #{_lambda_.9} parent=51 // pred_fallthru
        _
    $region52: #{_lambda_.9} parent=5 // pred_fallthru
      _
  $region6: #{_lambda_.9} parent=0 // loop_footer
    %s16 = sadd.s32 1, %s12
  $region7: #{_lambda_.9} parent=0 // loop_footer_branch
    %11 = sbr.rel target = $region3
  $region8: #{_lambda_.9} parent=0 // loop_exit
    _

// kernel: _lambda_.10
$region0: #{_lambda_.10}
  #allocation0 [shape = 'u32[]', space=smem, size = 0x4, offset = 0x4, fixed_abs, tag = 'smem constant byte address 0x4 - core index']
  #allocation1 [shape = 'u32[144,128]{1,0:T(1,128)}', space=vmem, size = 0x12000, scoped, tag = 'internal scratch']
  %s0 = inlined_call_operand.vmem [shape: f32[2,8,32], index: 0, kind: input, shape index: {}]
  %s1 = inlined_call_operand.vmem [shape: f32[32,64], index: 1, kind: input, shape index: {}]
  %s2 = inlined_call_operand.vmem [shape: f32[1,64], index: 2, kind: input, shape index: {}]
  %s3 = inlined_call_operand.vmem [shape: f32[64,32], index: 3, kind: input, shape index: {}]
  %s4 = inlined_call_operand.vmem [shape: f32[1,32], index: 4, kind: input, shape index: {}]
  %s5 = inlined_call_operand.vmem [shape: f32[2,32], index: 5, kind: input, shape index: {}]
  %s6 = inlined_call_operand.vmem [shape: f32[1,32,32], index: 6, kind: input, shape index: {}]
  %s7 = inlined_call_operand.vmem [shape: f32[1,2,32], index: 7, kind: input, shape index: {}, may-alias: {7,11}]
  %s8 = inlined_call_operand.vmem [shape: f32[32,5], index: 8, kind: input, shape index: {}]
  %s9 = inlined_call_operand.vmem [shape: f32[1,5], index: 9, kind: input, shape index: {}]
  %s10 = inlined_call_operand.vmem [shape: f32[1,32,32], index: 10, kind: input, shape index: {}]
  %s11 = inlined_call_operand.vmem [shape: f32[1,2,32], index: 11, kind: input, shape index: {}, may-alias: {7,11}]
  %s12 = inlined_call_operand.vmem [shape: f32[32,32], index: 12, kind: input, shape index: {}]
  %s13 = inlined_call_operand.vmem [shape: f32[1,32], index: 13, kind: input, shape index: {}]
  %s14 = inlined_call_operand.hbm [shape: f32[2,8,32], index: 14, kind: output, shape index: {0}]
  %s15 = inlined_call_operand.vmem [shape: f32[2,8,5], index: 15, kind: output, shape index: {1}]
  %s16 = inlined_call_operand.vmem [shape: f32[2,8,32], index: 16, kind: output, shape index: {2}]
  %17 = xla_tuple %s14, %s15, %s16
  %s18 = sld [smem:[#allocation0]]
  $region105: #{_lambda_.10} parent=0
    _
  %s20 = ssub.s32 1, %s18
  %s21 = scalar_select 0, %s20, %s18
  $region1: #{_lambda_.10} parent=0
    #allocation2 [shape = 'u8[8192]{0}', space=vmem, size = 0x2000, scoped, tag = 'output window, operand 0']
    #allocation3 [shape = 's32[2]{0}', space=sflag, size = 0x8, scoped, tag = 'scoped memory for _lambda_.10']
    %22 = vsyncpa [#allocation3], 0
    %s23 = scalar_lea.sflag [#allocation3], 1
    %24 = vsyncpa %s23, 0
    loop: start=0, step=1, limit=4
    $region2: #{_lambda_.10} parent=1 // loop_pre_header
      _
    $region3: #{_lambda_.10} parent=1 // loop_header
      %s26 = sphi 0, %s30
      %p27 = scmp.ge.s32.totalorder %s26, 4
      %s36 = sphi 0, %s38
      %s39 = sphi 0, %s36
      %s40 = sphi 0, %s39
      %s56 = sphi 0, %s40
      %s60 = sphi 0, %s60
      %s62 = sphi 0, %s60
      %s63 = sphi 0, %s62
      %s77 = sphi 0, %s63
      %s81 = sphi 0, %s81
      %s83 = sphi 0, %s81
      %s84 = sphi 0, %s83
      %s98 = sphi 0, %s84
      %s102 = sphi 0, %s102
      %s104 = sphi 0, %s102
      %s105 = sphi 0, %s104
      %s119 = sphi 0, %s105
      %s123 = sphi 0, %s123
      %s125 = sphi 0, %s123
      %s126 = sphi 0, %s125
      %s140 = sphi 0, %s126
      %s144 = sphi 0, %s144
      %s146 = sphi 0, %s144
      %s147 = sphi 0, %s146
      %s161 = sphi 0, %s147
      %s165 = sphi 0, %s165
      %s167 = sphi 0, %s165
      %s168 = sphi 0, %s167
      %s182 = sphi 0, %s168
      %s186 = sphi 0, %s186
      %s188 = sphi 0, %s186
      %s189 = sphi 0, %s188
      %s203 = sphi 0, %s189
      %s207 = sphi 0, %s207
      %s209 = sphi 0, %s207
      %s210 = sphi 0, %s209
      %s224 = sphi 0, %s210
      %s228 = sphi 0, %s228
      %s230 = sphi 0, %s228
      %s231 = sphi 0, %s230
      %s245 = sphi 0, %s231
      %s249 = sphi 0, %s249
      %s251 = sphi 0, %s249
      %s252 = sphi 0, %s251
      %s266 = sphi 0, %s252
      %s270 = sphi 0, %s270
      %s272 = sphi 0, %s270
      %s273 = sphi 0, %s272
      %s287 = sphi 0, %s273
      %s291 = sphi 0, %s291
      %s293 = sphi 0, %s291
      %s294 = sphi 0, %s293
      %s308 = sphi 0, %s294
      %s312 = sphi 0, %s312
      %s314 = sphi 0, %s312
      %s315 = sphi 0, %s314
      %s329 = sphi 0, %s315
      %s335 = sphi 0, %s337
      %s338 = sphi 0, %s335
      %s339 = sphi 0, %s338
      %s355 = sphi 0, %s339
      %s361 = sphi 0, %s363
      %s364 = sphi 0, %s361
      %s365 = sphi 0, %s364
      %s381 = sphi 0, %s365
      %s387 = sphi 0, %s389
      %s390 = sphi 0, %s387
      %s391 = sphi 0, %s390
      %s407 = sphi 0, %s391
    $region4: #{_lambda_.10} parent=1 // loop_header_branch
      %29 = sbr.rel (%p27) target = $region8
    $region5: #{_lambda_.10} parent=1 // loop_body
      %s31 = ssub.s32 %s26, 1
      %s32 = ssub.s32 %s26, 2
      %s33 = sadd.s32 %s26, 1
      %s34 = ssub.s32 %s26, %s33
      %p35 = scmp.eq.s32.totalorder %s34, 0
      %s37 = sadd.s32 %s36, 1
      %s38 = scalar_select %p35, %s36, %s37
      %p41 = pneg %p35
      %p42 = scmp.eq.s32.totalorder %s26, 1
      %p43 = por %p41, %p42
      %p44 = scmp.ne.s32.totalorder %s36, %s39
      %p45 = scmp.eq.s32.totalorder %s26, 0
      %p46 = por %p44, %p45
      %p47 = scmp.ne.s32.totalorder %s36, %s39
      %p48 = scmp.eq.s32.totalorder %s31, 1
      %p49 = por %p47, %p48
      %p50 = scmp.ne.s32.totalorder %s39, %s40
      %p51 = scmp.eq.s32.totalorder %s31, 0
      %p52 = por %p50, %p51
      %p53 = scmp.ne.s32.totalorder %s39, %s40
      %p54 = scmp.eq.s32.totalorder %s32, 1
      %p55 = por %p53, %p54
      %p57 = scmp.ne.s32.totalorder %s40, %s56
      %p58 = scmp.eq.s32.totalorder %s32, 0
      %p59 = por %p57, %p58
      %s61 = sadd.s32 %s60, 1
      %p64 = scmp.eq.s32.totalorder %s26, 1
      %p65 = scmp.ne.s32.totalorder %s60, %s62
      %p66 = scmp.eq.s32.totalorder %s26, 0
      %p67 = por %p65, %p66
      %p68 = scmp.ne.s32.totalorder %s60, %s62
      %p69 = scmp.eq.s32.totalorder %s31, 1
      %p70 = por %p68, %p69
      %p71 = scmp.ne.s32.totalorder %s62, %s63
      %p72 = scmp.eq.s32.totalorder %s31, 0
      %p73 = por %p71, %p72
      %p74 = scmp.ne.s32.totalorder %s62, %s63
      %p75 = scmp.eq.s32.totalorder %s32, 1
      %p76 = por %p74, %p75
      %p78 = scmp.ne.s32.totalorder %s63, %s77
      %p79 = scmp.eq.s32.totalorder %s32, 0
      %p80 = por %p78, %p79
      %s82 = sadd.s32 %s81, 1
      %p85 = scmp.eq.s32.totalorder %s26, 1
      %p86 = scmp.ne.s32.totalorder %s81, %s83
      %p87 = scmp.eq.s32.totalorder %s26, 0
      %p88 = por %p86, %p87
      %p89 = scmp.ne.s32.totalorder %s81, %s83
      %p90 = scmp.eq.s32.totalorder %s31, 1
      %p91 = por %p89, %p90
      %p92 = scmp.ne.s32.totalorder %s83, %s84
      %p93 = scmp.eq.s32.totalorder %s31, 0
      %p94 = por %p92, %p93
      %p95 = scmp.ne.s32.totalorder %s83, %s84
      %p96 = scmp.eq.s32.totalorder %s32, 1
      %p97 = por %p95, %p96
      %p99 = scmp.ne.s32.totalorder %s84, %s98
      %p100 = scmp.eq.s32.totalorder %s32, 0
      %p101 = por %p99, %p100
      %s103 = sadd.s32 %s102, 1
      %p106 = scmp.eq.s32.totalorder %s26, 1
      %p107 = scmp.ne.s32.totalorder %s102, %s104
      %p108 = scmp.eq.s32.totalorder %s26, 0
      %p109 = por %p107, %p108
      %p110 = scmp.ne.s32.totalorder %s102, %s104
      %p111 = scmp.eq.s32.totalorder %s31, 1
      %p112 = por %p110, %p111
      %p113 = scmp.ne.s32.totalorder %s104, %s105
      %p114 = scmp.eq.s32.totalorder %s31, 0
      %p115 = por %p113, %p114
      %p116 = scmp.ne.s32.totalorder %s104, %s105
      %p117 = scmp.eq.s32.totalorder %s32, 1
      %p118 = por %p116, %p117
      %p120 = scmp.ne.s32.totalorder %s105, %s119
      %p121 = scmp.eq.s32.totalorder %s32, 0
      %p122 = por %p120, %p121
      %s124 = sadd.s32 %s123, 1
      %p127 = scmp.eq.s32.totalorder %s26, 1
      %p128 = scmp.ne.s32.totalorder %s123, %s125
      %p129 = scmp.eq.s32.totalorder %s26, 0
      %p130 = por %p128, %p129
      %p131 = scmp.ne.s32.totalorder %s123, %s125
      %p132 = scmp.eq.s32.totalorder %s31, 1
      %p133 = por %p131, %p132
      %p134 = scmp.ne.s32.totalorder %s125, %s126
      %p135 = scmp.eq.s32.totalorder %s31, 0
      %p136 = por %p134, %p135
      %p137 = scmp.ne.s32.totalorder %s125, %s126
      %p138 = scmp.eq.s32.totalorder %s32, 1
      %p139 = por %p137, %p138
      %p141 = scmp.ne.s32.totalorder %s126, %s140
      %p142 = scmp.eq.s32.totalorder %s32, 0
      %p143 = por %p141, %p142
      %s145 = sadd.s32 %s144, 1
      %p148 = scmp.eq.s32.totalorder %s26, 1
      %p149 = scmp.ne.s32.totalorder %s144, %s146
      %p150 = scmp.eq.s32.totalorder %s26, 0
      %p151 = por %p149, %p150
      %p152 = scmp.ne.s32.totalorder %s144, %s146
      %p153 = scmp.eq.s32.totalorder %s31, 1
      %p154 = por %p152, %p153
      %p155 = scmp.ne.s32.totalorder %s146, %s147
      %p156 = scmp.eq.s32.totalorder %s31, 0
      %p157 = por %p155, %p156
      %p158 = scmp.ne.s32.totalorder %s146, %s147
      %p159 = scmp.eq.s32.totalorder %s32, 1
      %p160 = por %p158, %p159
      %p162 = scmp.ne.s32.totalorder %s147, %s161
      %p163 = scmp.eq.s32.totalorder %s32, 0
      %p164 = por %p162, %p163
      %s166 = sadd.s32 %s165, 1
      %p169 = scmp.eq.s32.totalorder %s26, 1
      %p170 = scmp.ne.s32.totalorder %s165, %s167
      %p171 = scmp.eq.s32.totalorder %s26, 0
      %p172 = por %p170, %p171
      %p173 = scmp.ne.s32.totalorder %s165, %s167
      %p174 = scmp.eq.s32.totalorder %s31, 1
      %p175 = por %p173, %p174
      %p176 = scmp.ne.s32.totalorder %s167, %s168
      %p177 = scmp.eq.s32.totalorder %s31, 0
      %p178 = por %p176, %p177
      %p179 = scmp.ne.s32.totalorder %s167, %s168
      %p180 = scmp.eq.s32.totalorder %s32, 1
      %p181 = por %p179, %p180
      %p183 = scmp.ne.s32.totalorder %s168, %s182
      %p184 = scmp.eq.s32.totalorder %s32, 0
      %p185 = por %p183, %p184
      %s187 = sadd.s32 %s186, 1
      %p190 = scmp.eq.s32.totalorder %s26, 1
      %p191 = scmp.ne.s32.totalorder %s186, %s188
      %p192 = scmp.eq.s32.totalorder %s26, 0
      %p193 = por %p191, %p192
      %p194 = scmp.ne.s32.totalorder %s186, %s188
      %p195 = scmp.eq.s32.totalorder %s31, 1
      %p196 = por %p194, %p195
      %p197 = scmp.ne.s32.totalorder %s188, %s189
      %p198 = scmp.eq.s32.totalorder %s31, 0
      %p199 = por %p197, %p198
      %p200 = scmp.ne.s32.totalorder %s188, %s189
      %p201 = scmp.eq.s32.totalorder %s32, 1
      %p202 = por %p200, %p201
      %p204 = scmp.ne.s32.totalorder %s189, %s203
      %p205 = scmp.eq.s32.totalorder %s32, 0
      %p206 = por %p204, %p205
      %s208 = sadd.s32 %s207, 1
      %p211 = scmp.eq.s32.totalorder %s26, 1
      %p212 = scmp.ne.s32.totalorder %s207, %s209
      %p213 = scmp.eq.s32.totalorder %s26, 0
      %p214 = por %p212, %p213
      %p215 = scmp.ne.s32.totalorder %s207, %s209
      %p216 = scmp.eq.s32.totalorder %s31, 1
      %p217 = por %p215, %p216
      %p218 = scmp.ne.s32.totalorder %s209, %s210
      %p219 = scmp.eq.s32.totalorder %s31, 0
      %p220 = por %p218, %p219
      %p221 = scmp.ne.s32.totalorder %s209, %s210
      %p222 = scmp.eq.s32.totalorder %s32, 1
      %p223 = por %p221, %p222
      %p225 = scmp.ne.s32.totalorder %s210, %s224
      %p226 = scmp.eq.s32.totalorder %s32, 0
      %p227 = por %p225, %p226
      %s229 = sadd.s32 %s228, 1
      %p232 = scmp.eq.s32.totalorder %s26, 1
      %p233 = scmp.ne.s32.totalorder %s228, %s230
      %p234 = scmp.eq.s32.totalorder %s26, 0
      %p235 = por %p233, %p234
      %p236 = scmp.ne.s32.totalorder %s228, %s230
      %p237 = scmp.eq.s32.totalorder %s31, 1
      %p238 = por %p236, %p237
      %p239 = scmp.ne.s32.totalorder %s230, %s231
      %p240 = scmp.eq.s32.totalorder %s31, 0
      %p241 = por %p239, %p240
      %p242 = scmp.ne.s32.totalorder %s230, %s231
      %p243 = scmp.eq.s32.totalorder %s32, 1
      %p244 = por %p242, %p243
      %p246 = scmp.ne.s32.totalorder %s231, %s245
      %p247 = scmp.eq.s32.totalorder %s32, 0
      %p248 = por %p246, %p247
      %s250 = sadd.s32 %s249, 1
      %p253 = scmp.eq.s32.totalorder %s26, 1
      %p254 = scmp.ne.s32.totalorder %s249, %s251
      %p255 = scmp.eq.s32.totalorder %s26, 0
      %p256 = por %p254, %p255
      %p257 = scmp.ne.s32.totalorder %s249, %s251
      %p258 = scmp.eq.s32.totalorder %s31, 1
      %p259 = por %p257, %p258
      %p260 = scmp.ne.s32.totalorder %s251, %s252
      %p261 = scmp.eq.s32.totalorder %s31, 0
      %p262 = por %p260, %p261
      %p263 = scmp.ne.s32.totalorder %s251, %s252
      %p264 = scmp.eq.s32.totalorder %s32, 1
      %p265 = por %p263, %p264
      %p267 = scmp.ne.s32.totalorder %s252, %s266
      %p268 = scmp.eq.s32.totalorder %s32, 0
      %p269 = por %p267, %p268
      %s271 = sadd.s32 %s270, 1
      %p274 = scmp.eq.s32.totalorder %s26, 1
      %p275 = scmp.ne.s32.totalorder %s270, %s272
      %p276 = scmp.eq.s32.totalorder %s26, 0
      %p277 = por %p275, %p276
      %p278 = scmp.ne.s32.totalorder %s270, %s272
      %p279 = scmp.eq.s32.totalorder %s31, 1
      %p280 = por %p278, %p279
      %p281 = scmp.ne.s32.totalorder %s272, %s273
      %p282 = scmp.eq.s32.totalorder %s31, 0
      %p283 = por %p281, %p282
      %p284 = scmp.ne.s32.totalorder %s272, %s273
      %p285 = scmp.eq.s32.totalorder %s32, 1
      %p286 = por %p284, %p285
      %p288 = scmp.ne.s32.totalorder %s273, %s287
      %p289 = scmp.eq.s32.totalorder %s32, 0
      %p290 = por %p288, %p289
      %s292 = sadd.s32 %s291, 1
      %p295 = scmp.eq.s32.totalorder %s26, 1
      %p296 = scmp.ne.s32.totalorder %s291, %s293
      %p297 = scmp.eq.s32.totalorder %s26, 0
      %p298 = por %p296, %p297
      %p299 = scmp.ne.s32.totalorder %s291, %s293
      %p300 = scmp.eq.s32.totalorder %s31, 1
      %p301 = por %p299, %p300
      %p302 = scmp.ne.s32.totalorder %s293, %s294
      %p303 = scmp.eq.s32.totalorder %s31, 0
      %p304 = por %p302, %p303
      %p305 = scmp.ne.s32.totalorder %s293, %s294
      %p306 = scmp.eq.s32.totalorder %s32, 1
      %p307 = por %p305, %p306
      %p309 = scmp.ne.s32.totalorder %s294, %s308
      %p310 = scmp.eq.s32.totalorder %s32, 0
      %p311 = por %p309, %p310
      %s313 = sadd.s32 %s312, 1
      %p316 = scmp.eq.s32.totalorder %s26, 1
      %p317 = scmp.ne.s32.totalorder %s312, %s314
      %p318 = scmp.eq.s32.totalorder %s26, 0
      %p319 = por %p317, %p318
      %p320 = scmp.ne.s32.totalorder %s312, %s314
      %p321 = scmp.eq.s32.totalorder %s31, 1
      %p322 = por %p320, %p321
      %p323 = scmp.ne.s32.totalorder %s314, %s315
      %p324 = scmp.eq.s32.totalorder %s31, 0
      %p325 = por %p323, %p324
      %p326 = scmp.ne.s32.totalorder %s314, %s315
      %p327 = scmp.eq.s32.totalorder %s32, 1
      %p328 = por %p326, %p327
      %p330 = scmp.ne.s32.totalorder %s315, %s329
      %p331 = scmp.eq.s32.totalorder %s32, 0
      %p332 = por %p330, %p331
      %s333 = ssub.s32 %s26, %s33
      %p334 = scmp.eq.s32.totalorder %s333, 0
      %s336 = sadd.s32 %s335, 1
      %s337 = scalar_select %p334, %s335, %s336
      %p340 = pneg %p334
      %p341 = scmp.eq.s32.totalorder %s26, 1
      %p342 = por %p340, %p341
      %p343 = scmp.ne.s32.totalorder %s335, %s338
      %p344 = scmp.eq.s32.totalorder %s26, 0
      %p345 = por %p343, %p344
      %p346 = scmp.ne.s32.totalorder %s335, %s338
      %p347 = scmp.eq.s32.totalorder %s31, 1
      %p348 = por %p346, %p347
      %p349 = scmp.ne.s32.totalorder %s338, %s339
      %p350 = scmp.eq.s32.totalorder %s31, 0
      %p351 = por %p349, %p350
      %p352 = scmp.ne.s32.totalorder %s338, %s339
      %p353 = scmp.eq.s32.totalorder %s32, 1
      %p354 = por %p352, %p353
      %p356 = scmp.ne.s32.totalorder %s339, %s355
      %p357 = scmp.eq.s32.totalorder %s32, 0
      %p358 = por %p356, %p357
      %s359 = ssub.s32 %s26, %s33
      %p360 = scmp.eq.s32.totalorder %s359, 0
      %s362 = sadd.s32 %s361, 1
      %s363 = scalar_select %p360, %s361, %s362
      %p366 = pneg %p360
      %p367 = scmp.eq.s32.totalorder %s26, 1
      %p368 = por %p366, %p367
      %p369 = scmp.ne.s32.totalorder %s361, %s364
      %p370 = scmp.eq.s32.totalorder %s26, 0
      %p371 = por %p369, %p370
      %p372 = scmp.ne.s32.totalorder %s361, %s364
      %p373 = scmp.eq.s32.totalorder %s31, 1
      %p374 = por %p372, %p373
      %p375 = scmp.ne.s32.totalorder %s364, %s365
      %p376 = scmp.eq.s32.totalorder %s31, 0
      %p377 = por %p375, %p376
      %p378 = scmp.ne.s32.totalorder %s364, %s365
      %p379 = scmp.eq.s32.totalorder %s32, 1
      %p380 = por %p378, %p379
      %p382 = scmp.ne.s32.totalorder %s365, %s381
      %p383 = scmp.eq.s32.totalorder %s32, 0
      %p384 = por %p382, %p383
      %s385 = ssub.s32 %s26, %s33
      %p386 = scmp.eq.s32.totalorder %s385, 0
      %s388 = sadd.s32 %s387, 1
      %s389 = scalar_select %p386, %s387, %s388
      %p392 = pneg %p386
      %p393 = scmp.eq.s32.totalorder %s26, 1
      %p394 = por %p392, %p393
      %p395 = scmp.ne.s32.totalorder %s387, %s390
      %p396 = scmp.eq.s32.totalorder %s26, 0
      %p397 = por %p395, %p396
      %p398 = scmp.ne.s32.totalorder %s387, %s390
      %p399 = scmp.eq.s32.totalorder %s31, 1
      %p400 = por %p398, %p399
      %p401 = scmp.ne.s32.totalorder %s390, %s391
      %p402 = scmp.eq.s32.totalorder %s31, 0
      %p403 = por %p401, %p402
      %p404 = scmp.ne.s32.totalorder %s390, %s391
      %p405 = scmp.eq.s32.totalorder %s32, 1
      %p406 = por %p404, %p405
      %p408 = scmp.ne.s32.totalorder %s391, %s407
      %p409 = scmp.eq.s32.totalorder %s32, 0
      %p410 = por %p408, %p409
      %p411 = scmp.le.s32.totalorder 1, %s26
      %p412 = scmp.lt.s32.totalorder %s26, 3
      %p413 = pnand %p411, %p412
      %p414 = pneg %p413
      // Predicated region
      $region9: #{_lambda_.10} parent=5 // pred_check
        _
      $region10: #{_lambda_.10} parent=5 // pred_check_branch
        %416 = sbr.rel (%p413) target = $region12
      $region11: #{_lambda_.10} parent=5 // pred_region
        %s417 = ssub.s32 %s26, 1
        // Predicated region
        $region13: #{_lambda_.10} parent=11 // pred_check
          %p418 = pneg %p73
        $region14: #{_lambda_.10} parent=11 // pred_check_branch
          %420 = sbr.rel (%p418) target = $region16
        $region15: #{_lambda_.10} parent=11 // pred_region
          _
        $region16: #{_lambda_.10} parent=11 // pred_fallthru
          _
        // Predicated region
        $region17: #{_lambda_.10} parent=11 // pred_check
          %p421 = pneg %p94
        $region18: #{_lambda_.10} parent=11 // pred_check_branch
          %423 = sbr.rel (%p421) target = $region20
        $region19: #{_lambda_.10} parent=11 // pred_region
          _
        $region20: #{_lambda_.10} parent=11 // pred_fallthru
          _
        // Predicated region
        $region21: #{_lambda_.10} parent=11 // pred_check
          %p424 = pneg %p115
        $region22: #{_lambda_.10} parent=11 // pred_check_branch
          %426 = sbr.rel (%p424) target = $region24
        $region23: #{_lambda_.10} parent=11 // pred_region
          _
        $region24: #{_lambda_.10} parent=11 // pred_fallthru
          _
        // Predicated region
        $region25: #{_lambda_.10} parent=11 // pred_check
          %p427 = pneg %p136
        $region26: #{_lambda_.10} parent=11 // pred_check_branch
          %429 = sbr.rel (%p427) target = $region28
        $region27: #{_lambda_.10} parent=11 // pred_region
          _
        $region28: #{_lambda_.10} parent=11 // pred_fallthru
          _
        // Predicated region
        $region29: #{_lambda_.10} parent=11 // pred_check
          %p430 = pneg %p157
        $region30: #{_lambda_.10} parent=11 // pred_check_branch
          %432 = sbr.rel (%p430) target = $region32
        $region31: #{_lambda_.10} parent=11 // pred_region
          _
        $region32: #{_lambda_.10} parent=11 // pred_fallthru
          _
        // Predicated region
        $region33: #{_lambda_.10} parent=11 // pred_check
          %p433 = pneg %p178
        $region34: #{_lambda_.10} parent=11 // pred_check_branch
          %435 = sbr.rel (%p433) target = $region36
        $region35: #{_lambda_.10} parent=11 // pred_region
          _
        $region36: #{_lambda_.10} parent=11 // pred_fallthru
          _
        // Predicated region
        $region37: #{_lambda_.10} parent=11 // pred_check
          %p436 = pneg %p199
        $region38: #{_lambda_.10} parent=11 // pred_check_branch
          %438 = sbr.rel (%p436) target = $region40
        $region39: #{_lambda_.10} parent=11 // pred_region
          _
        $region40: #{_lambda_.10} parent=11 // pred_fallthru
          _
        // Predicated region
        $region41: #{_lambda_.10} parent=11 // pred_check
          %p439 = pneg %p220
        $region42: #{_lambda_.10} parent=11 // pred_check_branch
          %441 = sbr.rel (%p439) target = $region44
        $region43: #{_lambda_.10} parent=11 // pred_region
          _
        $region44: #{_lambda_.10} parent=11 // pred_fallthru
          _
        // Predicated region
        $region45: #{_lambda_.10} parent=11 // pred_check
          %p442 = pneg %p241
        $region46: #{_lambda_.10} parent=11 // pred_check_branch
          %444 = sbr.rel (%p442) target = $region48
        $region47: #{_lambda_.10} parent=11 // pred_region
          _
        $region48: #{_lambda_.10} parent=11 // pred_fallthru
          _
        // Predicated region
        $region49: #{_lambda_.10} parent=11 // pred_check
          %p445 = pneg %p262
        $region50: #{_lambda_.10} parent=11 // pred_check_branch
          %447 = sbr.rel (%p445) target = $region52
        $region51: #{_lambda_.10} parent=11 // pred_region
          _
        $region52: #{_lambda_.10} parent=11 // pred_fallthru
          _
        // Predicated region
        $region53: #{_lambda_.10} parent=11 // pred_check
          %p448 = pneg %p283
        $region54: #{_lambda_.10} parent=11 // pred_check_branch
          %450 = sbr.rel (%p448) target = $region56
        $region55: #{_lambda_.10} parent=11 // pred_region
          _
        $region56: #{_lambda_.10} parent=11 // pred_fallthru
          _
        // Predicated region
        $region57: #{_lambda_.10} parent=11 // pred_check
          %p451 = pneg %p304
        $region58: #{_lambda_.10} parent=11 // pred_check_branch
          %453 = sbr.rel (%p451) target = $region60
        $region59: #{_lambda_.10} parent=11 // pred_region
          _
        $region60: #{_lambda_.10} parent=11 // pred_fallthru
          _
        // Predicated region
        $region61: #{_lambda_.10} parent=11 // pred_check
          %p454 = pneg %p325
        $region62: #{_lambda_.10} parent=11 // pred_check_branch
          %456 = sbr.rel (%p454) target = $region64
        $region63: #{_lambda_.10} parent=11 // pred_region
          _
        $region64: #{_lambda_.10} parent=11 // pred_fallthru
          _
      $region12: #{_lambda_.10} parent=5 // pred_fallthru
        _
      %p457 = scmp.lt.s32.totalorder %s26, 2
      // Predicated region
      $region65: #{_lambda_.10} parent=5 // pred_check
        %p458 = pneg %p457
      $region66: #{_lambda_.10} parent=5 // pred_check_branch
        %460 = sbr.rel (%p458) target = $region68
      $region67: #{_lambda_.10} parent=5 // pred_region
        // Predicated region
        $region69: #{_lambda_.10} parent=67 // pred_check
          %p461 = pneg %p46
        $region70: #{_lambda_.10} parent=67 // pred_check_branch
          %463 = sbr.rel (%p461) target = $region72
        $region71: #{_lambda_.10} parent=67 // pred_region
          %p464 = scmp.lt.s32.totalorder %s26, 1
          %s465 = scalar_select %p464, %s26, 1
          %s466 = smul.addr %s465, 8
          %s467 = scalar_lea.vmem %s0, %s466
        $region72: #{_lambda_.10} parent=67 // pred_fallthru
          _
      $region68: #{_lambda_.10} parent=5 // pred_fallthru
        _
      %p468 = scmp.le.s32.totalorder 1, %s26
      %p469 = scmp.lt.s32.totalorder %s26, 3
      %p470 = pnand %p468, %p469
      %p471 = pneg %p470
      // Predicated region
      $region73: #{_lambda_.10} parent=5 // pred_check
        _
      $region74: #{_lambda_.10} parent=5 // pred_check_branch
        %473 = sbr.rel (%p470) target = $region76
      $region75: #{_lambda_.10} parent=5 // pred_region
        %s474 = ssub.s32 %s26, 1
        %p475 = scmp.lt.s32.totalorder %s31, 1
        %s476 = scalar_select %p475, %s31, 1
        %s477 = smul.addr %s476, 8
        %s478 = scalar_lea.vmem %s0, %s477
        %p479 = pneg %p52
        %p480 = pneg %p49
        %p481 = pneg %p73
        %p482 = pneg %p70
        %p483 = pneg %p94
        %p484 = pneg %p91
        %p485 = pneg %p115
        %p486 = pneg %p112
        %p487 = pneg %p136
        %p488 = pneg %p133
        %p489 = pneg %p157
        %p490 = pneg %p154
        %p491 = pneg %p178
        %p492 = pneg %p175
        %p493 = pneg %p199
        %p494 = pneg %p196
        %p495 = pneg %p220
        %p496 = pneg %p217
        %p497 = pneg %p241
        %p498 = pneg %p238
        %p499 = pneg %p262
        %p500 = pneg %p259
        %p501 = pneg %p283
        %p502 = pneg %p280
        %p503 = pneg %p304
        %p504 = pneg %p301
        %p505 = pneg %p325
        %p506 = pneg %p322
        %p507 = pneg %p351
        %p508 = pneg %p348
        %s509 = sand.u32 %s338, 1
        %s510 = scalar_lea.sflag [#allocation3], %s509
        %s511 = sand.u32 %s338, 1
        %s512 = smul.addr %s511, 8
        %s513 = scalar_lea.vmem [#allocation2], %s512
        %p514 = pneg %p377
        %p515 = pneg %p374
        %p516 = scmp.lt.s32.totalorder %s31, 1
        %s517 = scalar_select %p516, %s31, 1
        %s518 = smul.addr %s517, 8
        %s519 = scalar_lea.vmem %s15, %s518
        %p520 = pneg %p403
        %p521 = pneg %p400
        %p522 = scmp.lt.s32.totalorder %s31, 1
        %s523 = scalar_select %p522, %s31, 1
        %s524 = smul.addr %s523, 8
        %s525 = scalar_lea.vmem %s16, %s524
        %p526 = scmp.lt.s32.totalorder %s31, 1
        %s527 = scalar_select %p526, %s31, 1
        %s528 = smul.addr %s527, 8
        %s529 = scalar_lea.vmem %s0, %s528
        %p530 = scmp.lt.s32.totalorder %s31, 1
        %s531 = scalar_select %p530, %s31, 1
        %s532 = smul.addr %s531, 8
        %s533 = scalar_lea.vmem %s15, %s532
        %p534 = scmp.lt.s32.totalorder %s31, 1
        %s535 = scalar_select %p534, %s31, 1
        %s536 = smul.addr %s535, 8
        %s537 = scalar_lea.vmem %s16, %s536
        %v538 = vld [vmem:[%s529] sm:$0xff]
        %v539 = vld [vmem:[%s1] sm:$0xff]
        %v540 = vld [vmem:[%s1 + $0x8] sm:$0xff]
        %v541 = vld [vmem:[%s1 + $0x10] sm:$0xff]
        %v542 = vld [vmem:[%s1 + $0x18] sm:$0xff]
        %v543 = vld [vmem:[%s2] sm:$0x1]
        %v545 = vlaneseq
        %v546 = vshrl.u32 %v545, 7
        %v547 = vsub.s32 0, %v546
        %v548 = vrot.slane %v543, %v547
        %vm550 = vcmask 261120
        %v552 = vsel %vm550, %v538, 0
        %554 = vmatprep.subr.mxu0 0.0
        %555 = vmatpush1.msra.mxu0 0.0
        %556 = vmatprep.subr.mxu0 0.0
        %557 = vmatpush1.msra.mxu0 0.0
        %558 = vmatprep.subr.mxu0 0.0
        %559 = vmatpush1.msra.mxu0 0.0
        %560 = vmatprep.subr.mxu0 0.0
        %561 = vmatpush1.msra.mxu0 0.0
        %562 = vmatprep.subr.mxu0 0.0
        %563 = vmatpush1.msra.mxu0 0.0
        %564 = vmatprep.subr.mxu0 0.0
        %565 = vmatpush1.msra.mxu0 0.0
        %566 = vmatprep.subr.mxu0 0.0
        %567 = vmatpush1.msra.mxu0 0.0
        %568 = vmatprep.subr.mxu0 0.0
        %569 = vmatpush1.msra.mxu0 0.0
        %570 = vmatprep.subr.mxu0 0.0
        %571 = vmatpush1.msra.mxu0 0.0
        %572 = vmatprep.subr.mxu0 0.0
        %573 = vmatpush1.msra.mxu0 0.0
        %574 = vmatprep.subr.mxu0 0.0
        %575 = vmatpush1.msra.mxu0 0.0
        %576 = vmatprep.subr.mxu0 0.0
        %577 = vmatpush1.msra.mxu0 0.0
        %578 = vmatprep.subr.mxu0 0.0
        %579 = vmatpush1.msra.mxu0 %v542
        %580 = vmatprep.subr.mxu0 0.0
        %581 = vmatpush1.msra.mxu0 %v541
        %582 = vmatprep.subr.mxu0 0.0
        %583 = vmatpush1.msra.mxu0 %v540
        %584 = vmatprep.subr.mxu0 0.0
        %585 = vmatpush1.msra.mxu0 %v539
        %586 = vmatprep.subr.mxu0 0.0
        %587 = vmatpush2.msra.mxu0 0.0
        %588 = vmatprep.subr.mxu0 0.0
        %589 = vmatpush2.msra.mxu0 0.0
        %590 = vmatprep.subr.mxu0 0.0
        %591 = vmatpush2.msra.mxu0 0.0
        %592 = vmatprep.subr.mxu0 0.0
        %593 = vmatpush2.msra.mxu0 0.0
        %594 = vmatprep.subr.mxu0 0.0
        %595 = vmatpush2.msra.mxu0 0.0
        %596 = vmatprep.subr.mxu0 0.0
        %597 = vmatpush2.msra.mxu0 0.0
        %598 = vmatprep.subr.mxu0 0.0
        %599 = vmatpush2.msra.mxu0 0.0
        %600 = vmatprep.subr.mxu0 0.0
        %601 = vmatpush2.msra.mxu0 0.0
        %602 = vmatprep.subr.mxu0 0.0
        %603 = vmatpush2.msra.mxu0 0.0
        %604 = vmatprep.subr.mxu0 0.0
        %605 = vmatpush2.msra.mxu0 0.0
        %606 = vmatprep.subr.mxu0 0.0
        %607 = vmatpush2.msra.mxu0 0.0
        %608 = vmatprep.subr.mxu0 0.0
        %609 = vmatpush2.msra.mxu0 0.0
        %610 = vmatprep.subr.mxu0 0.0
        %611 = vmatpush2.msra.mxu0 0.0
        %612 = vmatprep.subr.mxu0 0.0
        %613 = vmatpush2.msra.mxu0 0.0
        %614 = vmatprep.subr.mxu0 0.0
        %615 = vmatpush2.msra.mxu0 0.0
        %616 = vmatprep.subr.mxu0 0.0
        %617 = vmatpush2.msra.mxu0 0.0
        %618 = vmatprep.mubr.f32.mxu0 0.0
        %619 = vmatmul.mubr.f32.gmra.mxu0 %v552
        %v620 = vpop.f32.mrf.mxu0
        %v621 = vadd.f32 %v548, %v620
        %v622 = vpop.f32.mrf.mxu0
        %623 = vdwg.mxu0
        %v624 = vmax.f32 %v621, 0.0
        %v625 = vld [vmem:[%s3] sm:$0xff]
        %v626 = vld [vmem:[%s3 + $0x8] sm:$0xff]
        %v627 = vld [vmem:[%s3 + $0x10] sm:$0xff]
        %v628 = vld [vmem:[%s3 + $0x18] sm:$0xff]
        %v629 = vld [vmem:[%s3 + $0x20] sm:$0xff]
        %v630 = vld [vmem:[%s3 + $0x28] sm:$0xff]
        %v631 = vld [vmem:[%s3 + $0x30] sm:$0xff]
        %v632 = vld [vmem:[%s3 + $0x38] sm:$0xff]
        %vm633 = vcmask 523264
        %v635 = vsel %vm633, %v624, 0
        %637 = vmatprep.subr.mxu0 0.0
        %638 = vmatpush1.msra.mxu0 0.0
        %639 = vmatprep.subr.mxu0 0.0
        %640 = vmatpush1.msra.mxu0 0.0
        %641 = vmatprep.subr.mxu0 0.0
        %642 = vmatpush1.msra.mxu0 0.0
        %643 = vmatprep.subr.mxu0 0.0
        %644 = vmatpush1.msra.mxu0 0.0
        %645 = vmatprep.subr.mxu0 0.0
        %646 = vmatpush1.msra.mxu0 0.0
        %647 = vmatprep.subr.mxu0 0.0
        %648 = vmatpush1.msra.mxu0 0.0
        %649 = vmatprep.subr.mxu0 0.0
        %650 = vmatpush1.msra.mxu0 0.0
        %651 = vmatprep.subr.mxu0 0.0
        %652 = vmatpush1.msra.mxu0 0.0
        %653 = vmatprep.subr.mxu0 0.0
        %654 = vmatpush1.msra.mxu0 %v632
        %655 = vmatprep.subr.mxu0 0.0
        %656 = vmatpush1.msra.mxu0 %v631
        %657 = vmatprep.subr.mxu0 0.0
        %658 = vmatpush1.msra.mxu0 %v630
        %659 = vmatprep.subr.mxu0 0.0
        %660 = vmatpush1.msra.mxu0 %v629
        %661 = vmatprep.subr.mxu0 0.0
        %662 = vmatpush1.msra.mxu0 %v628
        %663 = vmatprep.subr.mxu0 0.0
        %664 = vmatpush1.msra.mxu0 %v627
        %665 = vmatprep.subr.mxu0 0.0
        %666 = vmatpush1.msra.mxu0 %v626
        %667 = vmatprep.subr.mxu0 0.0
        %668 = vmatpush1.msra.mxu0 %v625
        %669 = vmatprep.subr.mxu0 0.0
        %670 = vmatpush2.msra.mxu0 0.0
        %671 = vmatprep.subr.mxu0 0.0
        %672 = vmatpush2.msra.mxu0 0.0
        %673 = vmatprep.subr.mxu0 0.0
        %674 = vmatpush2.msra.mxu0 0.0
        %675 = vmatprep.subr.mxu0 0.0
        %676 = vmatpush2.msra.mxu0 0.0
        %677 = vmatprep.subr.mxu0 0.0
        %678 = vmatpush2.msra.mxu0 0.0
        %679 = vmatprep.subr.mxu0 0.0
        %680 = vmatpush2.msra.mxu0 0.0
        %681 = vmatprep.subr.mxu0 0.0
        %682 = vmatpush2.msra.mxu0 0.0
        %683 = vmatprep.subr.mxu0 0.0
        %684 = vmatpush2.msra.mxu0 0.0
        %685 = vmatprep.subr.mxu0 0.0
        %686 = vmatpush2.msra.mxu0 0.0
        %687 = vmatprep.subr.mxu0 0.0
        %688 = vmatpush2.msra.mxu0 0.0
        %689 = vmatprep.subr.mxu0 0.0
        %690 = vmatpush2.msra.mxu0 0.0
        %691 = vmatprep.subr.mxu0 0.0
        %692 = vmatpush2.msra.mxu0 0.0
        %693 = vmatprep.subr.mxu0 0.0
        %694 = vmatpush2.msra.mxu0 0.0
        %695 = vmatprep.subr.mxu0 0.0
        %696 = vmatpush2.msra.mxu0 0.0
        %697 = vmatprep.subr.mxu0 0.0
        %698 = vmatpush2.msra.mxu0 0.0
        %699 = vmatprep.subr.mxu0 0.0
        %700 = vmatpush2.msra.mxu0 0.0
        %701 = vmatprep.mubr.f32.mxu0 0.0
        %702 = vmatmul.mubr.f32.gmra.mxu0 %v635
        %v703 = vpop.f32.mrf.mxu0
        %v704 = vadd.f32 0.0, %v703
        %v705 = vpop.f32.mrf.mxu0
        %706 = vdwg.mxu0
        %v707 = vadd.f32 %v538, %v704
        %v708 = vld [vmem:[%s4] sm:$0x1]
        %v710 = vlaneseq
        %v711 = vshrl.u32 %v710, 7
        %v712 = vsub.s32 0, %v711
        %v713 = vrot.slane %v708, %v712
        %v715 = vadd.f32 %v707, %v713
        %v716 = vld [vmem:[%s5] sm:$0x3]
        %v717 = vsel %vm550, %v715, 0.0
        %718 = vadd.xlane.f32.xlu0 %v717
        %v719 = vpop.xlane.xlu0 %718
        %v720 = vrcp.pop 32.0
        %v721 = vmul.f32 %v719, %v720
        %v722 = vsub.f32 %v715, %v721
        %v723 = vmul.f32 %v722, %v722
        %v724 = vsel %vm550, %v723, 0.0
        %725 = vadd.xlane.f32.xlu0 %v724
        %v726 = vpop.xlane.xlu0 %725
        %v727 = vmul.f32 %v726, %v720
        %v728 = vadd.f32 %v727, 1e-05
        %v729 = vrsqrt.pop %v728
        %v730 = vmul.f32 %v722, %v729
        %v731 = vlaneseq
        %v732 = vshrl.u32 %v731, 7
        %v733 = vsub.s32 0, %v732
        %v734 = vrot.slane %v716, %v733
        %v735 = vmul.f32 %v730, %v734
        %v736 = vlaneseq
        %v737 = vshrl.u32 %v736, 7
        %v738 = vsub.s32 1, %v737
        %v739 = vrot.slane %v716, %v738
        %v740 = vadd.f32 %v735, %v739
        %741 = vst.msk [vmem:[%s513] sm:$0xff] %vm550, %v740
        %v742 = vld [vmem:[%s6] sm:$0xff]
        %v743 = vld [vmem:[%s6 + $0x8] sm:$0xff]
        %v744 = vld [vmem:[%s6 + $0x10] sm:$0xff]
        %v745 = vld [vmem:[%s6 + $0x18] sm:$0xff]
        %v747 = vsel %vm550, %v740, 0
        %749 = vmatprep.subr.mxu0 0.0
        %750 = vmatpush1.msra.mxu0 0.0
        %751 = vmatprep.subr.mxu0 0.0
        %752 = vmatpush1.msra.mxu0 0.0
        %753 = vmatprep.subr.mxu0 0.0
        %754 = vmatpush1.msra.mxu0 0.0
        %755 = vmatprep.subr.mxu0 0.0
        %756 = vmatpush1.msra.mxu0 0.0
        %757 = vmatprep.subr.mxu0 0.0
        %758 = vmatpush1.msra.mxu0 0.0
        %759 = vmatprep.subr.mxu0 0.0
        %760 = vmatpush1.msra.mxu0 0.0
        %761 = vmatprep.subr.mxu0 0.0
        %762 = vmatpush1.msra.mxu0 0.0
        %763 = vmatprep.subr.mxu0 0.0
        %764 = vmatpush1.msra.mxu0 0.0
        %765 = vmatprep.subr.mxu0 0.0
        %766 = vmatpush1.msra.mxu0 0.0
        %767 = vmatprep.subr.mxu0 0.0
        %768 = vmatpush1.msra.mxu0 0.0
        %769 = vmatprep.subr.mxu0 0.0
        %770 = vmatpush1.msra.mxu0 0.0
        %771 = vmatprep.subr.mxu0 0.0
        %772 = vmatpush1.msra.mxu0 0.0
        %773 = vmatprep.subr.mxu0 0.0
        %774 = vmatpush1.msra.mxu0 %v745
        %775 = vmatprep.subr.mxu0 0.0
        %776 = vmatpush1.msra.mxu0 %v744
        %777 = vmatprep.subr.mxu0 0.0
        %778 = vmatpush1.msra.mxu0 %v743
        %779 = vmatprep.subr.mxu0 0.0
        %780 = vmatpush1.msra.mxu0 %v742
        %781 = vmatprep.subr.mxu0 0.0
        %782 = vmatpush2.msra.mxu0 0.0
        %783 = vmatprep.subr.mxu0 0.0
        %784 = vmatpush2.msra.mxu0 0.0
        %785 = vmatprep.subr.mxu0 0.0
        %786 = vmatpush2.msra.mxu0 0.0
        %787 = vmatprep.subr.mxu0 0.0
        %788 = vmatpush2.msra.mxu0 0.0
        %789 = vmatprep.subr.mxu0 0.0
        %790 = vmatpush2.msra.mxu0 0.0
        %791 = vmatprep.subr.mxu0 0.0
        %792 = vmatpush2.msra.mxu0 0.0
        %793 = vmatprep.subr.mxu0 0.0
        %794 = vmatpush2.msra.mxu0 0.0
        %795 = vmatprep.subr.mxu0 0.0
        %796 = vmatpush2.msra.mxu0 0.0
        %797 = vmatprep.subr.mxu0 0.0
        %798 = vmatpush2.msra.mxu0 0.0
        %799 = vmatprep.subr.mxu0 0.0
        %800 = vmatpush2.msra.mxu0 0.0
        %801 = vmatprep.subr.mxu0 0.0
        %802 = vmatpush2.msra.mxu0 0.0
        %803 = vmatprep.subr.mxu0 0.0
        %804 = vmatpush2.msra.mxu0 0.0
        %805 = vmatprep.subr.mxu0 0.0
        %806 = vmatpush2.msra.mxu0 0.0
        %807 = vmatprep.subr.mxu0 0.0
        %808 = vmatpush2.msra.mxu0 0.0
        %809 = vmatprep.subr.mxu0 0.0
        %810 = vmatpush2.msra.mxu0 0.0
        %811 = vmatprep.subr.mxu0 0.0
        %812 = vmatpush2.msra.mxu0 0.0
        %813 = vmatprep.mubr.f32.mxu0 0.0
        %814 = vmatmul.mubr.f32.gmra.mxu0 %v747
        %v815 = vpop.f32.mrf.mxu0
        %v816 = vadd.f32 0.0, %v815
        %v817 = vpop.f32.mrf.mxu0
        %818 = vdwg.mxu0
        %v819 = vld [vmem:[%s7] sm:$0x3]
        %v820 = vsel %vm550, %v816, 0.0
        %821 = vadd.xlane.f32.xlu0 %v820
        %v822 = vpop.xlane.xlu0 %821
        %v823 = vmul.f32 %v822, %v720
        %v824 = vsub.f32 %v816, %v823
        %v825 = vmul.f32 %v824, %v824
        %v826 = vsel %vm550, %v825, 0.0
        %827 = vadd.xlane.f32.xlu0 %v826
        %v828 = vpop.xlane.xlu0 %827
        %v829 = vmul.f32 %v828, %v720
        %v830 = vadd.f32 %v829, 1e-05
        %v831 = vrsqrt.pop %v830
        %v832 = vmul.f32 %v824, %v831
        %v833 = vlaneseq
        %v834 = vshrl.u32 %v833, 7
        %v835 = vsub.s32 0, %v834
        %v836 = vrot.slane %v819, %v835
        %v837 = vmul.f32 %v832, %v836
        %v838 = vlaneseq
        %v839 = vshrl.u32 %v838, 7
        %v840 = vsub.s32 1, %v839
        %v841 = vrot.slane %v819, %v840
        %v842 = vadd.f32 %v837, %v841
        %v843 = vmax.f32 %v842, 0.0
        %v844 = vld [vmem:[%s8] sm:$0xff]
        %v845 = vld [vmem:[%s8 + $0x8] sm:$0xff]
        %v846 = vld [vmem:[%s8 + $0x10] sm:$0xff]
        %v847 = vld [vmem:[%s8 + $0x18] sm:$0xff]
        %v848 = vld [vmem:[%s9] sm:$0x1]
        %v850 = vlaneseq
        %v851 = vshrl.u32 %v850, 7
        %v852 = vsub.s32 0, %v851
        %v853 = vrot.slane %v848, %v852
        %v856 = vsel %vm550, %v843, 0
        %858 = vmatprep.subr.mxu0 0.0
        %859 = vmatpush1.msra.mxu0 0.0
        %860 = vmatprep.subr.mxu0 0.0
        %861 = vmatpush1.msra.mxu0 0.0
        %862 = vmatprep.subr.mxu0 0.0
        %863 = vmatpush1.msra.mxu0 0.0
        %864 = vmatprep.subr.mxu0 0.0
        %865 = vmatpush1.msra.mxu0 0.0
        %866 = vmatprep.subr.mxu0 0.0
        %867 = vmatpush1.msra.mxu0 0.0
        %868 = vmatprep.subr.mxu0 0.0
        %869 = vmatpush1.msra.mxu0 0.0
        %870 = vmatprep.subr.mxu0 0.0
        %871 = vmatpush1.msra.mxu0 0.0
        %872 = vmatprep.subr.mxu0 0.0
        %873 = vmatpush1.msra.mxu0 0.0
        %874 = vmatprep.subr.mxu0 0.0
        %875 = vmatpush1.msra.mxu0 0.0
        %876 = vmatprep.subr.mxu0 0.0
        %877 = vmatpush1.msra.mxu0 0.0
        %878 = vmatprep.subr.mxu0 0.0
        %879 = vmatpush1.msra.mxu0 0.0
        %880 = vmatprep.subr.mxu0 0.0
        %881 = vmatpush1.msra.mxu0 0.0
        %882 = vmatprep.subr.mxu0 0.0
        %883 = vmatpush1.msra.mxu0 %v847
        %884 = vmatprep.subr.mxu0 0.0
        %885 = vmatpush1.msra.mxu0 %v846
        %886 = vmatprep.subr.mxu0 0.0
        %887 = vmatpush1.msra.mxu0 %v845
        %888 = vmatprep.subr.mxu0 0.0
        %889 = vmatpush1.msra.mxu0 %v844
        %890 = vmatprep.subr.mxu0 0.0
        %891 = vmatpush2.msra.mxu0 0.0
        %892 = vmatprep.subr.mxu0 0.0
        %893 = vmatpush2.msra.mxu0 0.0
        %894 = vmatprep.subr.mxu0 0.0
        %895 = vmatpush2.msra.mxu0 0.0
        %896 = vmatprep.subr.mxu0 0.0
        %897 = vmatpush2.msra.mxu0 0.0
        %898 = vmatprep.subr.mxu0 0.0
        %899 = vmatpush2.msra.mxu0 0.0
        %900 = vmatprep.subr.mxu0 0.0
        %901 = vmatpush2.msra.mxu0 0.0
        %902 = vmatprep.subr.mxu0 0.0
        %903 = vmatpush2.msra.mxu0 0.0
        %904 = vmatprep.subr.mxu0 0.0
        %905 = vmatpush2.msra.mxu0 0.0
        %906 = vmatprep.subr.mxu0 0.0
        %907 = vmatpush2.msra.mxu0 0.0
        %908 = vmatprep.subr.mxu0 0.0
        %909 = vmatpush2.msra.mxu0 0.0
        %910 = vmatprep.subr.mxu0 0.0
        %911 = vmatpush2.msra.mxu0 0.0
        %912 = vmatprep.subr.mxu0 0.0
        %913 = vmatpush2.msra.mxu0 0.0
        %914 = vmatprep.subr.mxu0 0.0
        %915 = vmatpush2.msra.mxu0 0.0
        %916 = vmatprep.subr.mxu0 0.0
        %917 = vmatpush2.msra.mxu0 0.0
        %918 = vmatprep.subr.mxu0 0.0
        %919 = vmatpush2.msra.mxu0 0.0
        %920 = vmatprep.subr.mxu0 0.0
        %921 = vmatpush2.msra.mxu0 0.0
        %922 = vmatprep.mubr.f32.mxu0 0.0
        %923 = vmatmul.mubr.f32.gmra.mxu0 %v856
        %v924 = vpop.f32.mrf.mxu0
        %v925 = vadd.f32 %v853, %v924
        %v926 = vpop.f32.mrf.mxu0
        %927 = vdwg.mxu0
        %vm928 = vcmask 39936
        %929 = vst.msk [vmem:[%s533] sm:$0xff] %vm928, %v925
        %v930 = vld [vmem:[%s10] sm:$0xff]
        %v931 = vld [vmem:[%s10 + $0x8] sm:$0xff]
        %v932 = vld [vmem:[%s10 + $0x10] sm:$0xff]
        %v933 = vld [vmem:[%s10 + $0x18] sm:$0xff]
        %934 = vmatprep.subr.mxu0 0.0
        %935 = vmatpush1.msra.mxu0 0.0
        %936 = vmatprep.subr.mxu0 0.0
        %937 = vmatpush1.msra.mxu0 0.0
        %938 = vmatprep.subr.mxu0 0.0
        %939 = vmatpush1.msra.mxu0 0.0
        %940 = vmatprep.subr.mxu0 0.0
        %941 = vmatpush1.msra.mxu0 0.0
        %942 = vmatprep.subr.mxu0 0.0
        %943 = vmatpush1.msra.mxu0 0.0
        %944 = vmatprep.subr.mxu0 0.0
        %945 = vmatpush1.msra.mxu0 0.0
        %946 = vmatprep.subr.mxu0 0.0
        %947 = vmatpush1.msra.mxu0 0.0
        %948 = vmatprep.subr.mxu0 0.0
        %949 = vmatpush1.msra.mxu0 0.0
        %950 = vmatprep.subr.mxu0 0.0
        %951 = vmatpush1.msra.mxu0 0.0
        %952 = vmatprep.subr.mxu0 0.0
        %953 = vmatpush1.msra.mxu0 0.0
        %954 = vmatprep.subr.mxu0 0.0
        %955 = vmatpush1.msra.mxu0 0.0
        %956 = vmatprep.subr.mxu0 0.0
        %957 = vmatpush1.msra.mxu0 0.0
        %958 = vmatprep.subr.mxu0 0.0
        %959 = vmatpush1.msra.mxu0 %v933
        %960 = vmatprep.subr.mxu0 0.0
        %961 = vmatpush1.msra.mxu0 %v932
        %962 = vmatprep.subr.mxu0 0.0
        %963 = vmatpush1.msra.mxu0 %v931
        %964 = vmatprep.subr.mxu0 0.0
        %965 = vmatpush1.msra.mxu0 %v930
        %966 = vmatprep.subr.mxu0 0.0
        %967 = vmatpush2.msra.mxu0 0.0
        %968 = vmatprep.subr.mxu0 0.0
        %969 = vmatpush2.msra.mxu0 0.0
        %970 = vmatprep.subr.mxu0 0.0
        %971 = vmatpush2.msra.mxu0 0.0
        %972 = vmatprep.subr.mxu0 0.0
        %973 = vmatpush2.msra.mxu0 0.0
        %974 = vmatprep.subr.mxu0 0.0
        %975 = vmatpush2.msra.mxu0 0.0
        %976 = vmatprep.subr.mxu0 0.0
        %977 = vmatpush2.msra.mxu0 0.0
        %978 = vmatprep.subr.mxu0 0.0
        %979 = vmatpush2.msra.mxu0 0.0
        %980 = vmatprep.subr.mxu0 0.0
        %981 = vmatpush2.msra.mxu0 0.0
        %982 = vmatprep.subr.mxu0 0.0
        %983 = vmatpush2.msra.mxu0 0.0
        %984 = vmatprep.subr.mxu0 0.0
        %985 = vmatpush2.msra.mxu0 0.0
        %986 = vmatprep.subr.mxu0 0.0
        %987 = vmatpush2.msra.mxu0 0.0
        %988 = vmatprep.subr.mxu0 0.0
        %989 = vmatpush2.msra.mxu0 0.0
        %990 = vmatprep.subr.mxu0 0.0
        %991 = vmatpush2.msra.mxu0 0.0
        %992 = vmatprep.subr.mxu0 0.0
        %993 = vmatpush2.msra.mxu0 0.0
        %994 = vmatprep.subr.mxu0 0.0
        %995 = vmatpush2.msra.mxu0 0.0
        %996 = vmatprep.subr.mxu0 0.0
        %997 = vmatpush2.msra.mxu0 0.0
        %998 = vmatprep.mubr.f32.mxu0 0.0
        %999 = vmatmul.mubr.f32.gmra.mxu0 %v747
        %v1000 = vpop.f32.mrf.mxu0
        %v1001 = vadd.f32 0.0, %v1000
        %v1002 = vpop.f32.mrf.mxu0
        %1003 = vdwg.mxu0
        %v1004 = vld [vmem:[%s11] sm:$0x3]
        %v1005 = vsel %vm550, %v1001, 0.0
        %1006 = vadd.xlane.f32.xlu0 %v1005
        %v1007 = vpop.xlane.xlu0 %1006
        %v1008 = vmul.f32 %v1007, %v720
        %v1009 = vsub.f32 %v1001, %v1008
        %v1010 = vmul.f32 %v1009, %v1009
        %v1011 = vsel %vm550, %v1010, 0.0
        %1012 = vadd.xlane.f32.xlu0 %v1011
        %v1013 = vpop.xlane.xlu0 %1012
        %v1014 = vmul.f32 %v1013, %v720
        %v1015 = vadd.f32 %v1014, 1e-05
        %v1016 = vrsqrt.pop %v1015
        %v1017 = vmul.f32 %v1009, %v1016
        %v1018 = vlaneseq
        %v1019 = vshrl.u32 %v1018, 7
        %v1020 = vsub.s32 0, %v1019
        %v1021 = vrot.slane %v1004, %v1020
        %v1022 = vmul.f32 %v1017, %v1021
        %v1023 = vlaneseq
        %v1024 = vshrl.u32 %v1023, 7
        %v1025 = vsub.s32 1, %v1024
        %v1026 = vrot.slane %v1004, %v1025
        %v1027 = vadd.f32 %v1022, %v1026
        %v1028 = vmax.f32 %v1027, 0.0
        %v1029 = vld [vmem:[%s12] sm:$0xff]
        %v1030 = vld [vmem:[%s12 + $0x8] sm:$0xff]
        %v1031 = vld [vmem:[%s12 + $0x10] sm:$0xff]
        %v1032 = vld [vmem:[%s12 + $0x18] sm:$0xff]
        %v1033 = vld [vmem:[%s13] sm:$0x1]
        %v1035 = vlaneseq
        %v1036 = vshrl.u32 %v1035, 7
        %v1037 = vsub.s32 0, %v1036
        %v1038 = vrot.slane %v1033, %v1037
        %v1041 = vsel %vm550, %v1028, 0
        %1043 = vmatprep.subr.mxu0 0.0
        %1044 = vmatpush1.msra.mxu0 0.0
        %1045 = vmatprep.subr.mxu0 0.0
        %1046 = vmatpush1.msra.mxu0 0.0
        %1047 = vmatprep.subr.mxu0 0.0
        %1048 = vmatpush1.msra.mxu0 0.0
        %1049 = vmatprep.subr.mxu0 0.0
        %1050 = vmatpush1.msra.mxu0 0.0
        %1051 = vmatprep.subr.mxu0 0.0
        %1052 = vmatpush1.msra.mxu0 0.0
        %1053 = vmatprep.subr.mxu0 0.0
        %1054 = vmatpush1.msra.mxu0 0.0
        %1055 = vmatprep.subr.mxu0 0.0
        %1056 = vmatpush1.msra.mxu0 0.0
        %1057 = vmatprep.subr.mxu0 0.0
        %1058 = vmatpush1.msra.mxu0 0.0
        %1059 = vmatprep.subr.mxu0 0.0
        %1060 = vmatpush1.msra.mxu0 0.0
        %1061 = vmatprep.subr.mxu0 0.0
        %1062 = vmatpush1.msra.mxu0 0.0
        %1063 = vmatprep.subr.mxu0 0.0
        %1064 = vmatpush1.msra.mxu0 0.0
        %1065 = vmatprep.subr.mxu0 0.0
        %1066 = vmatpush1.msra.mxu0 0.0
        %1067 = vmatprep.subr.mxu0 0.0
        %1068 = vmatpush1.msra.mxu0 %v1032
        %1069 = vmatprep.subr.mxu0 0.0
        %1070 = vmatpush1.msra.mxu0 %v1031
        %1071 = vmatprep.subr.mxu0 0.0
        %1072 = vmatpush1.msra.mxu0 %v1030
        %1073 = vmatprep.subr.mxu0 0.0
        %1074 = vmatpush1.msra.mxu0 %v1029
        %1075 = vmatprep.subr.mxu0 0.0
        %1076 = vmatpush2.msra.mxu0 0.0
        %1077 = vmatprep.subr.mxu0 0.0
        %1078 = vmatpush2.msra.mxu0 0.0
        %1079 = vmatprep.subr.mxu0 0.0
        %1080 = vmatpush2.msra.mxu0 0.0
        %1081 = vmatprep.subr.mxu0 0.0
        %1082 = vmatpush2.msra.mxu0 0.0
        %1083 = vmatprep.subr.mxu0 0.0
        %1084 = vmatpush2.msra.mxu0 0.0
        %1085 = vmatprep.subr.mxu0 0.0
        %1086 = vmatpush2.msra.mxu0 0.0
        %1087 = vmatprep.subr.mxu0 0.0
        %1088 = vmatpush2.msra.mxu0 0.0
        %1089 = vmatprep.subr.mxu0 0.0
        %1090 = vmatpush2.msra.mxu0 0.0
        %1091 = vmatprep.subr.mxu0 0.0
        %1092 = vmatpush2.msra.mxu0 0.0
        %1093 = vmatprep.subr.mxu0 0.0
        %1094 = vmatpush2.msra.mxu0 0.0
        %1095 = vmatprep.subr.mxu0 0.0
        %1096 = vmatpush2.msra.mxu0 0.0
        %1097 = vmatprep.subr.mxu0 0.0
        %1098 = vmatpush2.msra.mxu0 0.0
        %1099 = vmatprep.subr.mxu0 0.0
        %1100 = vmatpush2.msra.mxu0 0.0
        %1101 = vmatprep.subr.mxu0 0.0
        %1102 = vmatpush2.msra.mxu0 0.0
        %1103 = vmatprep.subr.mxu0 0.0
        %1104 = vmatpush2.msra.mxu0 0.0
        %1105 = vmatprep.subr.mxu0 0.0
        %1106 = vmatpush2.msra.mxu0 0.0
        %1107 = vmatprep.mubr.f32.mxu0 0.0
        %1108 = vmatmul.mubr.f32.gmra.mxu0 %v1041
        %v1109 = vpop.f32.mrf.mxu0
        %v1110 = vadd.f32 %v1038, %v1109
        %v1111 = vpop.f32.mrf.mxu0
        %1112 = vdwg.mxu0
        %1113 = vst.msk [vmem:[%s537] sm:$0xff] %vm550, %v1110
        %s1114 = sand.u32 %s338, 1
        %s1115 = scalar_lea.sflag [#allocation3], %s1114
        %s1116 = sand.u32 %s338, 1
        %s1117 = smul.addr %s1116, 8
        %s1118 = scalar_lea.vmem [#allocation2], %s1117
        %p1119 = scmp.lt.s32.totalorder %s31, 1
        %s1120 = scalar_select %p1119, %s31, 1
        %s1121 = smul.addr %s1120, 8
        %s1122 = scalar_lea.vmem %s15, %s1121
        %p1123 = scmp.lt.s32.totalorder %s31, 1
        %s1124 = scalar_select %p1123, %s31, 1
        %s1125 = smul.addr %s1124, 8
        %s1126 = scalar_lea.vmem %s16, %s1125
        // Predicated region
        $region77: #{_lambda_.10} parent=75 // pred_check
          %p1127 = pneg %p348
        $region78: #{_lambda_.10} parent=75 // pred_check_branch
          %1129 = sbr.rel (%p1127) target = $region80
        $region79: #{_lambda_.10} parent=75 // pred_region
          %s1131 = ssub.s32 128, 128
          %1132 = vsyncadd %s1115, %s1131
          %s1133 = smul.addr %s31, 128
          %s1134 = scalar_lea.hbm %s14, %s1133
          %s1136 = sshll.u32 %s1118, 4
          %s1137 = int_to_ptr.vmem [resolvable:$true] %s1136
          %1139 = dma.vmem_to_hbm [thread:$0]  %s1137, 128, %s1134, %s1115
        $region80: #{_lambda_.10} parent=75 // pred_fallthru
          _
        // Predicated region
        $region81: #{_lambda_.10} parent=75 // pred_check
          %p1140 = pneg %p374
        $region82: #{_lambda_.10} parent=75 // pred_check_branch
          %1142 = sbr.rel (%p1140) target = $region84
        $region83: #{_lambda_.10} parent=75 // pred_region
          _
        $region84: #{_lambda_.10} parent=75 // pred_fallthru
          _
        // Predicated region
        $region85: #{_lambda_.10} parent=75 // pred_check
          %p1143 = pneg %p400
        $region86: #{_lambda_.10} parent=75 // pred_check_branch
          %1145 = sbr.rel (%p1143) target = $region88
        $region87: #{_lambda_.10} parent=75 // pred_region
          _
        $region88: #{_lambda_.10} parent=75 // pred_fallthru
          _
      $region76: #{_lambda_.10} parent=5 // pred_fallthru
        _
      %p1146 = scmp.le.s32.totalorder 2, %s26
      // Predicated region
      $region89: #{_lambda_.10} parent=5 // pred_check
        %p1147 = pneg %p1146
      $region90: #{_lambda_.10} parent=5 // pred_check_branch
        %1149 = sbr.rel (%p1147) target = $region92
      $region91: #{_lambda_.10} parent=5 // pred_region
        %s1150 = ssub.s32 %s26, 2
        // Predicated region
        $region93: #{_lambda_.10} parent=91 // pred_check
          %p1151 = pneg %p354
        $region94: #{_lambda_.10} parent=91 // pred_check_branch
          %1153 = sbr.rel (%p1151) target = $region96
        $region95: #{_lambda_.10} parent=91 // pred_region
          %s1154 = sand.u32 %s339, 1
          %s1155 = scalar_lea.sflag [#allocation3], %s1154
          %s1156 = sand.u32 %s339, 1
          %s1157 = smul.addr %s1156, 8
          %s1158 = scalar_lea.vmem [#allocation2], %s1157
          %1159 = dma.done %s1155, 128
        $region96: #{_lambda_.10} parent=91 // pred_fallthru
          _
        // Predicated region
        $region97: #{_lambda_.10} parent=91 // pred_check
          %p1160 = pneg %p380
        $region98: #{_lambda_.10} parent=91 // pred_check_branch
          %1162 = sbr.rel (%p1160) target = $region100
        $region99: #{_lambda_.10} parent=91 // pred_region
          %p1163 = scmp.lt.s32.totalorder %s32, 1
          %s1164 = scalar_select %p1163, %s32, 1
          %s1165 = smul.addr %s1164, 8
          %s1166 = scalar_lea.vmem %s15, %s1165
        $region100: #{_lambda_.10} parent=91 // pred_fallthru
          _
        // Predicated region
        $region101: #{_lambda_.10} parent=91 // pred_check
          %p1167 = pneg %p406
        $region102: #{_lambda_.10} parent=91 // pred_check_branch
          %1169 = sbr.rel (%p1167) target = $region104
        $region103: #{_lambda_.10} parent=91 // pred_region
          %p1170 = scmp.lt.s32.totalorder %s32, 1
          %s1171 = scalar_select %p1170, %s32, 1
          %s1172 = smul.addr %s1171, 8
          %s1173 = scalar_lea.vmem %s16, %s1172
        $region104: #{_lambda_.10} parent=91 // pred_fallthru
          _
      $region92: #{_lambda_.10} parent=5 // pred_fallthru
        _
    $region6: #{_lambda_.10} parent=1 // loop_footer
      %s30 = sadd.s32 1, %s26
    $region7: #{_lambda_.10} parent=1 // loop_footer_branch
      %25 = sbr.rel target = $region3
    $region8: #{_lambda_.10} parent=1 // loop_exit
      _
    %1174 = vsyncpa [#allocation3], 1
    %s1175 = scalar_lea.sflag [#allocation3], 1
    %1176 = vsyncpa %s1175, 1

</llo_original>
